<compile_context>
chip_gen: v5e
topology: v5e:2x2
jax: 0.10.0
libtpu: 0.0.40
codegen_flags: <defaults>
</compile_context>

<pallas_src>
import jax
import jax.numpy as jnp
from jax.experimental import pallas as pl
from jax.experimental.pallas import tpu as pltpu


def _sigmoid(y):
    # exp -> EUP slot; approx reciprocal -> EUP as well (keeps VALU slots free).
    return pl.reciprocal(1.0 + jnp.exp(-y), approx=True)


def _silu(y):
    return y * _sigmoid(y)


# --------------------------------------------------------------------------
# Kernel 1: stem conv as GEMM (im2col patches @ W + b, SiLU), bf16 in/out.
# --------------------------------------------------------------------------
def _stem_kernel(p_ref, w_ref, b_ref, o_ref):
    y = jnp.dot(p_ref[...], w_ref[...], preferred_element_type=jnp.float32)
    y = _silu(y + b_ref[...])
    o_ref[...] = y.astype(o_ref.dtype)


def stem_conv(patches, w, b, tm=256):
    M, K = patches.shape
    N = w.shape[1]
    if M % tm:
        tm = M                       # graceful fallback: single block
    return pl.pallas_call(
        _stem_kernel,
        out_shape=jax.ShapeDtypeStruct((M, N), jnp.bfloat16),
        grid_spec=pltpu.PrefetchScalarGridSpec(
            num_scalar_prefetch=0,
            grid=(M // tm,),
            in_specs=[
                pl.BlockSpec((tm, K), lambda i: (i, 0)),
                pl.BlockSpec((K, N), lambda i: (0, 0)),
                pl.BlockSpec((1, N), lambda i: (0, 0)),
            ],
            out_specs=pl.BlockSpec((tm, N), lambda i: (i, 0)),
        ),
        compiler_params=pltpu.CompilerParams(
            dimension_semantics=("parallel",)),
    )(patches, w, b.reshape(1, N))


# --------------------------------------------------------------------------
# Kernel 2: fused MBConv + head conv + global pool + classifier.
# One grid step per batch image; every intermediate stays in VMEM.
# --------------------------------------------------------------------------
def _mbconv_head_kernel(x_ref, w_exp_ref, b_exp_ref, w_dw_ref, b_dw_ref,
                        w_se1_ref, b_se1_ref, w_se2_ref, b_se2_ref,
                        w_proj_ref, b_proj_ref, w_head_ref, b_head_ref,
                        w_cls_ref, b_cls_ref, o_ref, pad_ref):
    _, H, W, C = x_ref.shape
    CE = w_exp_ref.shape[1]

    x = x_ref[...]                               # (1, H, W, C) bf16
    xm = x.reshape(H * W, C)                     # bf16 for the MXU

    # ---- 1x1 expand + SiLU (bf16 x bf16 -> f32 on MXU) ----
    h = jnp.dot(xm, w_exp_ref[...], preferred_element_type=jnp.float32)
    h = _silu(h + b_exp_ref[...])                # (H*W, CE) f32

    # ---- depthwise 3x3: taps sliced from a zero-padded VMEM scratch ----
    pad_ref[...] = jnp.zeros(pad_ref.shape, jnp.float32)
    pad_ref[:, 1:H + 1, 1:W + 1, :] = h.reshape(1, H, W, CE)
    wd = w_dw_ref[...]                           # (9, CE) f32
    acc = jnp.zeros((1, H, W, CE), jnp.float32)
    for t in range(9):
        kh, kw = t // 3, t % 3
        acc = acc + pad_ref[:, kh:kh + H, kw:kw + W, :] * wd[t, :]
    d = _silu(acc.reshape(H * W, CE) + b_dw_ref[...])     # (H*W, CE) f32

    # ---- squeeze-excite ----
    pooled = jnp.mean(d, axis=0, keepdims=True)           # (1, CE)
    s = _silu(jnp.dot(pooled, w_se1_ref[...],
                      preferred_element_type=jnp.float32) + b_se1_ref[...])
    gate = _sigmoid(jnp.dot(s, w_se2_ref[...],
                            preferred_element_type=jnp.float32) + b_se2_ref[...])
    d = d * gate                                           # (H*W, CE)

    # ---- 1x1 project + fused residual add ----
    pr = jnp.dot(d.astype(jnp.bfloat16), w_proj_ref[...],
                 preferred_element_type=jnp.float32) + b_proj_ref[...]
    res = pr + xm.astype(jnp.float32)                      # (H*W, C)

    # ---- head 1x1 conv + SiLU ----
    f = jnp.dot(res.astype(jnp.bfloat16), w_head_ref[...],
                preferred_element_type=jnp.float32) + b_head_ref[...]
    f = _silu(f)                                           # (H*W, F)

    # ---- global average pool + Linear(n_features, 6) ----
    pooled2 = jnp.mean(f, axis=0, keepdims=True)           # (1, F)
    logits = jnp.dot(pooled2, w_cls_ref[...],
                     preferred_element_type=jnp.float32) + b_cls_ref[...]
    o_ref[...] = logits.reshape(1, 1, -1)


def mbconv_head_classifier(x, p):
    N, H, W, C = x.shape
    CE = p["w_exp"].shape[1]
    CSE = p["w_se1"].shape[1]
    F = p["w_head"].shape[1]
    n_cls = p["w_cls"].shape[1]

    def rep(i):                      # replicated 2-D operand
        return (0, 0)

    grid_spec = pltpu.PrefetchScalarGridSpec(
        num_scalar_prefetch=0,
        grid=(N,),
        in_specs=[
            pl.BlockSpec((1, H, W, C), lambda i: (i, 0, 0, 0)),
            pl.BlockSpec((C, CE), rep), pl.BlockSpec((1, CE), rep),
            pl.BlockSpec((9, CE), rep), pl.BlockSpec((1, CE), rep),
            pl.BlockSpec((CE, CSE), rep), pl.BlockSpec((1, CSE), rep),
            pl.BlockSpec((CSE, CE), rep), pl.BlockSpec((1, CE), rep),
            pl.BlockSpec((CE, C), rep), pl.BlockSpec((1, C), rep),
            pl.BlockSpec((C, F), rep), pl.BlockSpec((1, F), rep),
            pl.BlockSpec((F, n_cls), rep), pl.BlockSpec((1, n_cls), rep),
        ],
        out_specs=pl.BlockSpec((1, 1, n_cls), lambda i: (i, 0, 0)),
        scratch_shapes=[pltpu.VMEM((1, H + 2, W + 2, CE), jnp.float32)],
    )
    logits = pl.pallas_call(
        _mbconv_head_kernel,
        out_shape=jax.ShapeDtypeStruct((N, 1, n_cls), jnp.float32),
        grid_spec=grid_spec,
        compiler_params=pltpu.CompilerParams(
            dimension_semantics=("parallel",)),
    )(x,
      p["w_exp"], p["b_exp"].reshape(1, CE),
      p["w_dw"], p["b_dw"].reshape(1, CE),
      p["w_se1"], p["b_se1"].reshape(1, CSE),
      p["w_se2"], p["b_se2"].reshape(1, CE),
      p["w_proj"], p["b_proj"].reshape(1, C),
      p["w_head"], p["b_head"].reshape(1, F),
      p["w_cls"], p["b_cls"].reshape(1, n_cls))
    return logits.reshape(N, n_cls)


# --------------------------------------------------------------------------
# Forward pass (CustomEfficientNet.forward equivalent)
# --------------------------------------------------------------------------
def custom_efficientnet_forward(x_nchw, p):
    x = jnp.transpose(x_nchw, (0, 2, 3, 1))               # NCHW -> NHWC
    N, H, W, Cin = x.shape
    Ho, Wo = H // 2, W // 2

    # im2col for the 3x3/stride-2 stem conv (pure data movement; stays in XLA).
    xp = jnp.pad(x, ((0, 0), (1, 1), (1, 1), (0, 0)))
    taps = [xp[:, kh:kh + 2 * Ho:2, kw:kw + 2 * Wo:2, :]
            for kh in range(3) for kw in range(3)]
    patches = jnp.concatenate(taps, axis=-1).reshape(N * Ho * Wo, 9 * Cin)
    patches = patches.astype(jnp.bfloat16)

    y = stem_conv(patches, p["w_stem"], p["b_stem"])       # (M, 128) bf16
    x0 = y.reshape(N, Ho, Wo, -1)

    return mbconv_head_classifier(x0, p)                   # (N, 6) f32


# --------------------------------------------------------------------------
# Deterministic parameter init (logical dims zero-padded to lane-dense 128)
# --------------------------------------------------------------------------
def init_params(key):
    c_in, c_stem, c_exp, c_se, n_feat, n_cls = 3, 32, 128, 8, 64, 6
    cp, fp = 128, 128                 # lane-padded c_stem / n_features

    def dense(k, shape):
        return (jax.random.normal(k, shape, jnp.float32)
                / jnp.sqrt(jnp.float32(shape[0])))

    ks = jax.random.split(key, 8)
    w_stem = dense(ks[0], (9 * c_in, c_stem))
    w_exp = dense(ks[1], (c_stem, c_exp))
    w_dw = dense(ks[2], (9, c_exp))
    w_se1 = dense(ks[3], (c_exp, c_se))
    w_se2 = dense(ks[4], (c_se, c_exp))
    w_proj = dense(ks[5], (c_exp, c_stem))
    w_head = dense(ks[6], (c_stem, n_feat))
    w_cls = dense(ks[7], (n_feat, n_cls))

    def padc(a, n):   # zero-pad last dim to n
        return jnp.pad(a, [(0, 0)] * (a.ndim - 1) + [(0, n - a.shape[-1])])

    def padr(a, n):   # zero-pad first dim to n
        return jnp.pad(a, [(0, n - a.shape[0])] + [(0, 0)] * (a.ndim - 1))

    return {
        # bf16 for MXU-fed weights, f32 for small / elementwise weights+biases.
        "w_stem": padc(w_stem, cp).astype(jnp.bfloat16),
        "b_stem": jnp.zeros((cp,), jnp.float32),
        "w_exp": padr(w_exp, cp).astype(jnp.bfloat16),
        "b_exp": jnp.zeros((c_exp,), jnp.float32),
        "w_dw": w_dw,
        "b_dw": jnp.zeros((c_exp,), jnp.float32),
        "w_se1": w_se1,
        "b_se1": jnp.zeros((c_se,), jnp.float32),
        "w_se2": w_se2,
        "b_se2": jnp.zeros((c_exp,), jnp.float32),
        "w_proj": padc(w_proj, cp).astype(jnp.bfloat16),
        "b_proj": jnp.zeros((cp,), jnp.float32),
        "w_head": padc(padr(w_head, cp), fp).astype(jnp.bfloat16),
        "b_head": jnp.zeros((fp,), jnp.float32),
        "w_cls": padr(w_cls, fp),
        "b_cls": jnp.zeros((n_cls,), jnp.float32),
    }


if __name__ == "__main__":
    key = jax.random.PRNGKey(0)
    k_x, k_p = jax.random.split(key)
    params = init_params(k_p)

    # PyTorch-style NCHW input (small image), as the module's forward expects.
    x = jax.random.normal(k_x, (2, 3, 32, 32), jnp.float32)

    logits = jax.jit(custom_efficientnet_forward)(x, params)
    jax.block_until_ready(logits)

    assert logits.shape == (2, 6), logits.shape
    assert bool(jnp.all(jnp.isfinite(logits)))
    print("KERNEL_OK")
</pallas_src>

<mosaic_0001>
module attributes {stable_mosaic.version = 11 : i64} {
  func.func @_stem_kernel(%arg0: i32, %arg1: memref<256x27xbf16, #tpu.memory_space<vmem>>, %arg2: memref<27x128xbf16, #tpu.memory_space<vmem>>, %arg3: memref<1x128xf32, #tpu.memory_space<vmem>>, %arg4: memref<256x128xbf16, #tpu.memory_space<vmem>>) attributes {dimension_semantics = [#tpu.dimension_semantics<parallel>], iteration_bounds = array<i64: 2>, scalar_prefetch = 0 : i64, scratch_operands = 0 : i64, tpu.core_type = #tpu.core_type<tc>, window_params = [{transform_indices = @transform_0, window_bounds = array<i64: 256, 27>}, {pipeline_mode = #tpu.pipeline_mode<synchronous>, transform_indices = @transform_1, window_bounds = array<i64: 27, 128>}, {pipeline_mode = #tpu.pipeline_mode<synchronous>, transform_indices = @transform_2, window_bounds = array<i64: 1, 128>}, {transform_indices = @transform_3, window_bounds = array<i64: 256, 128>}]} {
    %c0 = arith.constant 0 : index
    %c0_0 = arith.constant 0 : index
    %0 = vector.load %arg1[%c0, %c0_0] : memref<256x27xbf16, #tpu.memory_space<vmem>>, vector<256x27xbf16>
    %c0_1 = arith.constant 0 : index
    %c0_2 = arith.constant 0 : index
    %1 = vector.load %arg2[%c0_1, %c0_2] : memref<27x128xbf16, #tpu.memory_space<vmem>>, vector<27x128xbf16>
    %cst = arith.constant dense<0.000000e+00> : vector<256x128xf32>
    %2 = tpu.matmul %0, %1, %cst {dimension_numbers = #tpu.dot_dimension_numbers<[1], [0], [0], [1], [0, 0, 1, 1], [], []>} : vector<256x27xbf16>, vector<27x128xbf16>, vector<256x128xf32> -> vector<256x128xf32>
    %c0_3 = arith.constant 0 : index
    %c0_4 = arith.constant 0 : index
    %3 = vector.load %arg3[%c0_3, %c0_4] : memref<1x128xf32, #tpu.memory_space<vmem>>, vector<1x128xf32>
    %4 = vector.broadcast %3 : vector<1x128xf32> to vector<256x128xf32>
    %5 = arith.addf %2, %4 : vector<256x128xf32>
    %cst_5 = arith.constant 0.000000e+00 : f32
    %6 = vector.broadcast %cst_5 : f32 to vector<256x128xf32>
    %7 = arith.subf %6, %5 : vector<256x128xf32>
    %8 = math.exp %7 : vector<256x128xf32>
    %cst_6 = arith.constant 1.000000e+00 : f32
    %9 = vector.broadcast %cst_6 : f32 to vector<256x128xf32>
    %10 = arith.addf %9, %8 : vector<256x128xf32>
    %11 = tpu.reciprocal %10 {approx = true} : vector<256x128xf32> -> vector<256x128xf32>
    %12 = arith.mulf %5, %11 : vector<256x128xf32>
    %13 = arith.truncf %12 : vector<256x128xf32> to vector<256x128xbf16>
    %c0_7 = arith.constant 0 : index
    %c0_8 = arith.constant 0 : index
    %14 = vector.load %arg4[%c0_7, %c0_8] : memref<256x128xbf16, #tpu.memory_space<vmem>>, vector<256x128xbf16>
    tpu.vector_store %arg4[%c0_7, %c0_8], %13 {strides = array<i32>} : memref<256x128xbf16, #tpu.memory_space<vmem>>, vector<256x128xbf16>,
    return
  }
  func.func @transform_0(%arg0: i32) -> (i32, i32) {
    %c0_i32 = arith.constant 0 : i32
    %c0_i32_0 = arith.constant 0 : i32
    return %arg0, %c0_i32 : i32, i32
  }
  func.func @transform_1(%arg0: i32) -> (i32, i32) {
    %c0_i32 = arith.constant 0 : i32
    %c0_i32_0 = arith.constant 0 : i32
    %c0_i32_1 = arith.constant 0 : i32
    return %c0_i32, %c0_i32_0 : i32, i32
  }
  func.func @transform_2(%arg0: i32) -> (i32, i32) {
    %c0_i32 = arith.constant 0 : i32
    %c0_i32_0 = arith.constant 0 : i32
    %c0_i32_1 = arith.constant 0 : i32
    return %c0_i32, %c0_i32_0 : i32, i32
  }
  func.func @transform_3(%arg0: i32) -> (i32, i32) {
    %c0_i32 = arith.constant 0 : i32
    %c0_i32_0 = arith.constant 0 : i32
    return %arg0, %c0_i32 : i32, i32
  }
}

module attributes {stable_mosaic.version = 11 : i64} {
  func.func @_mbconv_head_kernel(%arg0: i32, %arg1: memref<1x16x16x128xbf16, #tpu.memory_space<vmem>>, %arg2: memref<128x128xbf16, #tpu.memory_space<vmem>>, %arg3: memref<1x128xf32, #tpu.memory_space<vmem>>, %arg4: memref<9x128xf32, #tpu.memory_space<vmem>>, %arg5: memref<1x128xf32, #tpu.memory_space<vmem>>, %arg6: memref<128x8xf32, #tpu.memory_space<vmem>>, %arg7: memref<1x8xf32, #tpu.memory_space<vmem>>, %arg8: memref<8x128xf32, #tpu.memory_space<vmem>>, %arg9: memref<1x128xf32, #tpu.memory_space<vmem>>, %arg10: memref<128x128xbf16, #tpu.memory_space<vmem>>, %arg11: memref<1x128xf32, #tpu.memory_space<vmem>>, %arg12: memref<128x128xbf16, #tpu.memory_space<vmem>>, %arg13: memref<1x128xf32, #tpu.memory_space<vmem>>, %arg14: memref<128x6xf32, #tpu.memory_space<vmem>>, %arg15: memref<1x6xf32, #tpu.memory_space<vmem>>, %arg16: memref<1x1x6xf32, #tpu.memory_space<vmem>>, %arg17: memref<1x18x18x128xf32, #tpu.memory_space<vmem>>) attributes {dimension_semantics = [#tpu.dimension_semantics<parallel>], iteration_bounds = array<i64: 2>, scalar_prefetch = 0 : i64, scratch_operands = 1 : i64, tpu.core_type = #tpu.core_type<tc>, window_params = [{transform_indices = @transform_0, window_bounds = array<i64: 1, 16, 16, 128>}, {pipeline_mode = #tpu.pipeline_mode<synchronous>, transform_indices = @transform_1, window_bounds = array<i64: 128, 128>}, {pipeline_mode = #tpu.pipeline_mode<synchronous>, transform_indices = @transform_2, window_bounds = array<i64: 1, 128>}, {pipeline_mode = #tpu.pipeline_mode<synchronous>, transform_indices = @transform_3, window_bounds = array<i64: 9, 128>}, {pipeline_mode = #tpu.pipeline_mode<synchronous>, transform_indices = @transform_4, window_bounds = array<i64: 1, 128>}, {pipeline_mode = #tpu.pipeline_mode<synchronous>, transform_indices = @transform_5, window_bounds = array<i64: 128, 8>}, {pipeline_mode = #tpu.pipeline_mode<synchronous>, transform_indices = @transform_6, window_bounds = array<i64: 1, 8>}, {pipeline_mode = #tpu.pipeline_mode<synchronous>, transform_indices = @transform_7, window_bounds = array<i64: 8, 128>}, {pipeline_mode = #tpu.pipeline_mode<synchronous>, transform_indices = @transform_8, window_bounds = array<i64: 1, 128>}, {pipeline_mode = #tpu.pipeline_mode<synchronous>, transform_indices = @transform_9, window_bounds = array<i64: 128, 128>}, {pipeline_mode = #tpu.pipeline_mode<synchronous>, transform_indices = @transform_10, window_bounds = array<i64: 1, 128>}, {pipeline_mode = #tpu.pipeline_mode<synchronous>, transform_indices = @transform_11, window_bounds = array<i64: 128, 128>}, {pipeline_mode = #tpu.pipeline_mode<synchronous>, transform_indices = @transform_12, window_bounds = array<i64: 1, 128>}, {pipeline_mode = #tpu.pipeline_mode<synchronous>, transform_indices = @transform_13, window_bounds = array<i64: 128, 6>}, {pipeline_mode = #tpu.pipeline_mode<synchronous>, transform_indices = @transform_14, window_bounds = array<i64: 1, 6>}, {transform_indices = @transform_15, window_bounds = array<i64: 1, 1, 6>}]} {
    %c0 = arith.constant 0 : index
    %c0_0 = arith.constant 0 : index
    %c0_1 = arith.constant 0 : index
    %c0_2 = arith.constant 0 : index
    %0 = vector.load %arg1[%c0, %c0_0, %c0_1, %c0_2] : memref<1x16x16x128xbf16, #tpu.memory_space<vmem>>, vector<1x16x16x128xbf16>
    %1 = vector.shape_cast %0 : vector<1x16x16x128xbf16> to vector<256x128xbf16>
    %c0_3 = arith.constant 0 : index
    %c0_4 = arith.constant 0 : index
    %2 = vector.load %arg2[%c0_3, %c0_4] : memref<128x128xbf16, #tpu.memory_space<vmem>>, vector<128x128xbf16>
    %cst = arith.constant dense<0.000000e+00> : vector<256x128xf32>
    %3 = tpu.matmul %1, %2, %cst {dimension_numbers = #tpu.dot_dimension_numbers<[1], [0], [0], [1], [0, 0, 1, 1], [], []>} : vector<256x128xbf16>, vector<128x128xbf16>, vector<256x128xf32> -> vector<256x128xf32>
    %c0_5 = arith.constant 0 : index
    %c0_6 = arith.constant 0 : index
    %4 = vector.load %arg3[%c0_5, %c0_6] : memref<1x128xf32, #tpu.memory_space<vmem>>, vector<1x128xf32>
    %5 = vector.broadcast %4 : vector<1x128xf32> to vector<256x128xf32>
    %6 = arith.addf %3, %5 : vector<256x128xf32>
    %cst_7 = arith.constant 0.000000e+00 : f32
    %7 = vector.broadcast %cst_7 : f32 to vector<256x128xf32>
    %8 = arith.subf %7, %6 : vector<256x128xf32>
    %9 = math.exp %8 : vector<256x128xf32>
    %cst_8 = arith.constant 1.000000e+00 : f32
    %10 = vector.broadcast %cst_8 : f32 to vector<256x128xf32>
    %11 = arith.addf %10, %9 : vector<256x128xf32>
    %12 = tpu.reciprocal %11 {approx = true} : vector<256x128xf32> -> vector<256x128xf32>
    %13 = arith.mulf %6, %12 : vector<256x128xf32>
    %cst_9 = arith.constant 0.000000e+00 : f32
    %14 = vector.broadcast %cst_9 : f32 to vector<1x18x18x128xf32>
    %c0_10 = arith.constant 0 : index
    %c0_11 = arith.constant 0 : index
    %c0_12 = arith.constant 0 : index
    %c0_13 = arith.constant 0 : index
    %15 = vector.load %arg17[%c0_10, %c0_11, %c0_12, %c0_13] : memref<1x18x18x128xf32, #tpu.memory_space<vmem>>, vector<1x18x18x128xf32>
    tpu.vector_store %arg17[%c0_10, %c0_11, %c0_12, %c0_13], %14 {strides = array<i32>} : memref<1x18x18x128xf32, #tpu.memory_space<vmem>>, vector<1x18x18x128xf32>,
    %16 = vector.shape_cast %13 : vector<256x128xf32> to vector<1x16x16x128xf32>
    %c0_14 = arith.constant 0 : index
    %c1 = arith.constant 1 : index
    %c1_15 = arith.constant 1 : index
    %c0_16 = arith.constant 0 : index
    %17 = vector.load %arg17[%c0_14, %c1, %c1_15, %c0_16] : memref<1x18x18x128xf32, #tpu.memory_space<vmem>>, vector<1x16x16x128xf32>
    tpu.vector_store %arg17[%c0_14, %c1, %c1_15, %c0_16], %16 {strides = array<i32>} : memref<1x18x18x128xf32, #tpu.memory_space<vmem>>, vector<1x16x16x128xf32>,
    %c0_17 = arith.constant 0 : index
    %c0_18 = arith.constant 0 : index
    %18 = vector.load %arg4[%c0_17, %c0_18] : memref<9x128xf32, #tpu.memory_space<vmem>>, vector<9x128xf32>
    %cst_19 = arith.constant 0.000000e+00 : f32
    %19 = vector.broadcast %cst_19 : f32 to vector<1x16x16x128xf32>
    %c0_20 = arith.constant 0 : index
    %c0_21 = arith.constant 0 : index
    %c0_22 = arith.constant 0 : index
    %c0_23 = arith.constant 0 : index
    %20 = vector.load %arg17[%c0_20, %c0_21, %c0_22, %c0_23] : memref<1x18x18x128xf32, #tpu.memory_space<vmem>>, vector<1x16x16x128xf32>
    %21 = vector.extract_strided_slice %18 {offsets = [0, 0], sizes = [1, 128], strides = [1, 1]} : vector<9x128xf32> to vector<1x128xf32>
    %22 = vector.shape_cast %21 : vector<1x128xf32> to vector<128xf32>
    %23 = vector.shape_cast %22 : vector<128xf32> to vector<1x1x1x128xf32>
    %24 = vector.broadcast %23 : vector<1x1x1x128xf32> to vector<1x16x16x128xf32>
    %25 = arith.mulf %20, %24 : vector<1x16x16x128xf32>
    %26 = arith.addf %19, %25 : vector<1x16x16x128xf32>
    %c0_24 = arith.constant 0 : index
    %c0_25 = arith.constant 0 : index
    %c1_26 = arith.constant 1 : index
    %c0_27 = arith.constant 0 : index
    %27 = vector.load %arg17[%c0_24, %c0_25, %c1_26, %c0_27] : memref<1x18x18x128xf32, #tpu.memory_space<vmem>>, vector<1x16x16x128xf32>
    %28 = vector.extract_strided_slice %18 {offsets = [1, 0], sizes = [1, 128], strides = [1, 1]} : vector<9x128xf32> to vector<1x128xf32>
    %29 = vector.shape_cast %28 : vector<1x128xf32> to vector<128xf32>
    %30 = vector.shape_cast %29 : vector<128xf32> to vector<1x1x1x128xf32>
    %31 = vector.broadcast %30 : vector<1x1x1x128xf32> to vector<1x16x16x128xf32>
    %32 = arith.mulf %27, %31 : vector<1x16x16x128xf32>
    %33 = arith.addf %26, %32 : vector<1x16x16x128xf32>
    %c0_28 = arith.constant 0 : index
    %c0_29 = arith.constant 0 : index
    %c2 = arith.constant 2 : index
    %c0_30 = arith.constant 0 : index
    %34 = vector.load %arg17[%c0_28, %c0_29, %c2, %c0_30] : memref<1x18x18x128xf32, #tpu.memory_space<vmem>>, vector<1x16x16x128xf32>
    %35 = vector.extract_strided_slice %18 {offsets = [2, 0], sizes = [1, 128], strides = [1, 1]} : vector<9x128xf32> to vector<1x128xf32>
    %36 = vector.shape_cast %35 : vector<1x128xf32> to vector<128xf32>
    %37 = vector.shape_cast %36 : vector<128xf32> to vector<1x1x1x128xf32>
    %38 = vector.broadcast %37 : vector<1x1x1x128xf32> to vector<1x16x16x128xf32>
    %39 = arith.mulf %34, %38 : vector<1x16x16x128xf32>
    %40 = arith.addf %33, %39 : vector<1x16x16x128xf32>
    %c0_31 = arith.constant 0 : index
    %c1_32 = arith.constant 1 : index
    %c0_33 = arith.constant 0 : index
    %c0_34 = arith.constant 0 : index
    %41 = vector.load %arg17[%c0_31, %c1_32, %c0_33, %c0_34] : memref<1x18x18x128xf32, #tpu.memory_space<vmem>>, vector<1x16x16x128xf32>
    %42 = vector.extract_strided_slice %18 {offsets = [3, 0], sizes = [1, 128], strides = [1, 1]} : vector<9x128xf32> to vector<1x128xf32>
    %43 = vector.shape_cast %42 : vector<1x128xf32> to vector<128xf32>
    %44 = vector.shape_cast %43 : vector<128xf32> to vector<1x1x1x128xf32>
    %45 = vector.broadcast %44 : vector<1x1x1x128xf32> to vector<1x16x16x128xf32>
    %46 = arith.mulf %41, %45 : vector<1x16x16x128xf32>
    %47 = arith.addf %40, %46 : vector<1x16x16x128xf32>
    %c0_35 = arith.constant 0 : index
    %c1_36 = arith.constant 1 : index
    %c1_37 = arith.constant 1 : index
    %c0_38 = arith.constant 0 : index
    %48 = vector.load %arg17[%c0_35, %c1_36, %c1_37, %c0_38] : memref<1x18x18x128xf32, #tpu.memory_space<vmem>>, vector<1x16x16x128xf32>
    %49 = vector.extract_strided_slice %18 {offsets = [4, 0], sizes = [1, 128], strides = [1, 1]} : vector<9x128xf32> to vector<1x128xf32>
    %50 = vector.shape_cast %49 : vector<1x128xf32> to vector<128xf32>
    %51 = vector.shape_cast %50 : vector<128xf32> to vector<1x1x1x128xf32>
    %52 = vector.broadcast %51 : vector<1x1x1x128xf32> to vector<1x16x16x128xf32>
    %53 = arith.mulf %48, %52 : vector<1x16x16x128xf32>
    %54 = arith.addf %47, %53 : vector<1x16x16x128xf32>
    %c0_39 = arith.constant 0 : index
    %c1_40 = arith.constant 1 : index
    %c2_41 = arith.constant 2 : index
    %c0_42 = arith.constant 0 : index
    %55 = vector.load %arg17[%c0_39, %c1_40, %c2_41, %c0_42] : memref<1x18x18x128xf32, #tpu.memory_space<vmem>>, vector<1x16x16x128xf32>
    %56 = vector.extract_strided_slice %18 {offsets = [5, 0], sizes = [1, 128], strides = [1, 1]} : vector<9x128xf32> to vector<1x128xf32>
    %57 = vector.shape_cast %56 : vector<1x128xf32> to vector<128xf32>
    %58 = vector.shape_cast %57 : vector<128xf32> to vector<1x1x1x128xf32>
    %59 = vector.broadcast %58 : vector<1x1x1x128xf32> to vector<1x16x16x128xf32>
    %60 = arith.mulf %55, %59 : vector<1x16x16x128xf32>
    %61 = arith.addf %54, %60 : vector<1x16x16x128xf32>
    %c0_43 = arith.constant 0 : index
    %c2_44 = arith.constant 2 : index
    %c0_45 = arith.constant 0 : index
    %c0_46 = arith.constant 0 : index
    %62 = vector.load %arg17[%c0_43, %c2_44, %c0_45, %c0_46] : memref<1x18x18x128xf32, #tpu.memory_space<vmem>>, vector<1x16x16x128xf32>
    %63 = vector.extract_strided_slice %18 {offsets = [6, 0], sizes = [1, 128], strides = [1, 1]} : vector<9x128xf32> to vector<1x128xf32>
    %64 = vector.shape_cast %63 : vector<1x128xf32> to vector<128xf32>
    %65 = vector.shape_cast %64 : vector<128xf32> to vector<1x1x1x128xf32>
    %66 = vector.broadcast %65 : vector<1x1x1x128xf32> to vector<1x16x16x128xf32>
    %67 = arith.mulf %62, %66 : vector<1x16x16x128xf32>
    %68 = arith.addf %61, %67 : vector<1x16x16x128xf32>
    %c0_47 = arith.constant 0 : index
    %c2_48 = arith.constant 2 : index
    %c1_49 = arith.constant 1 : index
    %c0_50 = arith.constant 0 : index
    %69 = vector.load %arg17[%c0_47, %c2_48, %c1_49, %c0_50] : memref<1x18x18x128xf32, #tpu.memory_space<vmem>>, vector<1x16x16x128xf32>
    %70 = vector.extract_strided_slice %18 {offsets = [7, 0], sizes = [1, 128], strides = [1, 1]} : vector<9x128xf32> to vector<1x128xf32>
    %71 = vector.shape_cast %70 : vector<1x128xf32> to vector<128xf32>
    %72 = vector.shape_cast %71 : vector<128xf32> to vector<1x1x1x128xf32>
    %73 = vector.broadcast %72 : vector<1x1x1x128xf32> to vector<1x16x16x128xf32>
    %74 = arith.mulf %69, %73 : vector<1x16x16x128xf32>
    %75 = arith.addf %68, %74 : vector<1x16x16x128xf32>
    %c0_51 = arith.constant 0 : index
    %c2_52 = arith.constant 2 : index
    %c2_53 = arith.constant 2 : index
    %c0_54 = arith.constant 0 : index
    %76 = vector.load %arg17[%c0_51, %c2_52, %c2_53, %c0_54] : memref<1x18x18x128xf32, #tpu.memory_space<vmem>>, vector<1x16x16x128xf32>
    %77 = vector.extract_strided_slice %18 {offsets = [8, 0], sizes = [1, 128], strides = [1, 1]} : vector<9x128xf32> to vector<1x128xf32>
    %78 = vector.shape_cast %77 : vector<1x128xf32> to vector<128xf32>
    %79 = vector.shape_cast %78 : vector<128xf32> to vector<1x1x1x128xf32>
    %80 = vector.broadcast %79 : vector<1x1x1x128xf32> to vector<1x16x16x128xf32>
    %81 = arith.mulf %76, %80 : vector<1x16x16x128xf32>
    %82 = arith.addf %75, %81 : vector<1x16x16x128xf32>
    %83 = vector.shape_cast %82 : vector<1x16x16x128xf32> to vector<256x128xf32>
    %c0_55 = arith.constant 0 : index
    %c0_56 = arith.constant 0 : index
    %84 = vector.load %arg5[%c0_55, %c0_56] : memref<1x128xf32, #tpu.memory_space<vmem>>, vector<1x128xf32>
    %85 = vector.broadcast %84 : vector<1x128xf32> to vector<256x128xf32>
    %86 = arith.addf %83, %85 : vector<256x128xf32>
    %cst_57 = arith.constant 0.000000e+00 : f32
    %87 = vector.broadcast %cst_57 : f32 to vector<256x128xf32>
    %88 = arith.subf %87, %86 : vector<256x128xf32>
    %89 = math.exp %88 : vector<256x128xf32>
    %cst_58 = arith.constant 1.000000e+00 : f32
    %90 = vector.broadcast %cst_58 : f32 to vector<256x128xf32>
    %91 = arith.addf %90, %89 : vector<256x128xf32>
    %92 = tpu.reciprocal %91 {approx = true} : vector<256x128xf32> -> vector<256x128xf32>
    %93 = arith.mulf %86, %92 : vector<256x128xf32>
    %cst_59 = arith.constant dense<0.000000e+00> : vector<128xf32>
    %94 = vector.multi_reduction <add>, %93, %cst_59 [0] : vector<256x128xf32> to vector<128xf32>
    %95 = vector.shape_cast %94 : vector<128xf32> to vector<1x128xf32>
    %cst_60 = arith.constant 2.560000e+02 : f32
    %96 = vector.broadcast %cst_60 : f32 to vector<1x128xf32>
    %97 = arith.divf %95, %96 : vector<1x128xf32>
    %c0_61 = arith.constant 0 : index
    %c0_62 = arith.constant 0 : index
    %98 = vector.load %arg6[%c0_61, %c0_62] : memref<128x8xf32, #tpu.memory_space<vmem>>, vector<128x8xf32>
    %cst_63 = arith.constant dense<0.000000e+00> : vector<1x8xf32>
    %99 = tpu.matmul %97, %98, %cst_63 {dimension_numbers = #tpu.dot_dimension_numbers<[1], [0], [0], [1], [0, 0, 1, 1], [], []>} : vector<1x128xf32>, vector<128x8xf32>, vector<1x8xf32> -> vector<1x8xf32>
    %c0_64 = arith.constant 0 : index
    %c0_65 = arith.constant 0 : index
    %100 = vector.load %arg7[%c0_64, %c0_65] : memref<1x8xf32, #tpu.memory_space<vmem>>, vector<1x8xf32>
    %101 = arith.addf %99, %100 : vector<1x8xf32>
    %cst_66 = arith.constant 0.000000e+00 : f32
    %102 = vector.broadcast %cst_66 : f32 to vector<1x8xf32>
    %103 = arith.subf %102, %101 : vector<1x8xf32>
    %104 = math.exp %103 : vector<1x8xf32>
    %cst_67 = arith.constant 1.000000e+00 : f32
    %105 = vector.broadcast %cst_67 : f32 to vector<1x8xf32>
    %106 = arith.addf %105, %104 : vector<1x8xf32>
    %107 = tpu.reciprocal %106 {approx = true} : vector<1x8xf32> -> vector<1x8xf32>
    %108 = arith.mulf %101, %107 : vector<1x8xf32>
    %c0_68 = arith.constant 0 : index
    %c0_69 = arith.constant 0 : index
    %109 = vector.load %arg8[%c0_68, %c0_69] : memref<8x128xf32, #tpu.memory_space<vmem>>, vector<8x128xf32>
    %cst_70 = arith.constant dense<0.000000e+00> : vector<1x128xf32>
    %110 = tpu.matmul %108, %109, %cst_70 {dimension_numbers = #tpu.dot_dimension_numbers<[1], [0], [0], [1], [0, 0, 1, 1], [], []>} : vector<1x8xf32>, vector<8x128xf32>, vector<1x128xf32> -> vector<1x128xf32>
    %c0_71 = arith.constant 0 : index
    %c0_72 = arith.constant 0 : index
    %111 = vector.load %arg9[%c0_71, %c0_72] : memref<1x128xf32, #tpu.memory_space<vmem>>, vector<1x128xf32>
    %112 = arith.addf %110, %111 : vector<1x128xf32>
    %cst_73 = arith.constant 0.000000e+00 : f32
    %113 = vector.broadcast %cst_73 : f32 to vector<1x128xf32>
    %114 = arith.subf %113, %112 : vector<1x128xf32>
    %115 = math.exp %114 : vector<1x128xf32>
    %cst_74 = arith.constant 1.000000e+00 : f32
    %116 = vector.broadcast %cst_74 : f32 to vector<1x128xf32>
    %117 = arith.addf %116, %115 : vector<1x128xf32>
    %118 = tpu.reciprocal %117 {approx = true} : vector<1x128xf32> -> vector<1x128xf32>
    %119 = vector.broadcast %118 : vector<1x128xf32> to vector<256x128xf32>
    %120 = arith.mulf %93, %119 : vector<256x128xf32>
    %121 = arith.truncf %120 : vector<256x128xf32> to vector<256x128xbf16>
    %c0_75 = arith.constant 0 : index
    %c0_76 = arith.constant 0 : index
    %122 = vector.load %arg10[%c0_75, %c0_76] : memref<128x128xbf16, #tpu.memory_space<vmem>>, vector<128x128xbf16>
    %cst_77 = arith.constant dense<0.000000e+00> : vector<256x128xf32>
    %123 = tpu.matmul %121, %122, %cst_77 {dimension_numbers = #tpu.dot_dimension_numbers<[1], [0], [0], [1], [0, 0, 1, 1], [], []>} : vector<256x128xbf16>, vector<128x128xbf16>, vector<256x128xf32> -> vector<256x128xf32>
    %c0_78 = arith.constant 0 : index
    %c0_79 = arith.constant 0 : index
    %124 = vector.load %arg11[%c0_78, %c0_79] : memref<1x128xf32, #tpu.memory_space<vmem>>, vector<1x128xf32>
    %125 = vector.broadcast %124 : vector<1x128xf32> to vector<256x128xf32>
    %126 = arith.addf %123, %125 : vector<256x128xf32>
    %127 = arith.extf %1 : vector<256x128xbf16> to vector<256x128xf32>
    %128 = arith.addf %126, %127 : vector<256x128xf32>
    %129 = arith.truncf %128 : vector<256x128xf32> to vector<256x128xbf16>
    %c0_80 = arith.constant 0 : index
    %c0_81 = arith.constant 0 : index
    %130 = vector.load %arg12[%c0_80, %c0_81] : memref<128x128xbf16, #tpu.memory_space<vmem>>, vector<128x128xbf16>
    %cst_82 = arith.constant dense<0.000000e+00> : vector<256x128xf32>
    %131 = tpu.matmul %129, %130, %cst_82 {dimension_numbers = #tpu.dot_dimension_numbers<[1], [0], [0], [1], [0, 0, 1, 1], [], []>} : vector<256x128xbf16>, vector<128x128xbf16>, vector<256x128xf32> -> vector<256x128xf32>
    %c0_83 = arith.constant 0 : index
    %c0_84 = arith.constant 0 : index
    %132 = vector.load %arg13[%c0_83, %c0_84] : memref<1x128xf32, #tpu.memory_space<vmem>>, vector<1x128xf32>
    %133 = vector.broadcast %132 : vector<1x128xf32> to vector<256x128xf32>
    %134 = arith.addf %131, %133 : vector<256x128xf32>
    %cst_85 = arith.constant 0.000000e+00 : f32
    %135 = vector.broadcast %cst_85 : f32 to vector<256x128xf32>
    %136 = arith.subf %135, %134 : vector<256x128xf32>
    %137 = math.exp %136 : vector<256x128xf32>
    %cst_86 = arith.constant 1.000000e+00 : f32
    %138 = vector.broadcast %cst_86 : f32 to vector<256x128xf32>
    %139 = arith.addf %138, %137 : vector<256x128xf32>
    %140 = tpu.reciprocal %139 {approx = true} : vector<256x128xf32> -> vector<256x128xf32>
    %141 = arith.mulf %134, %140 : vector<256x128xf32>
    %cst_87 = arith.constant dense<0.000000e+00> : vector<128xf32>
    %142 = vector.multi_reduction <add>, %141, %cst_87 [0] : vector<256x128xf32> to vector<128xf32>
    %143 = vector.shape_cast %142 : vector<128xf32> to vector<1x128xf32>
    %cst_88 = arith.constant 2.560000e+02 : f32
    %144 = vector.broadcast %cst_88 : f32 to vector<1x128xf32>
    %145 = arith.divf %143, %144 : vector<1x128xf32>
    %c0_89 = arith.constant 0 : index
    %c0_90 = arith.constant 0 : index
    %146 = vector.load %arg14[%c0_89, %c0_90] : memref<128x6xf32, #tpu.memory_space<vmem>>, vector<128x6xf32>
    %cst_91 = arith.constant dense<0.000000e+00> : vector<1x6xf32>
    %147 = tpu.matmul %145, %146, %cst_91 {dimension_numbers = #tpu.dot_dimension_numbers<[1], [0], [0], [1], [0, 0, 1, 1], [], []>} : vector<1x128xf32>, vector<128x6xf32>, vector<1x6xf32> -> vector<1x6xf32>
    %c0_92 = arith.constant 0 : index
    %c0_93 = arith.constant 0 : index
    %148 = vector.load %arg15[%c0_92, %c0_93] : memref<1x6xf32, #tpu.memory_space<vmem>>, vector<1x6xf32>
    %149 = arith.addf %147, %148 : vector<1x6xf32>
    %150 = vector.shape_cast %149 : vector<1x6xf32> to vector<1x1x6xf32>
    %c0_94 = arith.constant 0 : index
    %c0_95 = arith.constant 0 : index
    %c0_96 = arith.constant 0 : index
    %151 = vector.load %arg16[%c0_94, %c0_95, %c0_96] : memref<1x1x6xf32, #tpu.memory_space<vmem>>, vector<1x1x6xf32>
    tpu.vector_store %arg16[%c0_94, %c0_95, %c0_96], %150 {strides = array<i32>} : memref<1x1x6xf32, #tpu.memory_space<vmem>>, vector<1x1x6xf32>,
    return
  }
  func.func @transform_0(%arg0: i32) -> (i32, i32, i32, i32) {
    %c0_i32 = arith.constant 0 : i32
    %c0_i32_0 = arith.constant 0 : i32
    %c0_i32_1 = arith.constant 0 : i32
    %c0_i32_2 = arith.constant 0 : i32
    return %arg0, %c0_i32, %c0_i32_0, %c0_i32_1 : i32, i32, i32, i32
  }
  func.func @transform_1(%arg0: i32) -> (i32, i32) {
    %c0_i32 = arith.constant 0 : i32
    %c0_i32_0 = arith.constant 0 : i32
    %c0_i32_1 = arith.constant 0 : i32
    return %c0_i32, %c0_i32_0 : i32, i32
  }
  func.func @transform_2(%arg0: i32) -> (i32, i32) {
    %c0_i32 = arith.constant 0 : i32
    %c0_i32_0 = arith.constant 0 : i32
    %c0_i32_1 = arith.constant 0 : i32
    return %c0_i32, %c0_i32_0 : i32, i32
  }
  func.func @transform_3(%arg0: i32) -> (i32, i32) {
    %c0_i32 = arith.constant 0 : i32
    %c0_i32_0 = arith.constant 0 : i32
    %c0_i32_1 = arith.constant 0 : i32
    return %c0_i32, %c0_i32_0 : i32, i32
  }
  func.func @transform_4(%arg0: i32) -> (i32, i32) {
    %c0_i32 = arith.constant 0 : i32
    %c0_i32_0 = arith.constant 0 : i32
    %c0_i32_1 = arith.constant 0 : i32
    return %c0_i32, %c0_i32_0 : i32, i32
  }
  func.func @transform_5(%arg0: i32) -> (i32, i32) {
    %c0_i32 = arith.constant 0 : i32
    %c0_i32_0 = arith.constant 0 : i32
    %c0_i32_1 = arith.constant 0 : i32
    return %c0_i32, %c0_i32_0 : i32, i32
  }
  func.func @transform_6(%arg0: i32) -> (i32, i32) {
    %c0_i32 = arith.constant 0 : i32
    %c0_i32_0 = arith.constant 0 : i32
    %c0_i32_1 = arith.constant 0 : i32
    return %c0_i32, %c0_i32_0 : i32, i32
  }
  func.func @transform_7(%arg0: i32) -> (i32, i32) {
    %c0_i32 = arith.constant 0 : i32
    %c0_i32_0 = arith.constant 0 : i32
    %c0_i32_1 = arith.constant 0 : i32
    return %c0_i32, %c0_i32_0 : i32, i32
  }
  func.func @transform_8(%arg0: i32) -> (i32, i32) {
    %c0_i32 = arith.constant 0 : i32
    %c0_i32_0 = arith.constant 0 : i32
    %c0_i32_1 = arith.constant 0 : i32
    return %c0_i32, %c0_i32_0 : i32, i32
  }
  func.func @transform_9(%arg0: i32) -> (i32, i32) {
    %c0_i32 = arith.constant 0 : i32
    %c0_i32_0 = arith.constant 0 : i32
    %c0_i32_1 = arith.constant 0 : i32
    return %c0_i32, %c0_i32_0 : i32, i32
  }
  func.func @transform_10(%arg0: i32) -> (i32, i32) {
    %c0_i32 = arith.constant 0 : i32
    %c0_i32_0 = arith.constant 0 : i32
    %c0_i32_1 = arith.constant 0 : i32
    return %c0_i32, %c0_i32_0 : i32, i32
  }
  func.func @transform_11(%arg0: i32) -> (i32, i32) {
    %c0_i32 = arith.constant 0 : i32
    %c0_i32_0 = arith.constant 0 : i32
    %c0_i32_1 = arith.constant 0 : i32
    return %c0_i32, %c0_i32_0 : i32, i32
  }
  func.func @transform_12(%arg0: i32) -> (i32, i32) {
    %c0_i32 = arith.constant 0 : i32
    %c0_i32_0 = arith.constant 0 : i32
    %c0_i32_1 = arith.constant 0 : i32
    return %c0_i32, %c0_i32_0 : i32, i32
  }
  func.func @transform_13(%arg0: i32) -> (i32, i32) {
    %c0_i32 = arith.constant 0 : i32
    %c0_i32_0 = arith.constant 0 : i32
    %c0_i32_1 = arith.constant 0 : i32
    return %c0_i32, %c0_i32_0 : i32, i32
  }
  func.func @transform_14(%arg0: i32) -> (i32, i32) {
    %c0_i32 = arith.constant 0 : i32
    %c0_i32_0 = arith.constant 0 : i32
    %c0_i32_1 = arith.constant 0 : i32
    return %c0_i32, %c0_i32_0 : i32, i32
  }
  func.func @transform_15(%arg0: i32) -> (i32, i32, i32) {
    %c0_i32 = arith.constant 0 : i32
    %c0_i32_0 = arith.constant 0 : i32
    %c0_i32_1 = arith.constant 0 : i32
    return %arg0, %c0_i32, %c0_i32_0 : i32, i32, i32
  }
}

</mosaic_0001>

<llo_original>
// kernel: custom_efficientnet_forward.2
$region0: #{custom_efficientnet_forward.2}
  #allocation0 [shape = 'u32[]', space=smem, size = 0x4, offset = 0x4, fixed_abs, tag = 'smem constant byte address 0x4 - core index']
  #allocation1 [shape = 'u32[72,128]{1,0:T(1,128)}', space=vmem, size = 0x9000, scoped, tag = 'internal scratch']
  %s0 = inlined_call_operand.vmem [shape: bf16[512,27], index: 0, kind: input, shape index: {}]
  %s1 = inlined_call_operand.vmem [shape: bf16[27,128], index: 1, kind: input, shape index: {}]
  %s2 = inlined_call_operand.vmem [shape: f32[1,128], index: 2, kind: input, shape index: {}]
  %s3 = inlined_call_operand.vmem [shape: bf16[512,128], index: 3, kind: output, shape index: {}]
  %s4 = sld [smem:[#allocation0]]
  $region45: #{custom_efficientnet_forward.2} parent=0
    _
  %s6 = ssub.s32 1, %s4
  %s7 = scalar_select 0, %s6, %s4
  loop: start=0, step=1, limit=4
  $region2: #{custom_efficientnet_forward.2} parent=0 // loop_pre_header
    _
  $region3: #{custom_efficientnet_forward.2} parent=0 // loop_header
    %s9 = sphi 0, %s13
    %p10 = scmp.ge.s32.totalorder %s9, 4
    %s19 = sphi 0, %s21
    %s22 = sphi 0, %s19
    %s23 = sphi 0, %s22
    %s39 = sphi 0, %s23
    %s43 = sphi 0, %s43
    %s45 = sphi 0, %s43
    %s46 = sphi 0, %s45
    %s60 = sphi 0, %s46
    %s64 = sphi 0, %s64
    %s66 = sphi 0, %s64
    %s67 = sphi 0, %s66
    %s81 = sphi 0, %s67
    %s87 = sphi 0, %s89
    %s90 = sphi 0, %s87
    %s91 = sphi 0, %s90
    %s107 = sphi 0, %s91
  $region4: #{custom_efficientnet_forward.2} parent=0 // loop_header_branch
    %12 = sbr.rel (%p10) target = $region8
  $region5: #{custom_efficientnet_forward.2} parent=0 // loop_body
    %s14 = ssub.s32 %s9, 1
    %s15 = ssub.s32 %s9, 2
    %s16 = sadd.s32 %s9, 1
    %s17 = ssub.s32 %s9, %s16
    %p18 = scmp.eq.s32.totalorder %s17, 0
    %s20 = sadd.s32 %s19, 1
    %s21 = scalar_select %p18, %s19, %s20
    %p24 = pneg %p18
    %p25 = scmp.eq.s32.totalorder %s9, 1
    %p26 = por %p24, %p25
    %p27 = scmp.ne.s32.totalorder %s19, %s22
    %p28 = scmp.eq.s32.totalorder %s9, 0
    %p29 = por %p27, %p28
    %p30 = scmp.ne.s32.totalorder %s19, %s22
    %p31 = scmp.eq.s32.totalorder %s14, 1
    %p32 = por %p30, %p31
    %p33 = scmp.ne.s32.totalorder %s22, %s23
    %p34 = scmp.eq.s32.totalorder %s14, 0
    %p35 = por %p33, %p34
    %p36 = scmp.ne.s32.totalorder %s22, %s23
    %p37 = scmp.eq.s32.totalorder %s15, 1
    %p38 = por %p36, %p37
    %p40 = scmp.ne.s32.totalorder %s23, %s39
    %p41 = scmp.eq.s32.totalorder %s15, 0
    %p42 = por %p40, %p41
    %s44 = sadd.s32 %s43, 1
    %p47 = scmp.eq.s32.totalorder %s9, 1
    %p48 = scmp.ne.s32.totalorder %s43, %s45
    %p49 = scmp.eq.s32.totalorder %s9, 0
    %p50 = por %p48, %p49
    %p51 = scmp.ne.s32.totalorder %s43, %s45
    %p52 = scmp.eq.s32.totalorder %s14, 1
    %p53 = por %p51, %p52
    %p54 = scmp.ne.s32.totalorder %s45, %s46
    %p55 = scmp.eq.s32.totalorder %s14, 0
    %p56 = por %p54, %p55
    %p57 = scmp.ne.s32.totalorder %s45, %s46
    %p58 = scmp.eq.s32.totalorder %s15, 1
    %p59 = por %p57, %p58
    %p61 = scmp.ne.s32.totalorder %s46, %s60
    %p62 = scmp.eq.s32.totalorder %s15, 0
    %p63 = por %p61, %p62
    %s65 = sadd.s32 %s64, 1
    %p68 = scmp.eq.s32.totalorder %s9, 1
    %p69 = scmp.ne.s32.totalorder %s64, %s66
    %p70 = scmp.eq.s32.totalorder %s9, 0
    %p71 = por %p69, %p70
    %p72 = scmp.ne.s32.totalorder %s64, %s66
    %p73 = scmp.eq.s32.totalorder %s14, 1
    %p74 = por %p72, %p73
    %p75 = scmp.ne.s32.totalorder %s66, %s67
    %p76 = scmp.eq.s32.totalorder %s14, 0
    %p77 = por %p75, %p76
    %p78 = scmp.ne.s32.totalorder %s66, %s67
    %p79 = scmp.eq.s32.totalorder %s15, 1
    %p80 = por %p78, %p79
    %p82 = scmp.ne.s32.totalorder %s67, %s81
    %p83 = scmp.eq.s32.totalorder %s15, 0
    %p84 = por %p82, %p83
    %s85 = ssub.s32 %s9, %s16
    %p86 = scmp.eq.s32.totalorder %s85, 0
    %s88 = sadd.s32 %s87, 1
    %s89 = scalar_select %p86, %s87, %s88
    %p92 = pneg %p86
    %p93 = scmp.eq.s32.totalorder %s9, 1
    %p94 = por %p92, %p93
    %p95 = scmp.ne.s32.totalorder %s87, %s90
    %p96 = scmp.eq.s32.totalorder %s9, 0
    %p97 = por %p95, %p96
    %p98 = scmp.ne.s32.totalorder %s87, %s90
    %p99 = scmp.eq.s32.totalorder %s14, 1
    %p100 = por %p98, %p99
    %p101 = scmp.ne.s32.totalorder %s90, %s91
    %p102 = scmp.eq.s32.totalorder %s14, 0
    %p103 = por %p101, %p102
    %p104 = scmp.ne.s32.totalorder %s90, %s91
    %p105 = scmp.eq.s32.totalorder %s15, 1
    %p106 = por %p104, %p105
    %p108 = scmp.ne.s32.totalorder %s91, %s107
    %p109 = scmp.eq.s32.totalorder %s15, 0
    %p110 = por %p108, %p109
    %p111 = scmp.le.s32.totalorder 1, %s9
    %p112 = scmp.lt.s32.totalorder %s9, 3
    %p113 = pnand %p111, %p112
    %p114 = pneg %p113
    // Predicated region
    $region9: #{custom_efficientnet_forward.2} parent=5 // pred_check
      _
    $region10: #{custom_efficientnet_forward.2} parent=5 // pred_check_branch
      %116 = sbr.rel (%p113) target = $region12
    $region11: #{custom_efficientnet_forward.2} parent=5 // pred_region
      %s117 = ssub.s32 %s9, 1
      // Predicated region
      $region13: #{custom_efficientnet_forward.2} parent=11 // pred_check
        %p118 = pneg %p56
      $region14: #{custom_efficientnet_forward.2} parent=11 // pred_check_branch
        %120 = sbr.rel (%p118) target = $region16
      $region15: #{custom_efficientnet_forward.2} parent=11 // pred_region
        _
      $region16: #{custom_efficientnet_forward.2} parent=11 // pred_fallthru
        _
      // Predicated region
      $region17: #{custom_efficientnet_forward.2} parent=11 // pred_check
        %p121 = pneg %p77
      $region18: #{custom_efficientnet_forward.2} parent=11 // pred_check_branch
        %123 = sbr.rel (%p121) target = $region20
      $region19: #{custom_efficientnet_forward.2} parent=11 // pred_region
        _
      $region20: #{custom_efficientnet_forward.2} parent=11 // pred_fallthru
        _
    $region12: #{custom_efficientnet_forward.2} parent=5 // pred_fallthru
      _
    %p124 = scmp.lt.s32.totalorder %s9, 2
    // Predicated region
    $region21: #{custom_efficientnet_forward.2} parent=5 // pred_check
      %p125 = pneg %p124
    $region22: #{custom_efficientnet_forward.2} parent=5 // pred_check_branch
      %127 = sbr.rel (%p125) target = $region24
    $region23: #{custom_efficientnet_forward.2} parent=5 // pred_region
      // Predicated region
      $region25: #{custom_efficientnet_forward.2} parent=23 // pred_check
        %p128 = pneg %p29
      $region26: #{custom_efficientnet_forward.2} parent=23 // pred_check_branch
        %130 = sbr.rel (%p128) target = $region28
      $region27: #{custom_efficientnet_forward.2} parent=23 // pred_region
        %s131 = smul.u32 32, %s9
        %p132 = scmp.lt.s32.totalorder %s131, 63
        %s133 = scalar_select %p132, %s131, 63
        %s134 = smul.addr %s133, 4
        %s135 = scalar_lea.vmem %s0, %s134
        %s136 = smul.u32 32, %s9
      $region28: #{custom_efficientnet_forward.2} parent=23 // pred_fallthru
        _
    $region24: #{custom_efficientnet_forward.2} parent=5 // pred_fallthru
      _
    %p137 = scmp.le.s32.totalorder 1, %s9
    %p138 = scmp.lt.s32.totalorder %s9, 3
    %p139 = pnand %p137, %p138
    %p140 = pneg %p139
    // Predicated region
    $region29: #{custom_efficientnet_forward.2} parent=5 // pred_check
      _
    $region30: #{custom_efficientnet_forward.2} parent=5 // pred_check_branch
      %142 = sbr.rel (%p139) target = $region32
    $region31: #{custom_efficientnet_forward.2} parent=5 // pred_region
      %s143 = ssub.s32 %s9, 1
      %s144 = smul.u32 32, %s14
      %p145 = scmp.lt.s32.totalorder %s144, 63
      %s146 = scalar_select %p145, %s144, 63
      %s147 = smul.addr %s146, 4
      %s148 = scalar_lea.vmem %s0, %s147
      %p149 = pneg %p35
      %p150 = pneg %p32
      %p151 = pneg %p56
      %p152 = pneg %p53
      %p153 = pneg %p77
      %p154 = pneg %p74
      %p155 = pneg %p103
      %p156 = pneg %p100
      %s157 = smul.u32 32, %s14
      %p158 = scmp.lt.s32.totalorder %s157, 63
      %s159 = scalar_select %p158, %s157, 63
      %s160 = smul.addr %s159, 4
      %s161 = scalar_lea.vmem %s3, %s160
      %s162 = smul.u32 32, %s14
      %p163 = scmp.lt.s32.totalorder %s162, 63
      %s164 = scalar_select %p163, %s162, 63
      %s165 = smul.addr %s164, 4
      %s166 = scalar_lea.vmem %s0, %s165
      %s167 = smul.u32 32, %s14
      %s168 = smul.u32 32, %s14
      %p169 = scmp.lt.s32.totalorder %s168, 63
      %s170 = scalar_select %p169, %s168, 63
      %s171 = smul.addr %s170, 4
      %s172 = scalar_lea.vmem %s3, %s171
      %s173 = smul.u32 32, %s14
      %v175 = vld [vmem:[%s166] sm:$0xf]
      %v176 = vld [vmem:[%s166 + $0x4] sm:$0xf]
      %v177 = vld [vmem:[%s166 + $0x8] sm:$0xf]
      %v178 = vld [vmem:[%s166 + $0xc] sm:$0xf]
      %v179 = vld [vmem:[%s166 + $0x10] sm:$0xf]
      %v180 = vld [vmem:[%s166 + $0x14] sm:$0xf]
      %v181 = vld [vmem:[%s166 + $0x18] sm:$0xf]
      %v182 = vld [vmem:[%s166 + $0x1c] sm:$0xf]
      %v183 = vld [vmem:[%s166 + $0x20] sm:$0xf]
      %v184 = vld [vmem:[%s166 + $0x24] sm:$0xf]
      %v185 = vld [vmem:[%s166 + $0x28] sm:$0xf]
      %v186 = vld [vmem:[%s166 + $0x2c] sm:$0xf]
      %v187 = vld [vmem:[%s166 + $0x30] sm:$0xf]
      %v188 = vld [vmem:[%s166 + $0x34] sm:$0xf]
      %v189 = vld [vmem:[%s166 + $0x38] sm:$0xf]
      %v190 = vld [vmem:[%s166 + $0x3c] sm:$0xf]
      %v191 = vld [vmem:[%s166 + $0x40] sm:$0xf]
      %v192 = vld [vmem:[%s166 + $0x44] sm:$0xf]
      %v193 = vld [vmem:[%s166 + $0x48] sm:$0xf]
      %v194 = vld [vmem:[%s166 + $0x4c] sm:$0xf]
      %v195 = vld [vmem:[%s166 + $0x50] sm:$0xf]
      %v196 = vld [vmem:[%s166 + $0x54] sm:$0xf]
      %v197 = vld [vmem:[%s166 + $0x58] sm:$0xf]
      %v198 = vld [vmem:[%s166 + $0x5c] sm:$0xf]
      %v199 = vld [vmem:[%s166 + $0x60] sm:$0xf]
      %v200 = vld [vmem:[%s166 + $0x64] sm:$0xf]
      %v201 = vld [vmem:[%s166 + $0x68] sm:$0xf]
      %v202 = vld [vmem:[%s166 + $0x6c] sm:$0xf]
      %v203 = vld [vmem:[%s166 + $0x70] sm:$0xf]
      %v204 = vld [vmem:[%s166 + $0x74] sm:$0xf]
      %v205 = vld [vmem:[%s166 + $0x78] sm:$0xf]
      %v206 = vld [vmem:[%s166 + $0x7c] sm:$0xf]
      %v207 = vld [vmem:[%s1] sm:$0xf]
      %v208 = vld [vmem:[%s1 + $0x4] sm:$0xf]
      %v209 = vld [vmem:[%s1 + $0x8] sm:$0xf]
      %v210 = vld [vmem:[%s1 + $0xc] sm:$0x3]
      %v211 = vld [vmem:[%s2] sm:$0x1]
      %v213 = vperm.slane %v211, 0
      %v247 = vunpack.c.l.b16 %v175
      %v248 = vunpack.c.l.b16 %v176
      %v249 = vunpack.c.l.b16 %v177
      %v250 = vunpack.c.l.b16 %v178
      %v251 = vunpack.c.l.b16 %v179
      %v252 = vunpack.c.l.b16 %v180
      %v253 = vunpack.c.l.b16 %v181
      %v254 = vunpack.c.l.b16 %v182
      %v255 = vunpack.c.l.b16 %v183
      %v256 = vunpack.c.l.b16 %v184
      %v257 = vunpack.c.l.b16 %v185
      %v258 = vunpack.c.l.b16 %v186
      %v259 = vunpack.c.l.b16 %v187
      %v260 = vunpack.c.l.b16 %v188
      %v261 = vunpack.c.l.b16 %v189
      %v262 = vunpack.c.l.b16 %v190
      %v263 = vunpack.c.l.b16 %v191
      %v264 = vunpack.c.l.b16 %v192
      %v265 = vunpack.c.l.b16 %v193
      %v266 = vunpack.c.l.b16 %v194
      %v267 = vunpack.c.l.b16 %v195
      %v268 = vunpack.c.l.b16 %v196
      %v269 = vunpack.c.l.b16 %v197
      %v270 = vunpack.c.l.b16 %v198
      %v271 = vunpack.c.l.b16 %v199
      %v272 = vunpack.c.l.b16 %v200
      %v273 = vunpack.c.l.b16 %v201
      %v274 = vunpack.c.l.b16 %v202
      %v275 = vunpack.c.l.b16 %v203
      %v276 = vunpack.c.l.b16 %v204
      %v277 = vunpack.c.l.b16 %v205
      %v278 = vunpack.c.l.b16 %v206
      %v279 = vpack.c.b16 %v248, %v247
      %v280 = vpack.c.b16 %v250, %v249
      %v281 = vpack.c.b16 %v252, %v251
      %v282 = vpack.c.b16 %v254, %v253
      %v283 = vpack.c.b16 %v256, %v255
      %v284 = vpack.c.b16 %v258, %v257
      %v285 = vpack.c.b16 %v260, %v259
      %v286 = vpack.c.b16 %v262, %v261
      %v287 = vpack.c.b16 %v264, %v263
      %v288 = vpack.c.b16 %v266, %v265
      %v289 = vpack.c.b16 %v268, %v267
      %v290 = vpack.c.b16 %v270, %v269
      %v291 = vpack.c.b16 %v272, %v271
      %v292 = vpack.c.b16 %v274, %v273
      %v293 = vpack.c.b16 %v276, %v275
      %v294 = vpack.c.b16 %v278, %v277
      %v299 = vunpack.c.l.b16 %v207
      %v300 = vunpack.c.l.b16 %v208
      %v301 = vunpack.c.l.b16 %v209
      %v302 = vunpack.c.l.b16 %v210
      %v303 = vpack.c.b16 %v300, %v299
      %v304 = vpack.c.b16 %v302, %v301
      %vm306 = vcmask 220160
      %v308 = vsel %vm306, %v279, 0
      %v311 = vsel %vm306, %v280, 0
      %v314 = vsel %vm306, %v281, 0
      %v317 = vsel %vm306, %v282, 0
      %v320 = vsel %vm306, %v283, 0
      %v323 = vsel %vm306, %v284, 0
      %v326 = vsel %vm306, %v285, 0
      %v329 = vsel %vm306, %v286, 0
      %v332 = vsel %vm306, %v287, 0
      %v335 = vsel %vm306, %v288, 0
      %v338 = vsel %vm306, %v289, 0
      %v341 = vsel %vm306, %v290, 0
      %v344 = vsel %vm306, %v291, 0
      %v347 = vsel %vm306, %v292, 0
      %v350 = vsel %vm306, %v293, 0
      %v353 = vsel %vm306, %v294, 0
      %vm355 = vcmask 1044480
      %vm356 = vcmask 1045504
      %v357 = vsel %vm355, 4294967295, 65535
      %v358 = vsel %vm356, %v357, 0
      %v360 = vand.u32 %v304, %v358
      %362 = vmatpush.bf16.msra.mxu0 0
      %363 = vmatpush.bf16.msra.mxu0 0
      %364 = vmatpush.bf16.msra.mxu0 0
      %365 = vmatpush.bf16.msra.mxu0 0
      %366 = vmatpush.bf16.msra.mxu0 0
      %367 = vmatpush.bf16.msra.mxu0 0
      %368 = vmatpush.bf16.msra.mxu0 %v360
      %369 = vmatpush.bf16.msra.mxu0 %v303
      %370 = vmatmul.bf16.gmra.mxu0 %v308
      %v371 = vpop.f32.mrf.mxu0
      %v372 = vadd.f32 %v213, %v371
      %v373 = vpop.f32.mrf.mxu0
      %v374 = vadd.f32 %v213, %v373
      %375 = vmatmul.bf16.gmra.mxu0 %v311
      %v376 = vpop.f32.mrf.mxu0
      %v377 = vadd.f32 %v213, %v376
      %v378 = vpop.f32.mrf.mxu0
      %v379 = vadd.f32 %v213, %v378
      %380 = vmatmul.bf16.gmra.mxu0 %v314
      %v381 = vpop.f32.mrf.mxu0
      %v382 = vadd.f32 %v213, %v381
      %v383 = vpop.f32.mrf.mxu0
      %v384 = vadd.f32 %v213, %v383
      %385 = vmatmul.bf16.gmra.mxu0 %v317
      %v386 = vpop.f32.mrf.mxu0
      %v387 = vadd.f32 %v213, %v386
      %v388 = vpop.f32.mrf.mxu0
      %v389 = vadd.f32 %v213, %v388
      %390 = vmatmul.bf16.gmra.mxu0 %v320
      %v391 = vpop.f32.mrf.mxu0
      %v392 = vadd.f32 %v213, %v391
      %v393 = vpop.f32.mrf.mxu0
      %v394 = vadd.f32 %v213, %v393
      %395 = vmatmul.bf16.gmra.mxu0 %v323
      %v396 = vpop.f32.mrf.mxu0
      %v397 = vadd.f32 %v213, %v396
      %v398 = vpop.f32.mrf.mxu0
      %v399 = vadd.f32 %v213, %v398
      %400 = vmatmul.bf16.gmra.mxu0 %v326
      %v401 = vpop.f32.mrf.mxu0
      %v402 = vadd.f32 %v213, %v401
      %v403 = vpop.f32.mrf.mxu0
      %v404 = vadd.f32 %v213, %v403
      %405 = vmatmul.bf16.gmra.mxu0 %v329
      %v406 = vpop.f32.mrf.mxu0
      %v407 = vadd.f32 %v213, %v406
      %v408 = vpop.f32.mrf.mxu0
      %v409 = vadd.f32 %v213, %v408
      %410 = vmatmul.bf16.gmra.mxu0 %v332
      %v411 = vpop.f32.mrf.mxu0
      %v412 = vadd.f32 %v213, %v411
      %v413 = vpop.f32.mrf.mxu0
      %v414 = vadd.f32 %v213, %v413
      %415 = vmatmul.bf16.gmra.mxu0 %v335
      %v416 = vpop.f32.mrf.mxu0
      %v417 = vadd.f32 %v213, %v416
      %v418 = vpop.f32.mrf.mxu0
      %v419 = vadd.f32 %v213, %v418
      %420 = vmatmul.bf16.gmra.mxu0 %v338
      %v421 = vpop.f32.mrf.mxu0
      %v422 = vadd.f32 %v213, %v421
      %v423 = vpop.f32.mrf.mxu0
      %v424 = vadd.f32 %v213, %v423
      %425 = vmatmul.bf16.gmra.mxu0 %v341
      %v426 = vpop.f32.mrf.mxu0
      %v427 = vadd.f32 %v213, %v426
      %v428 = vpop.f32.mrf.mxu0
      %v429 = vadd.f32 %v213, %v428
      %430 = vmatmul.bf16.gmra.mxu0 %v344
      %v431 = vpop.f32.mrf.mxu0
      %v432 = vadd.f32 %v213, %v431
      %v433 = vpop.f32.mrf.mxu0
      %v434 = vadd.f32 %v213, %v433
      %435 = vmatmul.bf16.gmra.mxu0 %v347
      %v436 = vpop.f32.mrf.mxu0
      %v437 = vadd.f32 %v213, %v436
      %v438 = vpop.f32.mrf.mxu0
      %v439 = vadd.f32 %v213, %v438
      %440 = vmatmul.bf16.gmra.mxu0 %v350
      %v441 = vpop.f32.mrf.mxu0
      %v442 = vadd.f32 %v213, %v441
      %v443 = vpop.f32.mrf.mxu0
      %v444 = vadd.f32 %v213, %v443
      %445 = vmatmul.bf16.gmra.mxu0 %v353
      %v446 = vpop.f32.mrf.mxu0
      %v447 = vadd.f32 %v213, %v446
      %v448 = vpop.f32.mrf.mxu0
      %v449 = vadd.f32 %v213, %v448
      %450 = vdwg.mxu0
      %v451 = vsub.f32 0.0, %v372
      %v452 = vsub.f32 0.0, %v374
      %v453 = vsub.f32 0.0, %v377
      %v454 = vsub.f32 0.0, %v379
      %v455 = vsub.f32 0.0, %v382
      %v456 = vsub.f32 0.0, %v384
      %v457 = vsub.f32 0.0, %v387
      %v458 = vsub.f32 0.0, %v389
      %v459 = vsub.f32 0.0, %v392
      %v460 = vsub.f32 0.0, %v394
      %v461 = vsub.f32 0.0, %v397
      %v462 = vsub.f32 0.0, %v399
      %v463 = vsub.f32 0.0, %v402
      %v464 = vsub.f32 0.0, %v404
      %v465 = vsub.f32 0.0, %v407
      %v466 = vsub.f32 0.0, %v409
      %v467 = vsub.f32 0.0, %v412
      %v468 = vsub.f32 0.0, %v414
      %v469 = vsub.f32 0.0, %v417
      %v470 = vsub.f32 0.0, %v419
      %v471 = vsub.f32 0.0, %v422
      %v472 = vsub.f32 0.0, %v424
      %v473 = vsub.f32 0.0, %v427
      %v474 = vsub.f32 0.0, %v429
      %v475 = vsub.f32 0.0, %v432
      %v476 = vsub.f32 0.0, %v434
      %v477 = vsub.f32 0.0, %v437
      %v478 = vsub.f32 0.0, %v439
      %v479 = vsub.f32 0.0, %v442
      %v480 = vsub.f32 0.0, %v444
      %v481 = vsub.f32 0.0, %v447
      %v482 = vsub.f32 0.0, %v449
      %v483 = vmul.f32 %v451, 1.442695
      %v484 = vpow.pop %v483
      %v485 = vmul.f32 %v452, 1.442695
      %v486 = vpow.pop %v485
      %v487 = vmul.f32 %v453, 1.442695
      %v488 = vpow.pop %v487
      %v489 = vmul.f32 %v454, 1.442695
      %v490 = vpow.pop %v489
      %v491 = vmul.f32 %v455, 1.442695
      %v492 = vpow.pop %v491
      %v493 = vmul.f32 %v456, 1.442695
      %v494 = vpow.pop %v493
      %v495 = vmul.f32 %v457, 1.442695
      %v496 = vpow.pop %v495
      %v497 = vmul.f32 %v458, 1.442695
      %v498 = vpow.pop %v497
      %v499 = vmul.f32 %v459, 1.442695
      %v500 = vpow.pop %v499
      %v501 = vmul.f32 %v460, 1.442695
      %v502 = vpow.pop %v501
      %v503 = vmul.f32 %v461, 1.442695
      %v504 = vpow.pop %v503
      %v505 = vmul.f32 %v462, 1.442695
      %v506 = vpow.pop %v505
      %v507 = vmul.f32 %v463, 1.442695
      %v508 = vpow.pop %v507
      %v509 = vmul.f32 %v464, 1.442695
      %v510 = vpow.pop %v509
      %v511 = vmul.f32 %v465, 1.442695
      %v512 = vpow.pop %v511
      %v513 = vmul.f32 %v466, 1.442695
      %v514 = vpow.pop %v513
      %v515 = vmul.f32 %v467, 1.442695
      %v516 = vpow.pop %v515
      %v517 = vmul.f32 %v468, 1.442695
      %v518 = vpow.pop %v517
      %v519 = vmul.f32 %v469, 1.442695
      %v520 = vpow.pop %v519
      %v521 = vmul.f32 %v470, 1.442695
      %v522 = vpow.pop %v521
      %v523 = vmul.f32 %v471, 1.442695
      %v524 = vpow.pop %v523
      %v525 = vmul.f32 %v472, 1.442695
      %v526 = vpow.pop %v525
      %v527 = vmul.f32 %v473, 1.442695
      %v528 = vpow.pop %v527
      %v529 = vmul.f32 %v474, 1.442695
      %v530 = vpow.pop %v529
      %v531 = vmul.f32 %v475, 1.442695
      %v532 = vpow.pop %v531
      %v533 = vmul.f32 %v476, 1.442695
      %v534 = vpow.pop %v533
      %v535 = vmul.f32 %v477, 1.442695
      %v536 = vpow.pop %v535
      %v537 = vmul.f32 %v478, 1.442695
      %v538 = vpow.pop %v537
      %v539 = vmul.f32 %v479, 1.442695
      %v540 = vpow.pop %v539
      %v541 = vmul.f32 %v480, 1.442695
      %v542 = vpow.pop %v541
      %v543 = vmul.f32 %v481, 1.442695
      %v544 = vpow.pop %v543
      %v545 = vmul.f32 %v482, 1.442695
      %v546 = vpow.pop %v545
      %v547 = vadd.f32 %v484, 1.0
      %v548 = vadd.f32 %v486, 1.0
      %v549 = vadd.f32 %v488, 1.0
      %v550 = vadd.f32 %v490, 1.0
      %v551 = vadd.f32 %v492, 1.0
      %v552 = vadd.f32 %v494, 1.0
      %v553 = vadd.f32 %v496, 1.0
      %v554 = vadd.f32 %v498, 1.0
      %v555 = vadd.f32 %v500, 1.0
      %v556 = vadd.f32 %v502, 1.0
      %v557 = vadd.f32 %v504, 1.0
      %v558 = vadd.f32 %v506, 1.0
      %v559 = vadd.f32 %v508, 1.0
      %v560 = vadd.f32 %v510, 1.0
      %v561 = vadd.f32 %v512, 1.0
      %v562 = vadd.f32 %v514, 1.0
      %v563 = vadd.f32 %v516, 1.0
      %v564 = vadd.f32 %v518, 1.0
      %v565 = vadd.f32 %v520, 1.0
      %v566 = vadd.f32 %v522, 1.0
      %v567 = vadd.f32 %v524, 1.0
      %v568 = vadd.f32 %v526, 1.0
      %v569 = vadd.f32 %v528, 1.0
      %v570 = vadd.f32 %v530, 1.0
      %v571 = vadd.f32 %v532, 1.0
      %v572 = vadd.f32 %v534, 1.0
      %v573 = vadd.f32 %v536, 1.0
      %v574 = vadd.f32 %v538, 1.0
      %v575 = vadd.f32 %v540, 1.0
      %v576 = vadd.f32 %v542, 1.0
      %v577 = vadd.f32 %v544, 1.0
      %v578 = vadd.f32 %v546, 1.0
      %v579 = vrcp.pop %v547
      %v580 = vrcp.pop %v548
      %v581 = vrcp.pop %v549
      %v582 = vrcp.pop %v550
      %v583 = vrcp.pop %v551
      %v584 = vrcp.pop %v552
      %v585 = vrcp.pop %v553
      %v586 = vrcp.pop %v554
      %v587 = vrcp.pop %v555
      %v588 = vrcp.pop %v556
      %v589 = vrcp.pop %v557
      %v590 = vrcp.pop %v558
      %v591 = vrcp.pop %v559
      %v592 = vrcp.pop %v560
      %v593 = vrcp.pop %v561
      %v594 = vrcp.pop %v562
      %v595 = vrcp.pop %v563
      %v596 = vrcp.pop %v564
      %v597 = vrcp.pop %v565
      %v598 = vrcp.pop %v566
      %v599 = vrcp.pop %v567
      %v600 = vrcp.pop %v568
      %v601 = vrcp.pop %v569
      %v602 = vrcp.pop %v570
      %v603 = vrcp.pop %v571
      %v604 = vrcp.pop %v572
      %v605 = vrcp.pop %v573
      %v606 = vrcp.pop %v574
      %v607 = vrcp.pop %v575
      %v608 = vrcp.pop %v576
      %v609 = vrcp.pop %v577
      %v610 = vrcp.pop %v578
      %v611 = vmul.f32 %v372, %v579
      %v612 = vmul.f32 %v374, %v580
      %v613 = vmul.f32 %v377, %v581
      %v614 = vmul.f32 %v379, %v582
      %v615 = vmul.f32 %v382, %v583
      %v616 = vmul.f32 %v384, %v584
      %v617 = vmul.f32 %v387, %v585
      %v618 = vmul.f32 %v389, %v586
      %v619 = vmul.f32 %v392, %v587
      %v620 = vmul.f32 %v394, %v588
      %v621 = vmul.f32 %v397, %v589
      %v622 = vmul.f32 %v399, %v590
      %v623 = vmul.f32 %v402, %v591
      %v624 = vmul.f32 %v404, %v592
      %v625 = vmul.f32 %v407, %v593
      %v626 = vmul.f32 %v409, %v594
      %v627 = vmul.f32 %v412, %v595
      %v628 = vmul.f32 %v414, %v596
      %v629 = vmul.f32 %v417, %v597
      %v630 = vmul.f32 %v419, %v598
      %v631 = vmul.f32 %v422, %v599
      %v632 = vmul.f32 %v424, %v600
      %v633 = vmul.f32 %v427, %v601
      %v634 = vmul.f32 %v429, %v602
      %v635 = vmul.f32 %v432, %v603
      %v636 = vmul.f32 %v434, %v604
      %v637 = vmul.f32 %v437, %v605
      %v638 = vmul.f32 %v439, %v606
      %v639 = vmul.f32 %v442, %v607
      %v640 = vmul.f32 %v444, %v608
      %v641 = vmul.f32 %v447, %v609
      %v642 = vmul.f32 %v449, %v610
      %v643 = vpack.c.bf16 %v611, %v611
      %v644 = vpack.c.bf16 %v612, %v612
      %v645 = vpack.c.bf16 %v613, %v613
      %v646 = vpack.c.bf16 %v614, %v614
      %v647 = vpack.c.bf16 %v615, %v615
      %v648 = vpack.c.bf16 %v616, %v616
      %v649 = vpack.c.bf16 %v617, %v617
      %v650 = vpack.c.bf16 %v618, %v618
      %v651 = vpack.c.bf16 %v619, %v619
      %v652 = vpack.c.bf16 %v620, %v620
      %v653 = vpack.c.bf16 %v621, %v621
      %v654 = vpack.c.bf16 %v622, %v622
      %v655 = vpack.c.bf16 %v623, %v623
      %v656 = vpack.c.bf16 %v624, %v624
      %v657 = vpack.c.bf16 %v625, %v625
      %v658 = vpack.c.bf16 %v626, %v626
      %v659 = vpack.c.bf16 %v627, %v627
      %v660 = vpack.c.bf16 %v628, %v628
      %v661 = vpack.c.bf16 %v629, %v629
      %v662 = vpack.c.bf16 %v630, %v630
      %v663 = vpack.c.bf16 %v631, %v631
      %v664 = vpack.c.bf16 %v632, %v632
      %v665 = vpack.c.bf16 %v633, %v633
      %v666 = vpack.c.bf16 %v634, %v634
      %v667 = vpack.c.bf16 %v635, %v635
      %v668 = vpack.c.bf16 %v636, %v636
      %v669 = vpack.c.bf16 %v637, %v637
      %v670 = vpack.c.bf16 %v638, %v638
      %v671 = vpack.c.bf16 %v639, %v639
      %v672 = vpack.c.bf16 %v640, %v640
      %v673 = vpack.c.bf16 %v641, %v641
      %v674 = vpack.c.bf16 %v642, %v642
      %675 = vst [vmem:[%s172] sm:$0xf] %v643
      %676 = vst [vmem:[%s172 + $0x4] sm:$0xf] %v644
      %677 = vst [vmem:[%s172 + $0x8] sm:$0xf] %v645
      %678 = vst [vmem:[%s172 + $0xc] sm:$0xf] %v646
      %679 = vst [vmem:[%s172 + $0x10] sm:$0xf] %v647
      %680 = vst [vmem:[%s172 + $0x14] sm:$0xf] %v648
      %681 = vst [vmem:[%s172 + $0x18] sm:$0xf] %v649
      %682 = vst [vmem:[%s172 + $0x1c] sm:$0xf] %v650
      %683 = vst [vmem:[%s172 + $0x20] sm:$0xf] %v651
      %684 = vst [vmem:[%s172 + $0x24] sm:$0xf] %v652
      %685 = vst [vmem:[%s172 + $0x28] sm:$0xf] %v653
      %686 = vst [vmem:[%s172 + $0x2c] sm:$0xf] %v654
      %687 = vst [vmem:[%s172 + $0x30] sm:$0xf] %v655
      %688 = vst [vmem:[%s172 + $0x34] sm:$0xf] %v656
      %689 = vst [vmem:[%s172 + $0x38] sm:$0xf] %v657
      %690 = vst [vmem:[%s172 + $0x3c] sm:$0xf] %v658
      %691 = vst [vmem:[%s172 + $0x40] sm:$0xf] %v659
      %692 = vst [vmem:[%s172 + $0x44] sm:$0xf] %v660
      %693 = vst [vmem:[%s172 + $0x48] sm:$0xf] %v661
      %694 = vst [vmem:[%s172 + $0x4c] sm:$0xf] %v662
      %695 = vst [vmem:[%s172 + $0x50] sm:$0xf] %v663
      %696 = vst [vmem:[%s172 + $0x54] sm:$0xf] %v664
      %697 = vst [vmem:[%s172 + $0x58] sm:$0xf] %v665
      %698 = vst [vmem:[%s172 + $0x5c] sm:$0xf] %v666
      %699 = vst [vmem:[%s172 + $0x60] sm:$0xf] %v667
      %700 = vst [vmem:[%s172 + $0x64] sm:$0xf] %v668
      %701 = vst [vmem:[%s172 + $0x68] sm:$0xf] %v669
      %702 = vst [vmem:[%s172 + $0x6c] sm:$0xf] %v670
      %703 = vst [vmem:[%s172 + $0x70] sm:$0xf] %v671
      %704 = vst [vmem:[%s172 + $0x74] sm:$0xf] %v672
      %705 = vst [vmem:[%s172 + $0x78] sm:$0xf] %v673
      %706 = vst [vmem:[%s172 + $0x7c] sm:$0xf] %v674
      %s707 = smul.u32 32, %s14
      %p708 = scmp.lt.s32.totalorder %s707, 63
      %s709 = scalar_select %p708, %s707, 63
      %s710 = smul.addr %s709, 4
      %s711 = scalar_lea.vmem %s3, %s710
      // Predicated region
      $region33: #{custom_efficientnet_forward.2} parent=31 // pred_check
        %p712 = pneg %p100
      $region34: #{custom_efficientnet_forward.2} parent=31 // pred_check_branch
        %714 = sbr.rel (%p712) target = $region36
      $region35: #{custom_efficientnet_forward.2} parent=31 // pred_region
        %s715 = smul.u32 32, %s14
      $region36: #{custom_efficientnet_forward.2} parent=31 // pred_fallthru
        _
    $region32: #{custom_efficientnet_forward.2} parent=5 // pred_fallthru
      _
    %p716 = scmp.le.s32.totalorder 2, %s9
    // Predicated region
    $region37: #{custom_efficientnet_forward.2} parent=5 // pred_check
      %p717 = pneg %p716
    $region38: #{custom_efficientnet_forward.2} parent=5 // pred_check_branch
      %719 = sbr.rel (%p717) target = $region40
    $region39: #{custom_efficientnet_forward.2} parent=5 // pred_region
      %s720 = ssub.s32 %s9, 2
      // Predicated region
      $region41: #{custom_efficientnet_forward.2} parent=39 // pred_check
        %p721 = pneg %p106
      $region42: #{custom_efficientnet_forward.2} parent=39 // pred_check_branch
        %723 = sbr.rel (%p721) target = $region44
      $region43: #{custom_efficientnet_forward.2} parent=39 // pred_region
        %s724 = smul.u32 32, %s15
        %p725 = scmp.lt.s32.totalorder %s724, 63
        %s726 = scalar_select %p725, %s724, 63
        %s727 = smul.addr %s726, 4
        %s728 = scalar_lea.vmem %s3, %s727
      $region44: #{custom_efficientnet_forward.2} parent=39 // pred_fallthru
        _
    $region40: #{custom_efficientnet_forward.2} parent=5 // pred_fallthru
      _
  $region6: #{custom_efficientnet_forward.2} parent=0 // loop_footer
    %s13 = sadd.s32 1, %s9
  $region7: #{custom_efficientnet_forward.2} parent=0 // loop_footer_branch
    %8 = sbr.rel target = $region3
  $region8: #{custom_efficientnet_forward.2} parent=0 // loop_exit
    _

// kernel: custom_efficientnet_forward.3
$region0: #{custom_efficientnet_forward.3}
  #allocation0 [shape = 'u32[]', space=smem, size = 0x4, offset = 0x4, fixed_abs, tag = 'smem constant byte address 0x4 - core index']
  #allocation1 [shape = 'u32[72,128]{1,0:T(1,128)}', space=vmem, size = 0x9000, scoped, tag = 'internal scratch']
  #allocation2 [shape = 'f32[1,18,18,128]{3,2,1,0:T(8,128)}', space=vmem, size = 0x36000, scoped, tag = 'scratch operand']
  %s0 = inlined_call_operand.vmem [shape: bf16[2,16,16,128], index: 0, kind: input, shape index: {}]
  %s1 = inlined_call_operand.vmem [shape: bf16[128,128], index: 1, kind: input, shape index: {}]
  %s2 = inlined_call_operand.vmem [shape: f32[1,128], index: 2, kind: input, shape index: {}]
  %s3 = inlined_call_operand.vmem [shape: f32[9,128], index: 3, kind: input, shape index: {}]
  %s4 = inlined_call_operand.vmem [shape: f32[1,128], index: 4, kind: input, shape index: {}]
  %s5 = inlined_call_operand.vmem [shape: f32[128,8], index: 5, kind: input, shape index: {}]
  %s6 = inlined_call_operand.vmem [shape: f32[1,8], index: 6, kind: input, shape index: {}]
  %s7 = inlined_call_operand.vmem [shape: f32[8,128], index: 7, kind: input, shape index: {}]
  %s8 = inlined_call_operand.vmem [shape: f32[1,128], index: 8, kind: input, shape index: {}]
  %s9 = inlined_call_operand.vmem [shape: bf16[128,128], index: 9, kind: input, shape index: {}]
  %s10 = inlined_call_operand.vmem [shape: f32[1,128], index: 10, kind: input, shape index: {}]
  %s11 = inlined_call_operand.vmem [shape: bf16[128,128], index: 11, kind: input, shape index: {}]
  %s12 = inlined_call_operand.vmem [shape: f32[1,128], index: 12, kind: input, shape index: {}]
  %s13 = inlined_call_operand.vmem [shape: f32[128,6], index: 13, kind: input, shape index: {}]
  %s14 = inlined_call_operand.vmem [shape: f32[1,6], index: 14, kind: input, shape index: {}]
  %s15 = inlined_call_operand.hbm [shape: f32[2,1,6], index: 15, kind: output, shape index: {}]
  %s16 = sld [smem:[#allocation0]]
  $region93: #{custom_efficientnet_forward.3} parent=0
    _
  %s18 = ssub.s32 1, %s16
  %s19 = scalar_select 0, %s18, %s16
  $region1: #{custom_efficientnet_forward.3} parent=0
    #allocation3 [shape = 'u8[1024]{0}', space=vmem, size = 0x400, scoped, tag = 'output window, operand 0']
    #allocation4 [shape = 's32[2]{0}', space=sflag, size = 0x8, scoped, tag = 'scoped memory for custom_efficientnet_forward.3']
    %20 = vsyncpa [#allocation4], 0
    %s21 = scalar_lea.sflag [#allocation4], 1
    %22 = vsyncpa %s21, 0
    loop: start=0, step=1, limit=4
    $region2: #{custom_efficientnet_forward.3} parent=1 // loop_pre_header
      _
    $region3: #{custom_efficientnet_forward.3} parent=1 // loop_header
      %s24 = sphi 0, %s28
      %p25 = scmp.ge.s32.totalorder %s24, 4
      %s34 = sphi 0, %s36
      %s37 = sphi 0, %s34
      %s38 = sphi 0, %s37
      %s54 = sphi 0, %s38
      %s58 = sphi 0, %s58
      %s60 = sphi 0, %s58
      %s61 = sphi 0, %s60
      %s75 = sphi 0, %s61
      %s79 = sphi 0, %s79
      %s81 = sphi 0, %s79
      %s82 = sphi 0, %s81
      %s96 = sphi 0, %s82
      %s100 = sphi 0, %s100
      %s102 = sphi 0, %s100
      %s103 = sphi 0, %s102
      %s117 = sphi 0, %s103
      %s121 = sphi 0, %s121
      %s123 = sphi 0, %s121
      %s124 = sphi 0, %s123
      %s138 = sphi 0, %s124
      %s142 = sphi 0, %s142
      %s144 = sphi 0, %s142
      %s145 = sphi 0, %s144
      %s159 = sphi 0, %s145
      %s163 = sphi 0, %s163
      %s165 = sphi 0, %s163
      %s166 = sphi 0, %s165
      %s180 = sphi 0, %s166
      %s184 = sphi 0, %s184
      %s186 = sphi 0, %s184
      %s187 = sphi 0, %s186
      %s201 = sphi 0, %s187
      %s205 = sphi 0, %s205
      %s207 = sphi 0, %s205
      %s208 = sphi 0, %s207
      %s222 = sphi 0, %s208
      %s226 = sphi 0, %s226
      %s228 = sphi 0, %s226
      %s229 = sphi 0, %s228
      %s243 = sphi 0, %s229
      %s247 = sphi 0, %s247
      %s249 = sphi 0, %s247
      %s250 = sphi 0, %s249
      %s264 = sphi 0, %s250
      %s268 = sphi 0, %s268
      %s270 = sphi 0, %s268
      %s271 = sphi 0, %s270
      %s285 = sphi 0, %s271
      %s289 = sphi 0, %s289
      %s291 = sphi 0, %s289
      %s292 = sphi 0, %s291
      %s306 = sphi 0, %s292
      %s310 = sphi 0, %s310
      %s312 = sphi 0, %s310
      %s313 = sphi 0, %s312
      %s327 = sphi 0, %s313
      %s331 = sphi 0, %s331
      %s333 = sphi 0, %s331
      %s334 = sphi 0, %s333
      %s348 = sphi 0, %s334
      %s354 = sphi 0, %s356
      %s357 = sphi 0, %s354
      %s358 = sphi 0, %s357
      %s374 = sphi 0, %s358
    $region4: #{custom_efficientnet_forward.3} parent=1 // loop_header_branch
      %27 = sbr.rel (%p25) target = $region8
    $region5: #{custom_efficientnet_forward.3} parent=1 // loop_body
      %s29 = ssub.s32 %s24, 1
      %s30 = ssub.s32 %s24, 2
      %s31 = sadd.s32 %s24, 1
      %s32 = ssub.s32 %s24, %s31
      %p33 = scmp.eq.s32.totalorder %s32, 0
      %s35 = sadd.s32 %s34, 1
      %s36 = scalar_select %p33, %s34, %s35
      %p39 = pneg %p33
      %p40 = scmp.eq.s32.totalorder %s24, 1
      %p41 = por %p39, %p40
      %p42 = scmp.ne.s32.totalorder %s34, %s37
      %p43 = scmp.eq.s32.totalorder %s24, 0
      %p44 = por %p42, %p43
      %p45 = scmp.ne.s32.totalorder %s34, %s37
      %p46 = scmp.eq.s32.totalorder %s29, 1
      %p47 = por %p45, %p46
      %p48 = scmp.ne.s32.totalorder %s37, %s38
      %p49 = scmp.eq.s32.totalorder %s29, 0
      %p50 = por %p48, %p49
      %p51 = scmp.ne.s32.totalorder %s37, %s38
      %p52 = scmp.eq.s32.totalorder %s30, 1
      %p53 = por %p51, %p52
      %p55 = scmp.ne.s32.totalorder %s38, %s54
      %p56 = scmp.eq.s32.totalorder %s30, 0
      %p57 = por %p55, %p56
      %s59 = sadd.s32 %s58, 1
      %p62 = scmp.eq.s32.totalorder %s24, 1
      %p63 = scmp.ne.s32.totalorder %s58, %s60
      %p64 = scmp.eq.s32.totalorder %s24, 0
      %p65 = por %p63, %p64
      %p66 = scmp.ne.s32.totalorder %s58, %s60
      %p67 = scmp.eq.s32.totalorder %s29, 1
      %p68 = por %p66, %p67
      %p69 = scmp.ne.s32.totalorder %s60, %s61
      %p70 = scmp.eq.s32.totalorder %s29, 0
      %p71 = por %p69, %p70
      %p72 = scmp.ne.s32.totalorder %s60, %s61
      %p73 = scmp.eq.s32.totalorder %s30, 1
      %p74 = por %p72, %p73
      %p76 = scmp.ne.s32.totalorder %s61, %s75
      %p77 = scmp.eq.s32.totalorder %s30, 0
      %p78 = por %p76, %p77
      %s80 = sadd.s32 %s79, 1
      %p83 = scmp.eq.s32.totalorder %s24, 1
      %p84 = scmp.ne.s32.totalorder %s79, %s81
      %p85 = scmp.eq.s32.totalorder %s24, 0
      %p86 = por %p84, %p85
      %p87 = scmp.ne.s32.totalorder %s79, %s81
      %p88 = scmp.eq.s32.totalorder %s29, 1
      %p89 = por %p87, %p88
      %p90 = scmp.ne.s32.totalorder %s81, %s82
      %p91 = scmp.eq.s32.totalorder %s29, 0
      %p92 = por %p90, %p91
      %p93 = scmp.ne.s32.totalorder %s81, %s82
      %p94 = scmp.eq.s32.totalorder %s30, 1
      %p95 = por %p93, %p94
      %p97 = scmp.ne.s32.totalorder %s82, %s96
      %p98 = scmp.eq.s32.totalorder %s30, 0
      %p99 = por %p97, %p98
      %s101 = sadd.s32 %s100, 1
      %p104 = scmp.eq.s32.totalorder %s24, 1
      %p105 = scmp.ne.s32.totalorder %s100, %s102
      %p106 = scmp.eq.s32.totalorder %s24, 0
      %p107 = por %p105, %p106
      %p108 = scmp.ne.s32.totalorder %s100, %s102
      %p109 = scmp.eq.s32.totalorder %s29, 1
      %p110 = por %p108, %p109
      %p111 = scmp.ne.s32.totalorder %s102, %s103
      %p112 = scmp.eq.s32.totalorder %s29, 0
      %p113 = por %p111, %p112
      %p114 = scmp.ne.s32.totalorder %s102, %s103
      %p115 = scmp.eq.s32.totalorder %s30, 1
      %p116 = por %p114, %p115
      %p118 = scmp.ne.s32.totalorder %s103, %s117
      %p119 = scmp.eq.s32.totalorder %s30, 0
      %p120 = por %p118, %p119
      %s122 = sadd.s32 %s121, 1
      %p125 = scmp.eq.s32.totalorder %s24, 1
      %p126 = scmp.ne.s32.totalorder %s121, %s123
      %p127 = scmp.eq.s32.totalorder %s24, 0
      %p128 = por %p126, %p127
      %p129 = scmp.ne.s32.totalorder %s121, %s123
      %p130 = scmp.eq.s32.totalorder %s29, 1
      %p131 = por %p129, %p130
      %p132 = scmp.ne.s32.totalorder %s123, %s124
      %p133 = scmp.eq.s32.totalorder %s29, 0
      %p134 = por %p132, %p133
      %p135 = scmp.ne.s32.totalorder %s123, %s124
      %p136 = scmp.eq.s32.totalorder %s30, 1
      %p137 = por %p135, %p136
      %p139 = scmp.ne.s32.totalorder %s124, %s138
      %p140 = scmp.eq.s32.totalorder %s30, 0
      %p141 = por %p139, %p140
      %s143 = sadd.s32 %s142, 1
      %p146 = scmp.eq.s32.totalorder %s24, 1
      %p147 = scmp.ne.s32.totalorder %s142, %s144
      %p148 = scmp.eq.s32.totalorder %s24, 0
      %p149 = por %p147, %p148
      %p150 = scmp.ne.s32.totalorder %s142, %s144
      %p151 = scmp.eq.s32.totalorder %s29, 1
      %p152 = por %p150, %p151
      %p153 = scmp.ne.s32.totalorder %s144, %s145
      %p154 = scmp.eq.s32.totalorder %s29, 0
      %p155 = por %p153, %p154
      %p156 = scmp.ne.s32.totalorder %s144, %s145
      %p157 = scmp.eq.s32.totalorder %s30, 1
      %p158 = por %p156, %p157
      %p160 = scmp.ne.s32.totalorder %s145, %s159
      %p161 = scmp.eq.s32.totalorder %s30, 0
      %p162 = por %p160, %p161
      %s164 = sadd.s32 %s163, 1
      %p167 = scmp.eq.s32.totalorder %s24, 1
      %p168 = scmp.ne.s32.totalorder %s163, %s165
      %p169 = scmp.eq.s32.totalorder %s24, 0
      %p170 = por %p168, %p169
      %p171 = scmp.ne.s32.totalorder %s163, %s165
      %p172 = scmp.eq.s32.totalorder %s29, 1
      %p173 = por %p171, %p172
      %p174 = scmp.ne.s32.totalorder %s165, %s166
      %p175 = scmp.eq.s32.totalorder %s29, 0
      %p176 = por %p174, %p175
      %p177 = scmp.ne.s32.totalorder %s165, %s166
      %p178 = scmp.eq.s32.totalorder %s30, 1
      %p179 = por %p177, %p178
      %p181 = scmp.ne.s32.totalorder %s166, %s180
      %p182 = scmp.eq.s32.totalorder %s30, 0
      %p183 = por %p181, %p182
      %s185 = sadd.s32 %s184, 1
      %p188 = scmp.eq.s32.totalorder %s24, 1
      %p189 = scmp.ne.s32.totalorder %s184, %s186
      %p190 = scmp.eq.s32.totalorder %s24, 0
      %p191 = por %p189, %p190
      %p192 = scmp.ne.s32.totalorder %s184, %s186
      %p193 = scmp.eq.s32.totalorder %s29, 1
      %p194 = por %p192, %p193
      %p195 = scmp.ne.s32.totalorder %s186, %s187
      %p196 = scmp.eq.s32.totalorder %s29, 0
      %p197 = por %p195, %p196
      %p198 = scmp.ne.s32.totalorder %s186, %s187
      %p199 = scmp.eq.s32.totalorder %s30, 1
      %p200 = por %p198, %p199
      %p202 = scmp.ne.s32.totalorder %s187, %s201
      %p203 = scmp.eq.s32.totalorder %s30, 0
      %p204 = por %p202, %p203
      %s206 = sadd.s32 %s205, 1
      %p209 = scmp.eq.s32.totalorder %s24, 1
      %p210 = scmp.ne.s32.totalorder %s205, %s207
      %p211 = scmp.eq.s32.totalorder %s24, 0
      %p212 = por %p210, %p211
      %p213 = scmp.ne.s32.totalorder %s205, %s207
      %p214 = scmp.eq.s32.totalorder %s29, 1
      %p215 = por %p213, %p214
      %p216 = scmp.ne.s32.totalorder %s207, %s208
      %p217 = scmp.eq.s32.totalorder %s29, 0
      %p218 = por %p216, %p217
      %p219 = scmp.ne.s32.totalorder %s207, %s208
      %p220 = scmp.eq.s32.totalorder %s30, 1
      %p221 = por %p219, %p220
      %p223 = scmp.ne.s32.totalorder %s208, %s222
      %p224 = scmp.eq.s32.totalorder %s30, 0
      %p225 = por %p223, %p224
      %s227 = sadd.s32 %s226, 1
      %p230 = scmp.eq.s32.totalorder %s24, 1
      %p231 = scmp.ne.s32.totalorder %s226, %s228
      %p232 = scmp.eq.s32.totalorder %s24, 0
      %p233 = por %p231, %p232
      %p234 = scmp.ne.s32.totalorder %s226, %s228
      %p235 = scmp.eq.s32.totalorder %s29, 1
      %p236 = por %p234, %p235
      %p237 = scmp.ne.s32.totalorder %s228, %s229
      %p238 = scmp.eq.s32.totalorder %s29, 0
      %p239 = por %p237, %p238
      %p240 = scmp.ne.s32.totalorder %s228, %s229
      %p241 = scmp.eq.s32.totalorder %s30, 1
      %p242 = por %p240, %p241
      %p244 = scmp.ne.s32.totalorder %s229, %s243
      %p245 = scmp.eq.s32.totalorder %s30, 0
      %p246 = por %p244, %p245
      %s248 = sadd.s32 %s247, 1
      %p251 = scmp.eq.s32.totalorder %s24, 1
      %p252 = scmp.ne.s32.totalorder %s247, %s249
      %p253 = scmp.eq.s32.totalorder %s24, 0
      %p254 = por %p252, %p253
      %p255 = scmp.ne.s32.totalorder %s247, %s249
      %p256 = scmp.eq.s32.totalorder %s29, 1
      %p257 = por %p255, %p256
      %p258 = scmp.ne.s32.totalorder %s249, %s250
      %p259 = scmp.eq.s32.totalorder %s29, 0
      %p260 = por %p258, %p259
      %p261 = scmp.ne.s32.totalorder %s249, %s250
      %p262 = scmp.eq.s32.totalorder %s30, 1
      %p263 = por %p261, %p262
      %p265 = scmp.ne.s32.totalorder %s250, %s264
      %p266 = scmp.eq.s32.totalorder %s30, 0
      %p267 = por %p265, %p266
      %s269 = sadd.s32 %s268, 1
      %p272 = scmp.eq.s32.totalorder %s24, 1
      %p273 = scmp.ne.s32.totalorder %s268, %s270
      %p274 = scmp.eq.s32.totalorder %s24, 0
      %p275 = por %p273, %p274
      %p276 = scmp.ne.s32.totalorder %s268, %s270
      %p277 = scmp.eq.s32.totalorder %s29, 1
      %p278 = por %p276, %p277
      %p279 = scmp.ne.s32.totalorder %s270, %s271
      %p280 = scmp.eq.s32.totalorder %s29, 0
      %p281 = por %p279, %p280
      %p282 = scmp.ne.s32.totalorder %s270, %s271
      %p283 = scmp.eq.s32.totalorder %s30, 1
      %p284 = por %p282, %p283
      %p286 = scmp.ne.s32.totalorder %s271, %s285
      %p287 = scmp.eq.s32.totalorder %s30, 0
      %p288 = por %p286, %p287
      %s290 = sadd.s32 %s289, 1
      %p293 = scmp.eq.s32.totalorder %s24, 1
      %p294 = scmp.ne.s32.totalorder %s289, %s291
      %p295 = scmp.eq.s32.totalorder %s24, 0
      %p296 = por %p294, %p295
      %p297 = scmp.ne.s32.totalorder %s289, %s291
      %p298 = scmp.eq.s32.totalorder %s29, 1
      %p299 = por %p297, %p298
      %p300 = scmp.ne.s32.totalorder %s291, %s292
      %p301 = scmp.eq.s32.totalorder %s29, 0
      %p302 = por %p300, %p301
      %p303 = scmp.ne.s32.totalorder %s291, %s292
      %p304 = scmp.eq.s32.totalorder %s30, 1
      %p305 = por %p303, %p304
      %p307 = scmp.ne.s32.totalorder %s292, %s306
      %p308 = scmp.eq.s32.totalorder %s30, 0
      %p309 = por %p307, %p308
      %s311 = sadd.s32 %s310, 1
      %p314 = scmp.eq.s32.totalorder %s24, 1
      %p315 = scmp.ne.s32.totalorder %s310, %s312
      %p316 = scmp.eq.s32.totalorder %s24, 0
      %p317 = por %p315, %p316
      %p318 = scmp.ne.s32.totalorder %s310, %s312
      %p319 = scmp.eq.s32.totalorder %s29, 1
      %p320 = por %p318, %p319
      %p321 = scmp.ne.s32.totalorder %s312, %s313
      %p322 = scmp.eq.s32.totalorder %s29, 0
      %p323 = por %p321, %p322
      %p324 = scmp.ne.s32.totalorder %s312, %s313
      %p325 = scmp.eq.s32.totalorder %s30, 1
      %p326 = por %p324, %p325
      %p328 = scmp.ne.s32.totalorder %s313, %s327
      %p329 = scmp.eq.s32.totalorder %s30, 0
      %p330 = por %p328, %p329
      %s332 = sadd.s32 %s331, 1
      %p335 = scmp.eq.s32.totalorder %s24, 1
      %p336 = scmp.ne.s32.totalorder %s331, %s333
      %p337 = scmp.eq.s32.totalorder %s24, 0
      %p338 = por %p336, %p337
      %p339 = scmp.ne.s32.totalorder %s331, %s333
      %p340 = scmp.eq.s32.totalorder %s29, 1
      %p341 = por %p339, %p340
      %p342 = scmp.ne.s32.totalorder %s333, %s334
      %p343 = scmp.eq.s32.totalorder %s29, 0
      %p344 = por %p342, %p343
      %p345 = scmp.ne.s32.totalorder %s333, %s334
      %p346 = scmp.eq.s32.totalorder %s30, 1
      %p347 = por %p345, %p346
      %p349 = scmp.ne.s32.totalorder %s334, %s348
      %p350 = scmp.eq.s32.totalorder %s30, 0
      %p351 = por %p349, %p350
      %s352 = ssub.s32 %s24, %s31
      %p353 = scmp.eq.s32.totalorder %s352, 0
      %s355 = sadd.s32 %s354, 1
      %s356 = scalar_select %p353, %s354, %s355
      %p359 = pneg %p353
      %p360 = scmp.eq.s32.totalorder %s24, 1
      %p361 = por %p359, %p360
      %p362 = scmp.ne.s32.totalorder %s354, %s357
      %p363 = scmp.eq.s32.totalorder %s24, 0
      %p364 = por %p362, %p363
      %p365 = scmp.ne.s32.totalorder %s354, %s357
      %p366 = scmp.eq.s32.totalorder %s29, 1
      %p367 = por %p365, %p366
      %p368 = scmp.ne.s32.totalorder %s357, %s358
      %p369 = scmp.eq.s32.totalorder %s29, 0
      %p370 = por %p368, %p369
      %p371 = scmp.ne.s32.totalorder %s357, %s358
      %p372 = scmp.eq.s32.totalorder %s30, 1
      %p373 = por %p371, %p372
      %p375 = scmp.ne.s32.totalorder %s358, %s374
      %p376 = scmp.eq.s32.totalorder %s30, 0
      %p377 = por %p375, %p376
      %p378 = scmp.le.s32.totalorder 1, %s24
      %p379 = scmp.lt.s32.totalorder %s24, 3
      %p380 = pnand %p378, %p379
      %p381 = pneg %p380
      // Predicated region
      $region9: #{custom_efficientnet_forward.3} parent=5 // pred_check
        _
      $region10: #{custom_efficientnet_forward.3} parent=5 // pred_check_branch
        %383 = sbr.rel (%p380) target = $region12
      $region11: #{custom_efficientnet_forward.3} parent=5 // pred_region
        %s384 = ssub.s32 %s24, 1
        // Predicated region
        $region13: #{custom_efficientnet_forward.3} parent=11 // pred_check
          %p385 = pneg %p71
        $region14: #{custom_efficientnet_forward.3} parent=11 // pred_check_branch
          %387 = sbr.rel (%p385) target = $region16
        $region15: #{custom_efficientnet_forward.3} parent=11 // pred_region
          _
        $region16: #{custom_efficientnet_forward.3} parent=11 // pred_fallthru
          _
        // Predicated region
        $region17: #{custom_efficientnet_forward.3} parent=11 // pred_check
          %p388 = pneg %p92
        $region18: #{custom_efficientnet_forward.3} parent=11 // pred_check_branch
          %390 = sbr.rel (%p388) target = $region20
        $region19: #{custom_efficientnet_forward.3} parent=11 // pred_region
          _
        $region20: #{custom_efficientnet_forward.3} parent=11 // pred_fallthru
          _
        // Predicated region
        $region21: #{custom_efficientnet_forward.3} parent=11 // pred_check
          %p391 = pneg %p113
        $region22: #{custom_efficientnet_forward.3} parent=11 // pred_check_branch
          %393 = sbr.rel (%p391) target = $region24
        $region23: #{custom_efficientnet_forward.3} parent=11 // pred_region
          _
        $region24: #{custom_efficientnet_forward.3} parent=11 // pred_fallthru
          _
        // Predicated region
        $region25: #{custom_efficientnet_forward.3} parent=11 // pred_check
          %p394 = pneg %p134
        $region26: #{custom_efficientnet_forward.3} parent=11 // pred_check_branch
          %396 = sbr.rel (%p394) target = $region28
        $region27: #{custom_efficientnet_forward.3} parent=11 // pred_region
          _
        $region28: #{custom_efficientnet_forward.3} parent=11 // pred_fallthru
          _
        // Predicated region
        $region29: #{custom_efficientnet_forward.3} parent=11 // pred_check
          %p397 = pneg %p155
        $region30: #{custom_efficientnet_forward.3} parent=11 // pred_check_branch
          %399 = sbr.rel (%p397) target = $region32
        $region31: #{custom_efficientnet_forward.3} parent=11 // pred_region
          _
        $region32: #{custom_efficientnet_forward.3} parent=11 // pred_fallthru
          _
        // Predicated region
        $region33: #{custom_efficientnet_forward.3} parent=11 // pred_check
          %p400 = pneg %p176
        $region34: #{custom_efficientnet_forward.3} parent=11 // pred_check_branch
          %402 = sbr.rel (%p400) target = $region36
        $region35: #{custom_efficientnet_forward.3} parent=11 // pred_region
          _
        $region36: #{custom_efficientnet_forward.3} parent=11 // pred_fallthru
          _
        // Predicated region
        $region37: #{custom_efficientnet_forward.3} parent=11 // pred_check
          %p403 = pneg %p197
        $region38: #{custom_efficientnet_forward.3} parent=11 // pred_check_branch
          %405 = sbr.rel (%p403) target = $region40
        $region39: #{custom_efficientnet_forward.3} parent=11 // pred_region
          _
        $region40: #{custom_efficientnet_forward.3} parent=11 // pred_fallthru
          _
        // Predicated region
        $region41: #{custom_efficientnet_forward.3} parent=11 // pred_check
          %p406 = pneg %p218
        $region42: #{custom_efficientnet_forward.3} parent=11 // pred_check_branch
          %408 = sbr.rel (%p406) target = $region44
        $region43: #{custom_efficientnet_forward.3} parent=11 // pred_region
          _
        $region44: #{custom_efficientnet_forward.3} parent=11 // pred_fallthru
          _
        // Predicated region
        $region45: #{custom_efficientnet_forward.3} parent=11 // pred_check
          %p409 = pneg %p239
        $region46: #{custom_efficientnet_forward.3} parent=11 // pred_check_branch
          %411 = sbr.rel (%p409) target = $region48
        $region47: #{custom_efficientnet_forward.3} parent=11 // pred_region
          _
        $region48: #{custom_efficientnet_forward.3} parent=11 // pred_fallthru
          _
        // Predicated region
        $region49: #{custom_efficientnet_forward.3} parent=11 // pred_check
          %p412 = pneg %p260
        $region50: #{custom_efficientnet_forward.3} parent=11 // pred_check_branch
          %414 = sbr.rel (%p412) target = $region52
        $region51: #{custom_efficientnet_forward.3} parent=11 // pred_region
          _
        $region52: #{custom_efficientnet_forward.3} parent=11 // pred_fallthru
          _
        // Predicated region
        $region53: #{custom_efficientnet_forward.3} parent=11 // pred_check
          %p415 = pneg %p281
        $region54: #{custom_efficientnet_forward.3} parent=11 // pred_check_branch
          %417 = sbr.rel (%p415) target = $region56
        $region55: #{custom_efficientnet_forward.3} parent=11 // pred_region
          _
        $region56: #{custom_efficientnet_forward.3} parent=11 // pred_fallthru
          _
        // Predicated region
        $region57: #{custom_efficientnet_forward.3} parent=11 // pred_check
          %p418 = pneg %p302
        $region58: #{custom_efficientnet_forward.3} parent=11 // pred_check_branch
          %420 = sbr.rel (%p418) target = $region60
        $region59: #{custom_efficientnet_forward.3} parent=11 // pred_region
          _
        $region60: #{custom_efficientnet_forward.3} parent=11 // pred_fallthru
          _
        // Predicated region
        $region61: #{custom_efficientnet_forward.3} parent=11 // pred_check
          %p421 = pneg %p323
        $region62: #{custom_efficientnet_forward.3} parent=11 // pred_check_branch
          %423 = sbr.rel (%p421) target = $region64
        $region63: #{custom_efficientnet_forward.3} parent=11 // pred_region
          _
        $region64: #{custom_efficientnet_forward.3} parent=11 // pred_fallthru
          _
        // Predicated region
        $region65: #{custom_efficientnet_forward.3} parent=11 // pred_check
          %p424 = pneg %p344
        $region66: #{custom_efficientnet_forward.3} parent=11 // pred_check_branch
          %426 = sbr.rel (%p424) target = $region68
        $region67: #{custom_efficientnet_forward.3} parent=11 // pred_region
          _
        $region68: #{custom_efficientnet_forward.3} parent=11 // pred_fallthru
          _
      $region12: #{custom_efficientnet_forward.3} parent=5 // pred_fallthru
        _
      %p427 = scmp.lt.s32.totalorder %s24, 2
      // Predicated region
      $region69: #{custom_efficientnet_forward.3} parent=5 // pred_check
        %p428 = pneg %p427
      $region70: #{custom_efficientnet_forward.3} parent=5 // pred_check_branch
        %430 = sbr.rel (%p428) target = $region72
      $region71: #{custom_efficientnet_forward.3} parent=5 // pred_region
        // Predicated region
        $region73: #{custom_efficientnet_forward.3} parent=71 // pred_check
          %p431 = pneg %p44
        $region74: #{custom_efficientnet_forward.3} parent=71 // pred_check_branch
          %433 = sbr.rel (%p431) target = $region76
        $region75: #{custom_efficientnet_forward.3} parent=71 // pred_region
          %p434 = scmp.lt.s32.totalorder %s24, 1
          %s435 = scalar_select %p434, %s24, 1
          %s436 = smul.addr %s435, 32
          %s437 = smul.addr %s436, 4
          %s438 = scalar_lea.vmem %s0, %s437
        $region76: #{custom_efficientnet_forward.3} parent=71 // pred_fallthru
          _
      $region72: #{custom_efficientnet_forward.3} parent=5 // pred_fallthru
        _
      %p439 = scmp.le.s32.totalorder 1, %s24
      %p440 = scmp.lt.s32.totalorder %s24, 3
      %p441 = pnand %p439, %p440
      %p442 = pneg %p441
      // Predicated region
      $region77: #{custom_efficientnet_forward.3} parent=5 // pred_check
        _
      $region78: #{custom_efficientnet_forward.3} parent=5 // pred_check_branch
        %444 = sbr.rel (%p441) target = $region80
      $region79: #{custom_efficientnet_forward.3} parent=5 // pred_region
        %s445 = ssub.s32 %s24, 1
        %p446 = scmp.lt.s32.totalorder %s29, 1
        %s447 = scalar_select %p446, %s29, 1
        %s448 = smul.addr %s447, 32
        %s449 = smul.addr %s448, 4
        %s450 = scalar_lea.vmem %s0, %s449
        %p451 = pneg %p50
        %p452 = pneg %p47
        %p453 = pneg %p71
        %p454 = pneg %p68
        %p455 = pneg %p92
        %p456 = pneg %p89
        %p457 = pneg %p113
        %p458 = pneg %p110
        %p459 = pneg %p134
        %p460 = pneg %p131
        %p461 = pneg %p155
        %p462 = pneg %p152
        %p463 = pneg %p176
        %p464 = pneg %p173
        %p465 = pneg %p197
        %p466 = pneg %p194
        %p467 = pneg %p218
        %p468 = pneg %p215
        %p469 = pneg %p239
        %p470 = pneg %p236
        %p471 = pneg %p260
        %p472 = pneg %p257
        %p473 = pneg %p281
        %p474 = pneg %p278
        %p475 = pneg %p302
        %p476 = pneg %p299
        %p477 = pneg %p323
        %p478 = pneg %p320
        %p479 = pneg %p344
        %p480 = pneg %p341
        %p481 = pneg %p370
        %p482 = pneg %p367
        %s483 = sand.u32 %s357, 1
        %s484 = scalar_lea.sflag [#allocation4], %s483
        %s485 = sand.u32 %s357, 1
        %s486 = scalar_lea.vmem [#allocation3], %s485
        %p487 = scmp.lt.s32.totalorder %s29, 1
        %s488 = scalar_select %p487, %s29, 1
        %s489 = smul.addr %s488, 32
        %s490 = smul.addr %s489, 4
        %s491 = scalar_lea.vmem %s0, %s490
        %v492 = vld [vmem:[%s491] sm:$0xf]
        %v493 = vld [vmem:[%s491 + $0x4] sm:$0xf]
        %v494 = vld [vmem:[%s491 + $0x8] sm:$0xf]
        %v495 = vld [vmem:[%s491 + $0xc] sm:$0xf]
        %v496 = vld [vmem:[%s491 + $0x10] sm:$0xf]
        %v497 = vld [vmem:[%s491 + $0x14] sm:$0xf]
        %v498 = vld [vmem:[%s491 + $0x18] sm:$0xf]
        %v499 = vld [vmem:[%s491 + $0x1c] sm:$0xf]
        %v500 = vld [vmem:[%s491 + $0x20] sm:$0xf]
        %v501 = vld [vmem:[%s491 + $0x24] sm:$0xf]
        %v502 = vld [vmem:[%s491 + $0x28] sm:$0xf]
        %v503 = vld [vmem:[%s491 + $0x2c] sm:$0xf]
        %v504 = vld [vmem:[%s491 + $0x30] sm:$0xf]
        %v505 = vld [vmem:[%s491 + $0x34] sm:$0xf]
        %v506 = vld [vmem:[%s491 + $0x38] sm:$0xf]
        %v507 = vld [vmem:[%s491 + $0x3c] sm:$0xf]
        %v508 = vld [vmem:[%s491 + $0x40] sm:$0xf]
        %v509 = vld [vmem:[%s491 + $0x44] sm:$0xf]
        %v510 = vld [vmem:[%s491 + $0x48] sm:$0xf]
        %v511 = vld [vmem:[%s491 + $0x4c] sm:$0xf]
        %v512 = vld [vmem:[%s491 + $0x50] sm:$0xf]
        %v513 = vld [vmem:[%s491 + $0x54] sm:$0xf]
        %v514 = vld [vmem:[%s491 + $0x58] sm:$0xf]
        %v515 = vld [vmem:[%s491 + $0x5c] sm:$0xf]
        %v516 = vld [vmem:[%s491 + $0x60] sm:$0xf]
        %v517 = vld [vmem:[%s491 + $0x64] sm:$0xf]
        %v518 = vld [vmem:[%s491 + $0x68] sm:$0xf]
        %v519 = vld [vmem:[%s491 + $0x6c] sm:$0xf]
        %v520 = vld [vmem:[%s491 + $0x70] sm:$0xf]
        %v521 = vld [vmem:[%s491 + $0x74] sm:$0xf]
        %v522 = vld [vmem:[%s491 + $0x78] sm:$0xf]
        %v523 = vld [vmem:[%s491 + $0x7c] sm:$0xf]
        %v524 = vld [vmem:[%s1] sm:$0xf]
        %v525 = vld [vmem:[%s1 + $0x4] sm:$0xf]
        %v526 = vld [vmem:[%s1 + $0x8] sm:$0xf]
        %v527 = vld [vmem:[%s1 + $0xc] sm:$0xf]
        %v528 = vld [vmem:[%s1 + $0x10] sm:$0xf]
        %v529 = vld [vmem:[%s1 + $0x14] sm:$0xf]
        %v530 = vld [vmem:[%s1 + $0x18] sm:$0xf]
        %v531 = vld [vmem:[%s1 + $0x1c] sm:$0xf]
        %v532 = vld [vmem:[%s1 + $0x20] sm:$0xf]
        %v533 = vld [vmem:[%s1 + $0x24] sm:$0xf]
        %v534 = vld [vmem:[%s1 + $0x28] sm:$0xf]
        %v535 = vld [vmem:[%s1 + $0x2c] sm:$0xf]
        %v536 = vld [vmem:[%s1 + $0x30] sm:$0xf]
        %v537 = vld [vmem:[%s1 + $0x34] sm:$0xf]
        %v538 = vld [vmem:[%s1 + $0x38] sm:$0xf]
        %v539 = vld [vmem:[%s1 + $0x3c] sm:$0xf]
        %v540 = vld [vmem:[%s2] sm:$0x1]
        %v542 = vperm.slane %v540, 0
        %v576 = vunpack.c.l.b16 %v492
        %v577 = vunpack.c.l.b16 %v493
        %v578 = vunpack.c.l.b16 %v494
        %v579 = vunpack.c.l.b16 %v495
        %v580 = vunpack.c.l.b16 %v496
        %v581 = vunpack.c.l.b16 %v497
        %v582 = vunpack.c.l.b16 %v498
        %v583 = vunpack.c.l.b16 %v499
        %v584 = vunpack.c.l.b16 %v500
        %v585 = vunpack.c.l.b16 %v501
        %v586 = vunpack.c.l.b16 %v502
        %v587 = vunpack.c.l.b16 %v503
        %v588 = vunpack.c.l.b16 %v504
        %v589 = vunpack.c.l.b16 %v505
        %v590 = vunpack.c.l.b16 %v506
        %v591 = vunpack.c.l.b16 %v507
        %v592 = vunpack.c.l.b16 %v508
        %v593 = vunpack.c.l.b16 %v509
        %v594 = vunpack.c.l.b16 %v510
        %v595 = vunpack.c.l.b16 %v511
        %v596 = vunpack.c.l.b16 %v512
        %v597 = vunpack.c.l.b16 %v513
        %v598 = vunpack.c.l.b16 %v514
        %v599 = vunpack.c.l.b16 %v515
        %v600 = vunpack.c.l.b16 %v516
        %v601 = vunpack.c.l.b16 %v517
        %v602 = vunpack.c.l.b16 %v518
        %v603 = vunpack.c.l.b16 %v519
        %v604 = vunpack.c.l.b16 %v520
        %v605 = vunpack.c.l.b16 %v521
        %v606 = vunpack.c.l.b16 %v522
        %v607 = vunpack.c.l.b16 %v523
        %v608 = vpack.c.b16 %v577, %v576
        %v609 = vpack.c.b16 %v579, %v578
        %v610 = vpack.c.b16 %v581, %v580
        %v611 = vpack.c.b16 %v583, %v582
        %v612 = vpack.c.b16 %v585, %v584
        %v613 = vpack.c.b16 %v587, %v586
        %v614 = vpack.c.b16 %v589, %v588
        %v615 = vpack.c.b16 %v591, %v590
        %v616 = vpack.c.b16 %v593, %v592
        %v617 = vpack.c.b16 %v595, %v594
        %v618 = vpack.c.b16 %v597, %v596
        %v619 = vpack.c.b16 %v599, %v598
        %v620 = vpack.c.b16 %v601, %v600
        %v621 = vpack.c.b16 %v603, %v602
        %v622 = vpack.c.b16 %v605, %v604
        %v623 = vpack.c.b16 %v607, %v606
        %v656 = vunpack.c.l.b16 %v524
        %v657 = vunpack.c.l.b16 %v525
        %v658 = vunpack.c.l.b16 %v526
        %v659 = vunpack.c.l.b16 %v527
        %v660 = vunpack.c.l.b16 %v528
        %v661 = vunpack.c.l.b16 %v529
        %v662 = vunpack.c.l.b16 %v530
        %v663 = vunpack.c.l.b16 %v531
        %v664 = vunpack.c.l.b16 %v532
        %v665 = vunpack.c.l.b16 %v533
        %v666 = vunpack.c.l.b16 %v534
        %v667 = vunpack.c.l.b16 %v535
        %v668 = vunpack.c.l.b16 %v536
        %v669 = vunpack.c.l.b16 %v537
        %v670 = vunpack.c.l.b16 %v538
        %v671 = vunpack.c.l.b16 %v539
        %v672 = vpack.c.b16 %v657, %v656
        %v673 = vpack.c.b16 %v659, %v658
        %v674 = vpack.c.b16 %v661, %v660
        %v675 = vpack.c.b16 %v663, %v662
        %v676 = vpack.c.b16 %v665, %v664
        %v677 = vpack.c.b16 %v667, %v666
        %v678 = vpack.c.b16 %v669, %v668
        %v679 = vpack.c.b16 %v671, %v670
        %688 = vmatpush.bf16.msra.mxu0 %v679
        %689 = vmatpush.bf16.msra.mxu0 %v678
        %690 = vmatpush.bf16.msra.mxu0 %v677
        %691 = vmatpush.bf16.msra.mxu0 %v676
        %692 = vmatpush.bf16.msra.mxu0 %v675
        %693 = vmatpush.bf16.msra.mxu0 %v674
        %694 = vmatpush.bf16.msra.mxu0 %v673
        %695 = vmatpush.bf16.msra.mxu0 %v672
        %696 = vmatmul.bf16.gmra.mxu0 %v608
        %v697 = vpop.f32.mrf.mxu0
        %v698 = vadd.f32 %v542, %v697
        %v699 = vpop.f32.mrf.mxu0
        %v700 = vadd.f32 %v542, %v699
        %701 = vmatmul.bf16.gmra.mxu0 %v609
        %v702 = vpop.f32.mrf.mxu0
        %v703 = vadd.f32 %v542, %v702
        %v704 = vpop.f32.mrf.mxu0
        %v705 = vadd.f32 %v542, %v704
        %706 = vmatmul.bf16.gmra.mxu0 %v610
        %v707 = vpop.f32.mrf.mxu0
        %v708 = vadd.f32 %v542, %v707
        %v709 = vpop.f32.mrf.mxu0
        %v710 = vadd.f32 %v542, %v709
        %711 = vmatmul.bf16.gmra.mxu0 %v611
        %v712 = vpop.f32.mrf.mxu0
        %v713 = vadd.f32 %v542, %v712
        %v714 = vpop.f32.mrf.mxu0
        %v715 = vadd.f32 %v542, %v714
        %716 = vmatmul.bf16.gmra.mxu0 %v612
        %v717 = vpop.f32.mrf.mxu0
        %v718 = vadd.f32 %v542, %v717
        %v719 = vpop.f32.mrf.mxu0
        %v720 = vadd.f32 %v542, %v719
        %721 = vmatmul.bf16.gmra.mxu0 %v613
        %v722 = vpop.f32.mrf.mxu0
        %v723 = vadd.f32 %v542, %v722
        %v724 = vpop.f32.mrf.mxu0
        %v725 = vadd.f32 %v542, %v724
        %726 = vmatmul.bf16.gmra.mxu0 %v614
        %v727 = vpop.f32.mrf.mxu0
        %v728 = vadd.f32 %v542, %v727
        %v729 = vpop.f32.mrf.mxu0
        %v730 = vadd.f32 %v542, %v729
        %731 = vmatmul.bf16.gmra.mxu0 %v615
        %v732 = vpop.f32.mrf.mxu0
        %v733 = vadd.f32 %v542, %v732
        %v734 = vpop.f32.mrf.mxu0
        %v735 = vadd.f32 %v542, %v734
        %736 = vmatmul.bf16.gmra.mxu0 %v616
        %v737 = vpop.f32.mrf.mxu0
        %v738 = vadd.f32 %v542, %v737
        %v739 = vpop.f32.mrf.mxu0
        %v740 = vadd.f32 %v542, %v739
        %741 = vmatmul.bf16.gmra.mxu0 %v617
        %v742 = vpop.f32.mrf.mxu0
        %v743 = vadd.f32 %v542, %v742
        %v744 = vpop.f32.mrf.mxu0
        %v745 = vadd.f32 %v542, %v744
        %746 = vmatmul.bf16.gmra.mxu0 %v618
        %v747 = vpop.f32.mrf.mxu0
        %v748 = vadd.f32 %v542, %v747
        %v749 = vpop.f32.mrf.mxu0
        %v750 = vadd.f32 %v542, %v749
        %751 = vmatmul.bf16.gmra.mxu0 %v619
        %v752 = vpop.f32.mrf.mxu0
        %v753 = vadd.f32 %v542, %v752
        %v754 = vpop.f32.mrf.mxu0
        %v755 = vadd.f32 %v542, %v754
        %756 = vmatmul.bf16.gmra.mxu0 %v620
        %v757 = vpop.f32.mrf.mxu0
        %v758 = vadd.f32 %v542, %v757
        %v759 = vpop.f32.mrf.mxu0
        %v760 = vadd.f32 %v542, %v759
        %761 = vmatmul.bf16.gmra.mxu0 %v621
        %v762 = vpop.f32.mrf.mxu0
        %v763 = vadd.f32 %v542, %v762
        %v764 = vpop.f32.mrf.mxu0
        %v765 = vadd.f32 %v542, %v764
        %766 = vmatmul.bf16.gmra.mxu0 %v622
        %v767 = vpop.f32.mrf.mxu0
        %v768 = vadd.f32 %v542, %v767
        %v769 = vpop.f32.mrf.mxu0
        %v770 = vadd.f32 %v542, %v769
        %771 = vmatmul.bf16.gmra.mxu0 %v623
        %v772 = vpop.f32.mrf.mxu0
        %v773 = vadd.f32 %v542, %v772
        %v774 = vpop.f32.mrf.mxu0
        %v775 = vadd.f32 %v542, %v774
        %776 = vdwg.mxu0
        %v777 = vsub.f32 0.0, %v698
        %v778 = vsub.f32 0.0, %v700
        %v779 = vsub.f32 0.0, %v703
        %v780 = vsub.f32 0.0, %v705
        %v781 = vsub.f32 0.0, %v708
        %v782 = vsub.f32 0.0, %v710
        %v783 = vsub.f32 0.0, %v713
        %v784 = vsub.f32 0.0, %v715
        %v785 = vsub.f32 0.0, %v718
        %v786 = vsub.f32 0.0, %v720
        %v787 = vsub.f32 0.0, %v723
        %v788 = vsub.f32 0.0, %v725
        %v789 = vsub.f32 0.0, %v728
        %v790 = vsub.f32 0.0, %v730
        %v791 = vsub.f32 0.0, %v733
        %v792 = vsub.f32 0.0, %v735
        %v793 = vsub.f32 0.0, %v738
        %v794 = vsub.f32 0.0, %v740
        %v795 = vsub.f32 0.0, %v743
        %v796 = vsub.f32 0.0, %v745
        %v797 = vsub.f32 0.0, %v748
        %v798 = vsub.f32 0.0, %v750
        %v799 = vsub.f32 0.0, %v753
        %v800 = vsub.f32 0.0, %v755
        %v801 = vsub.f32 0.0, %v758
        %v802 = vsub.f32 0.0, %v760
        %v803 = vsub.f32 0.0, %v763
        %v804 = vsub.f32 0.0, %v765
        %v805 = vsub.f32 0.0, %v768
        %v806 = vsub.f32 0.0, %v770
        %v807 = vsub.f32 0.0, %v773
        %v808 = vsub.f32 0.0, %v775
        %v809 = vmul.f32 %v777, 1.442695
        %v810 = vpow.pop %v809
        %v811 = vmul.f32 %v778, 1.442695
        %v812 = vpow.pop %v811
        %v813 = vmul.f32 %v779, 1.442695
        %v814 = vpow.pop %v813
        %v815 = vmul.f32 %v780, 1.442695
        %v816 = vpow.pop %v815
        %v817 = vmul.f32 %v781, 1.442695
        %v818 = vpow.pop %v817
        %v819 = vmul.f32 %v782, 1.442695
        %v820 = vpow.pop %v819
        %v821 = vmul.f32 %v783, 1.442695
        %v822 = vpow.pop %v821
        %v823 = vmul.f32 %v784, 1.442695
        %v824 = vpow.pop %v823
        %v825 = vmul.f32 %v785, 1.442695
        %v826 = vpow.pop %v825
        %v827 = vmul.f32 %v786, 1.442695
        %v828 = vpow.pop %v827
        %v829 = vmul.f32 %v787, 1.442695
        %v830 = vpow.pop %v829
        %v831 = vmul.f32 %v788, 1.442695
        %v832 = vpow.pop %v831
        %v833 = vmul.f32 %v789, 1.442695
        %v834 = vpow.pop %v833
        %v835 = vmul.f32 %v790, 1.442695
        %v836 = vpow.pop %v835
        %v837 = vmul.f32 %v791, 1.442695
        %v838 = vpow.pop %v837
        %v839 = vmul.f32 %v792, 1.442695
        %v840 = vpow.pop %v839
        %v841 = vmul.f32 %v793, 1.442695
        %v842 = vpow.pop %v841
        %v843 = vmul.f32 %v794, 1.442695
        %v844 = vpow.pop %v843
        %v845 = vmul.f32 %v795, 1.442695
        %v846 = vpow.pop %v845
        %v847 = vmul.f32 %v796, 1.442695
        %v848 = vpow.pop %v847
        %v849 = vmul.f32 %v797, 1.442695
        %v850 = vpow.pop %v849
        %v851 = vmul.f32 %v798, 1.442695
        %v852 = vpow.pop %v851
        %v853 = vmul.f32 %v799, 1.442695
        %v854 = vpow.pop %v853
        %v855 = vmul.f32 %v800, 1.442695
        %v856 = vpow.pop %v855
        %v857 = vmul.f32 %v801, 1.442695
        %v858 = vpow.pop %v857
        %v859 = vmul.f32 %v802, 1.442695
        %v860 = vpow.pop %v859
        %v861 = vmul.f32 %v803, 1.442695
        %v862 = vpow.pop %v861
        %v863 = vmul.f32 %v804, 1.442695
        %v864 = vpow.pop %v863
        %v865 = vmul.f32 %v805, 1.442695
        %v866 = vpow.pop %v865
        %v867 = vmul.f32 %v806, 1.442695
        %v868 = vpow.pop %v867
        %v869 = vmul.f32 %v807, 1.442695
        %v870 = vpow.pop %v869
        %v871 = vmul.f32 %v808, 1.442695
        %v872 = vpow.pop %v871
        %v873 = vadd.f32 %v810, 1.0
        %v874 = vadd.f32 %v812, 1.0
        %v875 = vadd.f32 %v814, 1.0
        %v876 = vadd.f32 %v816, 1.0
        %v877 = vadd.f32 %v818, 1.0
        %v878 = vadd.f32 %v820, 1.0
        %v879 = vadd.f32 %v822, 1.0
        %v880 = vadd.f32 %v824, 1.0
        %v881 = vadd.f32 %v826, 1.0
        %v882 = vadd.f32 %v828, 1.0
        %v883 = vadd.f32 %v830, 1.0
        %v884 = vadd.f32 %v832, 1.0
        %v885 = vadd.f32 %v834, 1.0
        %v886 = vadd.f32 %v836, 1.0
        %v887 = vadd.f32 %v838, 1.0
        %v888 = vadd.f32 %v840, 1.0
        %v889 = vadd.f32 %v842, 1.0
        %v890 = vadd.f32 %v844, 1.0
        %v891 = vadd.f32 %v846, 1.0
        %v892 = vadd.f32 %v848, 1.0
        %v893 = vadd.f32 %v850, 1.0
        %v894 = vadd.f32 %v852, 1.0
        %v895 = vadd.f32 %v854, 1.0
        %v896 = vadd.f32 %v856, 1.0
        %v897 = vadd.f32 %v858, 1.0
        %v898 = vadd.f32 %v860, 1.0
        %v899 = vadd.f32 %v862, 1.0
        %v900 = vadd.f32 %v864, 1.0
        %v901 = vadd.f32 %v866, 1.0
        %v902 = vadd.f32 %v868, 1.0
        %v903 = vadd.f32 %v870, 1.0
        %v904 = vadd.f32 %v872, 1.0
        %v905 = vrcp.pop %v873
        %v906 = vrcp.pop %v874
        %v907 = vrcp.pop %v875
        %v908 = vrcp.pop %v876
        %v909 = vrcp.pop %v877
        %v910 = vrcp.pop %v878
        %v911 = vrcp.pop %v879
        %v912 = vrcp.pop %v880
        %v913 = vrcp.pop %v881
        %v914 = vrcp.pop %v882
        %v915 = vrcp.pop %v883
        %v916 = vrcp.pop %v884
        %v917 = vrcp.pop %v885
        %v918 = vrcp.pop %v886
        %v919 = vrcp.pop %v887
        %v920 = vrcp.pop %v888
        %v921 = vrcp.pop %v889
        %v922 = vrcp.pop %v890
        %v923 = vrcp.pop %v891
        %v924 = vrcp.pop %v892
        %v925 = vrcp.pop %v893
        %v926 = vrcp.pop %v894
        %v927 = vrcp.pop %v895
        %v928 = vrcp.pop %v896
        %v929 = vrcp.pop %v897
        %v930 = vrcp.pop %v898
        %v931 = vrcp.pop %v899
        %v932 = vrcp.pop %v900
        %v933 = vrcp.pop %v901
        %v934 = vrcp.pop %v902
        %v935 = vrcp.pop %v903
        %v936 = vrcp.pop %v904
        %v937 = vmul.f32 %v698, %v905
        %v938 = vmul.f32 %v700, %v906
        %v939 = vmul.f32 %v703, %v907
        %v940 = vmul.f32 %v705, %v908
        %v941 = vmul.f32 %v708, %v909
        %v942 = vmul.f32 %v710, %v910
        %v943 = vmul.f32 %v713, %v911
        %v944 = vmul.f32 %v715, %v912
        %v945 = vmul.f32 %v718, %v913
        %v946 = vmul.f32 %v720, %v914
        %v947 = vmul.f32 %v723, %v915
        %v948 = vmul.f32 %v725, %v916
        %v949 = vmul.f32 %v728, %v917
        %v950 = vmul.f32 %v730, %v918
        %v951 = vmul.f32 %v733, %v919
        %v952 = vmul.f32 %v735, %v920
        %v953 = vmul.f32 %v738, %v921
        %v954 = vmul.f32 %v740, %v922
        %v955 = vmul.f32 %v743, %v923
        %v956 = vmul.f32 %v745, %v924
        %v957 = vmul.f32 %v748, %v925
        %v958 = vmul.f32 %v750, %v926
        %v959 = vmul.f32 %v753, %v927
        %v960 = vmul.f32 %v755, %v928
        %v961 = vmul.f32 %v758, %v929
        %v962 = vmul.f32 %v760, %v930
        %v963 = vmul.f32 %v763, %v931
        %v964 = vmul.f32 %v765, %v932
        %v965 = vmul.f32 %v768, %v933
        %v966 = vmul.f32 %v770, %v934
        %v967 = vmul.f32 %v773, %v935
        %v968 = vmul.f32 %v775, %v936
        %969 = vst [vmem:[#allocation2] sm:$0xff] 0.0
        %970 = vst [vmem:[#allocation2 + $0x8] sm:$0xff] 0.0
        %971 = vst [vmem:[#allocation2 + $0x10] sm:$0x3] 0.0
        %972 = vst [vmem:[#allocation2 + $0x18] sm:$0xff] 0.0
        %973 = vst [vmem:[#allocation2 + $0x20] sm:$0xff] 0.0
        %974 = vst [vmem:[#allocation2 + $0x28] sm:$0x3] 0.0
        %975 = vst [vmem:[#allocation2 + $0x30] sm:$0xff] 0.0
        %976 = vst [vmem:[#allocation2 + $0x38] sm:$0xff] 0.0
        %977 = vst [vmem:[#allocation2 + $0x40] sm:$0x3] 0.0
        %978 = vst [vmem:[#allocation2 + $0x48] sm:$0xff] 0.0
        %979 = vst [vmem:[#allocation2 + $0x50] sm:$0xff] 0.0
        %980 = vst [vmem:[#allocation2 + $0x58] sm:$0x3] 0.0
        %981 = vst [vmem:[#allocation2 + $0x60] sm:$0xff] 0.0
        %982 = vst [vmem:[#allocation2 + $0x68] sm:$0xff] 0.0
        %983 = vst [vmem:[#allocation2 + $0x70] sm:$0x3] 0.0
        %984 = vst [vmem:[#allocation2 + $0x78] sm:$0xff] 0.0
        %985 = vst [vmem:[#allocation2 + $0x80] sm:$0xff] 0.0
        %986 = vst [vmem:[#allocation2 + $0x88] sm:$0x3] 0.0
        %987 = vst [vmem:[#allocation2 + $0x90] sm:$0xff] 0.0
        %988 = vst [vmem:[#allocation2 + $0x98] sm:$0xff] 0.0
        %989 = vst [vmem:[#allocation2 + $0xa0] sm:$0x3] 0.0
        %990 = vst [vmem:[#allocation2 + $0xa8] sm:$0xff] 0.0
        %991 = vst [vmem:[#allocation2 + $0xb0] sm:$0xff] 0.0
        %992 = vst [vmem:[#allocation2 + $0xb8] sm:$0x3] 0.0
        %993 = vst [vmem:[#allocation2 + $0xc0] sm:$0xff] 0.0
        %994 = vst [vmem:[#allocation2 + $0xc8] sm:$0xff] 0.0
        %995 = vst [vmem:[#allocation2 + $0xd0] sm:$0x3] 0.0
        %996 = vst [vmem:[#allocation2 + $0xd8] sm:$0xff] 0.0
        %997 = vst [vmem:[#allocation2 + $0xe0] sm:$0xff] 0.0
        %998 = vst [vmem:[#allocation2 + $0xe8] sm:$0x3] 0.0
        %999 = vst [vmem:[#allocation2 + $0xf0] sm:$0xff] 0.0
        %1000 = vst [vmem:[#allocation2 + $0xf8] sm:$0xff] 0.0
        %1001 = vst [vmem:[#allocation2 + $0x100] sm:$0x3] 0.0
        %1002 = vst [vmem:[#allocation2 + $0x108] sm:$0xff] 0.0
        %1003 = vst [vmem:[#allocation2 + $0x110] sm:$0xff] 0.0
        %1004 = vst [vmem:[#allocation2 + $0x118] sm:$0x3] 0.0
        %1005 = vst [vmem:[#allocation2 + $0x120] sm:$0xff] 0.0
        %1006 = vst [vmem:[#allocation2 + $0x128] sm:$0xff] 0.0
        %1007 = vst [vmem:[#allocation2 + $0x130] sm:$0x3] 0.0
        %1008 = vst [vmem:[#allocation2 + $0x138] sm:$0xff] 0.0
        %1009 = vst [vmem:[#allocation2 + $0x140] sm:$0xff] 0.0
        %1010 = vst [vmem:[#allocation2 + $0x148] sm:$0x3] 0.0
        %1011 = vst [vmem:[#allocation2 + $0x150] sm:$0xff] 0.0
        %1012 = vst [vmem:[#allocation2 + $0x158] sm:$0xff] 0.0
        %1013 = vst [vmem:[#allocation2 + $0x160] sm:$0x3] 0.0
        %1014 = vst [vmem:[#allocation2 + $0x168] sm:$0xff] 0.0
        %1015 = vst [vmem:[#allocation2 + $0x170] sm:$0xff] 0.0
        %1016 = vst [vmem:[#allocation2 + $0x178] sm:$0x3] 0.0
        %1017 = vst [vmem:[#allocation2 + $0x180] sm:$0xff] 0.0
        %1018 = vst [vmem:[#allocation2 + $0x188] sm:$0xff] 0.0
        %1019 = vst [vmem:[#allocation2 + $0x190] sm:$0x3] 0.0
        %1020 = vst [vmem:[#allocation2 + $0x198] sm:$0xff] 0.0
        %1021 = vst [vmem:[#allocation2 + $0x1a0] sm:$0xff] 0.0
        %1022 = vst [vmem:[#allocation2 + $0x1a8] sm:$0x3] 0.0
        %s1023 = scalar_lea.vmem [#allocation2], 24
        %1024 = vst [vmem:[%s1023 + $0x1] sm:$0xff] %v937
        %1025 = vst [vmem:[%s1023 + $0x9] sm:$0xff] %v938
        %1026 = vst [vmem:[%s1023 + $0x19] sm:$0xff] %v939
        %1027 = vst [vmem:[%s1023 + $0x21] sm:$0xff] %v940
        %1028 = vst [vmem:[%s1023 + $0x31] sm:$0xff] %v941
        %1029 = vst [vmem:[%s1023 + $0x39] sm:$0xff] %v942
        %1030 = vst [vmem:[%s1023 + $0x49] sm:$0xff] %v943
        %1031 = vst [vmem:[%s1023 + $0x51] sm:$0xff] %v944
        %1032 = vst [vmem:[%s1023 + $0x61] sm:$0xff] %v945
        %1033 = vst [vmem:[%s1023 + $0x69] sm:$0xff] %v946
        %1034 = vst [vmem:[%s1023 + $0x79] sm:$0xff] %v947
        %1035 = vst [vmem:[%s1023 + $0x81] sm:$0xff] %v948
        %1036 = vst [vmem:[%s1023 + $0x91] sm:$0xff] %v949
        %1037 = vst [vmem:[%s1023 + $0x99] sm:$0xff] %v950
        %1038 = vst [vmem:[%s1023 + $0xa9] sm:$0xff] %v951
        %1039 = vst [vmem:[%s1023 + $0xb1] sm:$0xff] %v952
        %1040 = vst [vmem:[%s1023 + $0xc1] sm:$0xff] %v953
        %1041 = vst [vmem:[%s1023 + $0xc9] sm:$0xff] %v954
        %1042 = vst [vmem:[%s1023 + $0xd9] sm:$0xff] %v955
        %1043 = vst [vmem:[%s1023 + $0xe1] sm:$0xff] %v956
        %1044 = vst [vmem:[%s1023 + $0xf1] sm:$0xff] %v957
        %1045 = vst [vmem:[%s1023 + $0xf9] sm:$0xff] %v958
        %1046 = vst [vmem:[%s1023 + $0x109] sm:$0xff] %v959
        %1047 = vst [vmem:[%s1023 + $0x111] sm:$0xff] %v960
        %1048 = vst [vmem:[%s1023 + $0x121] sm:$0xff] %v961
        %1049 = vst [vmem:[%s1023 + $0x129] sm:$0xff] %v962
        %1050 = vst [vmem:[%s1023 + $0x139] sm:$0xff] %v963
        %1051 = vst [vmem:[%s1023 + $0x141] sm:$0xff] %v964
        %1052 = vst [vmem:[%s1023 + $0x151] sm:$0xff] %v965
        %1053 = vst [vmem:[%s1023 + $0x159] sm:$0xff] %v966
        %1054 = vst [vmem:[%s1023 + $0x169] sm:$0xff] %v967
        %1055 = vst [vmem:[%s1023 + $0x171] sm:$0xff] %v968
        %v1056 = vld [vmem:[%s3] sm:$0xff]
        %v1057 = vld [vmem:[%s3 + $0x8] sm:$0x1]
        %v1058 = vld [vmem:[#allocation2] sm:$0xff]
        %v1059 = vld [vmem:[#allocation2 + $0x8] sm:$0xff]
        %v1060 = vld [vmem:[#allocation2 + $0x18] sm:$0xff]
        %v1061 = vld [vmem:[#allocation2 + $0x20] sm:$0xff]
        %v1062 = vld [vmem:[#allocation2 + $0x30] sm:$0xff]
        %v1063 = vld [vmem:[#allocation2 + $0x38] sm:$0xff]
        %v1064 = vld [vmem:[#allocation2 + $0x48] sm:$0xff]
        %v1065 = vld [vmem:[#allocation2 + $0x50] sm:$0xff]
        %v1066 = vld [vmem:[#allocation2 + $0x60] sm:$0xff]
        %v1067 = vld [vmem:[#allocation2 + $0x68] sm:$0xff]
        %v1068 = vld [vmem:[#allocation2 + $0x78] sm:$0xff]
        %v1069 = vld [vmem:[#allocation2 + $0x80] sm:$0xff]
        %v1070 = vld [vmem:[#allocation2 + $0x90] sm:$0xff]
        %v1071 = vld [vmem:[#allocation2 + $0x98] sm:$0xff]
        %v1072 = vld [vmem:[#allocation2 + $0xa8] sm:$0xff]
        %v1073 = vld [vmem:[#allocation2 + $0xb0] sm:$0xff]
        %v1074 = vld [vmem:[#allocation2 + $0xc0] sm:$0xff]
        %v1075 = vld [vmem:[#allocation2 + $0xc8] sm:$0xff]
        %v1076 = vld [vmem:[#allocation2 + $0xd8] sm:$0xff]
        %v1077 = vld [vmem:[#allocation2 + $0xe0] sm:$0xff]
        %v1078 = vld [vmem:[#allocation2 + $0xf0] sm:$0xff]
        %v1079 = vld [vmem:[#allocation2 + $0xf8] sm:$0xff]
        %v1080 = vld [vmem:[#allocation2 + $0x108] sm:$0xff]
        %v1081 = vld [vmem:[#allocation2 + $0x110] sm:$0xff]
        %v1082 = vld [vmem:[#allocation2 + $0x120] sm:$0xff]
        %v1083 = vld [vmem:[#allocation2 + $0x128] sm:$0xff]
        %v1084 = vld [vmem:[#allocation2 + $0x138] sm:$0xff]
        %v1085 = vld [vmem:[#allocation2 + $0x140] sm:$0xff]
        %v1086 = vld [vmem:[#allocation2 + $0x150] sm:$0xff]
        %v1087 = vld [vmem:[#allocation2 + $0x158] sm:$0xff]
        %v1088 = vld [vmem:[#allocation2 + $0x168] sm:$0xff]
        %v1089 = vld [vmem:[#allocation2 + $0x170] sm:$0xff]
        %v1090 = vperm.slane %v1056, 0
        %v1091 = vmul.f32 %v1058, %v1090
        %v1092 = vmul.f32 %v1059, %v1090
        %v1093 = vmul.f32 %v1060, %v1090
        %v1094 = vmul.f32 %v1061, %v1090
        %v1095 = vmul.f32 %v1062, %v1090
        %v1096 = vmul.f32 %v1063, %v1090
        %v1097 = vmul.f32 %v1064, %v1090
        %v1098 = vmul.f32 %v1065, %v1090
        %v1099 = vmul.f32 %v1066, %v1090
        %v1100 = vmul.f32 %v1067, %v1090
        %v1101 = vmul.f32 %v1068, %v1090
        %v1102 = vmul.f32 %v1069, %v1090
        %v1103 = vmul.f32 %v1070, %v1090
        %v1104 = vmul.f32 %v1071, %v1090
        %v1105 = vmul.f32 %v1072, %v1090
        %v1106 = vmul.f32 %v1073, %v1090
        %v1107 = vmul.f32 %v1074, %v1090
        %v1108 = vmul.f32 %v1075, %v1090
        %v1109 = vmul.f32 %v1076, %v1090
        %v1110 = vmul.f32 %v1077, %v1090
        %v1111 = vmul.f32 %v1078, %v1090
        %v1112 = vmul.f32 %v1079, %v1090
        %v1113 = vmul.f32 %v1080, %v1090
        %v1114 = vmul.f32 %v1081, %v1090
        %v1115 = vmul.f32 %v1082, %v1090
        %v1116 = vmul.f32 %v1083, %v1090
        %v1117 = vmul.f32 %v1084, %v1090
        %v1118 = vmul.f32 %v1085, %v1090
        %v1119 = vmul.f32 %v1086, %v1090
        %v1120 = vmul.f32 %v1087, %v1090
        %v1121 = vmul.f32 %v1088, %v1090
        %v1122 = vmul.f32 %v1089, %v1090
        %v1123 = vadd.f32 %v1091, 0.0
        %v1124 = vadd.f32 %v1092, 0.0
        %v1125 = vadd.f32 %v1093, 0.0
        %v1126 = vadd.f32 %v1094, 0.0
        %v1127 = vadd.f32 %v1095, 0.0
        %v1128 = vadd.f32 %v1096, 0.0
        %v1129 = vadd.f32 %v1097, 0.0
        %v1130 = vadd.f32 %v1098, 0.0
        %v1131 = vadd.f32 %v1099, 0.0
        %v1132 = vadd.f32 %v1100, 0.0
        %v1133 = vadd.f32 %v1101, 0.0
        %v1134 = vadd.f32 %v1102, 0.0
        %v1135 = vadd.f32 %v1103, 0.0
        %v1136 = vadd.f32 %v1104, 0.0
        %v1137 = vadd.f32 %v1105, 0.0
        %v1138 = vadd.f32 %v1106, 0.0
        %v1139 = vadd.f32 %v1107, 0.0
        %v1140 = vadd.f32 %v1108, 0.0
        %v1141 = vadd.f32 %v1109, 0.0
        %v1142 = vadd.f32 %v1110, 0.0
        %v1143 = vadd.f32 %v1111, 0.0
        %v1144 = vadd.f32 %v1112, 0.0
        %v1145 = vadd.f32 %v1113, 0.0
        %v1146 = vadd.f32 %v1114, 0.0
        %v1147 = vadd.f32 %v1115, 0.0
        %v1148 = vadd.f32 %v1116, 0.0
        %v1149 = vadd.f32 %v1117, 0.0
        %v1150 = vadd.f32 %v1118, 0.0
        %v1151 = vadd.f32 %v1119, 0.0
        %v1152 = vadd.f32 %v1120, 0.0
        %v1153 = vadd.f32 %v1121, 0.0
        %v1154 = vadd.f32 %v1122, 0.0
        %v1155 = vld [vmem:[#allocation2 + $0x1] sm:$0xff]
        %v1156 = vld [vmem:[#allocation2 + $0x9] sm:$0xff]
        %v1157 = vld [vmem:[#allocation2 + $0x19] sm:$0xff]
        %v1158 = vld [vmem:[#allocation2 + $0x21] sm:$0xff]
        %v1159 = vld [vmem:[#allocation2 + $0x31] sm:$0xff]
        %v1160 = vld [vmem:[#allocation2 + $0x39] sm:$0xff]
        %v1161 = vld [vmem:[#allocation2 + $0x49] sm:$0xff]
        %v1162 = vld [vmem:[#allocation2 + $0x51] sm:$0xff]
        %v1163 = vld [vmem:[#allocation2 + $0x61] sm:$0xff]
        %v1164 = vld [vmem:[#allocation2 + $0x69] sm:$0xff]
        %v1165 = vld [vmem:[#allocation2 + $0x79] sm:$0xff]
        %v1166 = vld [vmem:[#allocation2 + $0x81] sm:$0xff]
        %v1167 = vld [vmem:[#allocation2 + $0x91] sm:$0xff]
        %v1168 = vld [vmem:[#allocation2 + $0x99] sm:$0xff]
        %v1169 = vld [vmem:[#allocation2 + $0xa9] sm:$0xff]
        %v1170 = vld [vmem:[#allocation2 + $0xb1] sm:$0xff]
        %v1171 = vld [vmem:[#allocation2 + $0xc1] sm:$0xff]
        %v1172 = vld [vmem:[#allocation2 + $0xc9] sm:$0xff]
        %v1173 = vld [vmem:[#allocation2 + $0xd9] sm:$0xff]
        %v1174 = vld [vmem:[#allocation2 + $0xe1] sm:$0xff]
        %v1175 = vld [vmem:[#allocation2 + $0xf1] sm:$0xff]
        %v1176 = vld [vmem:[#allocation2 + $0xf9] sm:$0xff]
        %v1177 = vld [vmem:[#allocation2 + $0x109] sm:$0xff]
        %v1178 = vld [vmem:[#allocation2 + $0x111] sm:$0xff]
        %v1179 = vld [vmem:[#allocation2 + $0x121] sm:$0xff]
        %v1180 = vld [vmem:[#allocation2 + $0x129] sm:$0xff]
        %v1181 = vld [vmem:[#allocation2 + $0x139] sm:$0xff]
        %v1182 = vld [vmem:[#allocation2 + $0x141] sm:$0xff]
        %v1183 = vld [vmem:[#allocation2 + $0x151] sm:$0xff]
        %v1184 = vld [vmem:[#allocation2 + $0x159] sm:$0xff]
        %v1185 = vld [vmem:[#allocation2 + $0x169] sm:$0xff]
        %v1186 = vld [vmem:[#allocation2 + $0x171] sm:$0xff]
        %v1187 = vperm.slane %v1056, 1
        %v1188 = vmul.f32 %v1155, %v1187
        %v1189 = vmul.f32 %v1156, %v1187
        %v1190 = vmul.f32 %v1157, %v1187
        %v1191 = vmul.f32 %v1158, %v1187
        %v1192 = vmul.f32 %v1159, %v1187
        %v1193 = vmul.f32 %v1160, %v1187
        %v1194 = vmul.f32 %v1161, %v1187
        %v1195 = vmul.f32 %v1162, %v1187
        %v1196 = vmul.f32 %v1163, %v1187
        %v1197 = vmul.f32 %v1164, %v1187
        %v1198 = vmul.f32 %v1165, %v1187
        %v1199 = vmul.f32 %v1166, %v1187
        %v1200 = vmul.f32 %v1167, %v1187
        %v1201 = vmul.f32 %v1168, %v1187
        %v1202 = vmul.f32 %v1169, %v1187
        %v1203 = vmul.f32 %v1170, %v1187
        %v1204 = vmul.f32 %v1171, %v1187
        %v1205 = vmul.f32 %v1172, %v1187
        %v1206 = vmul.f32 %v1173, %v1187
        %v1207 = vmul.f32 %v1174, %v1187
        %v1208 = vmul.f32 %v1175, %v1187
        %v1209 = vmul.f32 %v1176, %v1187
        %v1210 = vmul.f32 %v1177, %v1187
        %v1211 = vmul.f32 %v1178, %v1187
        %v1212 = vmul.f32 %v1179, %v1187
        %v1213 = vmul.f32 %v1180, %v1187
        %v1214 = vmul.f32 %v1181, %v1187
        %v1215 = vmul.f32 %v1182, %v1187
        %v1216 = vmul.f32 %v1183, %v1187
        %v1217 = vmul.f32 %v1184, %v1187
        %v1218 = vmul.f32 %v1185, %v1187
        %v1219 = vmul.f32 %v1186, %v1187
        %v1220 = vadd.f32 %v1123, %v1188
        %v1221 = vadd.f32 %v1124, %v1189
        %v1222 = vadd.f32 %v1125, %v1190
        %v1223 = vadd.f32 %v1126, %v1191
        %v1224 = vadd.f32 %v1127, %v1192
        %v1225 = vadd.f32 %v1128, %v1193
        %v1226 = vadd.f32 %v1129, %v1194
        %v1227 = vadd.f32 %v1130, %v1195
        %v1228 = vadd.f32 %v1131, %v1196
        %v1229 = vadd.f32 %v1132, %v1197
        %v1230 = vadd.f32 %v1133, %v1198
        %v1231 = vadd.f32 %v1134, %v1199
        %v1232 = vadd.f32 %v1135, %v1200
        %v1233 = vadd.f32 %v1136, %v1201
        %v1234 = vadd.f32 %v1137, %v1202
        %v1235 = vadd.f32 %v1138, %v1203
        %v1236 = vadd.f32 %v1139, %v1204
        %v1237 = vadd.f32 %v1140, %v1205
        %v1238 = vadd.f32 %v1141, %v1206
        %v1239 = vadd.f32 %v1142, %v1207
        %v1240 = vadd.f32 %v1143, %v1208
        %v1241 = vadd.f32 %v1144, %v1209
        %v1242 = vadd.f32 %v1145, %v1210
        %v1243 = vadd.f32 %v1146, %v1211
        %v1244 = vadd.f32 %v1147, %v1212
        %v1245 = vadd.f32 %v1148, %v1213
        %v1246 = vadd.f32 %v1149, %v1214
        %v1247 = vadd.f32 %v1150, %v1215
        %v1248 = vadd.f32 %v1151, %v1216
        %v1249 = vadd.f32 %v1152, %v1217
        %v1250 = vadd.f32 %v1153, %v1218
        %v1251 = vadd.f32 %v1154, %v1219
        %v1252 = vld [vmem:[#allocation2 + $0x2] sm:$0xff]
        %v1253 = vld [vmem:[#allocation2 + $0xa] sm:$0xff]
        %v1254 = vld [vmem:[#allocation2 + $0x1a] sm:$0xff]
        %v1255 = vld [vmem:[#allocation2 + $0x22] sm:$0xff]
        %v1256 = vld [vmem:[#allocation2 + $0x32] sm:$0xff]
        %v1257 = vld [vmem:[#allocation2 + $0x3a] sm:$0xff]
        %v1258 = vld [vmem:[#allocation2 + $0x4a] sm:$0xff]
        %v1259 = vld [vmem:[#allocation2 + $0x52] sm:$0xff]
        %v1260 = vld [vmem:[#allocation2 + $0x62] sm:$0xff]
        %v1261 = vld [vmem:[#allocation2 + $0x6a] sm:$0xff]
        %v1262 = vld [vmem:[#allocation2 + $0x7a] sm:$0xff]
        %v1263 = vld [vmem:[#allocation2 + $0x82] sm:$0xff]
        %v1264 = vld [vmem:[#allocation2 + $0x92] sm:$0xff]
        %v1265 = vld [vmem:[#allocation2 + $0x9a] sm:$0xff]
        %v1266 = vld [vmem:[#allocation2 + $0xaa] sm:$0xff]
        %v1267 = vld [vmem:[#allocation2 + $0xb2] sm:$0xff]
        %v1268 = vld [vmem:[#allocation2 + $0xc2] sm:$0xff]
        %v1269 = vld [vmem:[#allocation2 + $0xca] sm:$0xff]
        %v1270 = vld [vmem:[#allocation2 + $0xda] sm:$0xff]
        %v1271 = vld [vmem:[#allocation2 + $0xe2] sm:$0xff]
        %v1272 = vld [vmem:[#allocation2 + $0xf2] sm:$0xff]
        %v1273 = vld [vmem:[#allocation2 + $0xfa] sm:$0xff]
        %v1274 = vld [vmem:[#allocation2 + $0x10a] sm:$0xff]
        %v1275 = vld [vmem:[#allocation2 + $0x112] sm:$0xff]
        %v1276 = vld [vmem:[#allocation2 + $0x122] sm:$0xff]
        %v1277 = vld [vmem:[#allocation2 + $0x12a] sm:$0xff]
        %v1278 = vld [vmem:[#allocation2 + $0x13a] sm:$0xff]
        %v1279 = vld [vmem:[#allocation2 + $0x142] sm:$0xff]
        %v1280 = vld [vmem:[#allocation2 + $0x152] sm:$0xff]
        %v1281 = vld [vmem:[#allocation2 + $0x15a] sm:$0xff]
        %v1282 = vld [vmem:[#allocation2 + $0x16a] sm:$0xff]
        %v1283 = vld [vmem:[#allocation2 + $0x172] sm:$0xff]
        %v1284 = vperm.slane %v1056, 2
        %v1285 = vmul.f32 %v1252, %v1284
        %v1286 = vmul.f32 %v1253, %v1284
        %v1287 = vmul.f32 %v1254, %v1284
        %v1288 = vmul.f32 %v1255, %v1284
        %v1289 = vmul.f32 %v1256, %v1284
        %v1290 = vmul.f32 %v1257, %v1284
        %v1291 = vmul.f32 %v1258, %v1284
        %v1292 = vmul.f32 %v1259, %v1284
        %v1293 = vmul.f32 %v1260, %v1284
        %v1294 = vmul.f32 %v1261, %v1284
        %v1295 = vmul.f32 %v1262, %v1284
        %v1296 = vmul.f32 %v1263, %v1284
        %v1297 = vmul.f32 %v1264, %v1284
        %v1298 = vmul.f32 %v1265, %v1284
        %v1299 = vmul.f32 %v1266, %v1284
        %v1300 = vmul.f32 %v1267, %v1284
        %v1301 = vmul.f32 %v1268, %v1284
        %v1302 = vmul.f32 %v1269, %v1284
        %v1303 = vmul.f32 %v1270, %v1284
        %v1304 = vmul.f32 %v1271, %v1284
        %v1305 = vmul.f32 %v1272, %v1284
        %v1306 = vmul.f32 %v1273, %v1284
        %v1307 = vmul.f32 %v1274, %v1284
        %v1308 = vmul.f32 %v1275, %v1284
        %v1309 = vmul.f32 %v1276, %v1284
        %v1310 = vmul.f32 %v1277, %v1284
        %v1311 = vmul.f32 %v1278, %v1284
        %v1312 = vmul.f32 %v1279, %v1284
        %v1313 = vmul.f32 %v1280, %v1284
        %v1314 = vmul.f32 %v1281, %v1284
        %v1315 = vmul.f32 %v1282, %v1284
        %v1316 = vmul.f32 %v1283, %v1284
        %v1317 = vadd.f32 %v1220, %v1285
        %v1318 = vadd.f32 %v1221, %v1286
        %v1319 = vadd.f32 %v1222, %v1287
        %v1320 = vadd.f32 %v1223, %v1288
        %v1321 = vadd.f32 %v1224, %v1289
        %v1322 = vadd.f32 %v1225, %v1290
        %v1323 = vadd.f32 %v1226, %v1291
        %v1324 = vadd.f32 %v1227, %v1292
        %v1325 = vadd.f32 %v1228, %v1293
        %v1326 = vadd.f32 %v1229, %v1294
        %v1327 = vadd.f32 %v1230, %v1295
        %v1328 = vadd.f32 %v1231, %v1296
        %v1329 = vadd.f32 %v1232, %v1297
        %v1330 = vadd.f32 %v1233, %v1298
        %v1331 = vadd.f32 %v1234, %v1299
        %v1332 = vadd.f32 %v1235, %v1300
        %v1333 = vadd.f32 %v1236, %v1301
        %v1334 = vadd.f32 %v1237, %v1302
        %v1335 = vadd.f32 %v1238, %v1303
        %v1336 = vadd.f32 %v1239, %v1304
        %v1337 = vadd.f32 %v1240, %v1305
        %v1338 = vadd.f32 %v1241, %v1306
        %v1339 = vadd.f32 %v1242, %v1307
        %v1340 = vadd.f32 %v1243, %v1308
        %v1341 = vadd.f32 %v1244, %v1309
        %v1342 = vadd.f32 %v1245, %v1310
        %v1343 = vadd.f32 %v1246, %v1311
        %v1344 = vadd.f32 %v1247, %v1312
        %v1345 = vadd.f32 %v1248, %v1313
        %v1346 = vadd.f32 %v1249, %v1314
        %v1347 = vadd.f32 %v1250, %v1315
        %v1348 = vadd.f32 %v1251, %v1316
        %v1349 = vld [vmem:[%s1023] sm:$0xff]
        %v1350 = vld [vmem:[%s1023 + $0x8] sm:$0xff]
        %v1351 = vld [vmem:[%s1023 + $0x18] sm:$0xff]
        %v1352 = vld [vmem:[%s1023 + $0x20] sm:$0xff]
        %v1353 = vld [vmem:[%s1023 + $0x30] sm:$0xff]
        %v1354 = vld [vmem:[%s1023 + $0x38] sm:$0xff]
        %v1355 = vld [vmem:[%s1023 + $0x48] sm:$0xff]
        %v1356 = vld [vmem:[%s1023 + $0x50] sm:$0xff]
        %v1357 = vld [vmem:[%s1023 + $0x60] sm:$0xff]
        %v1358 = vld [vmem:[%s1023 + $0x68] sm:$0xff]
        %v1359 = vld [vmem:[%s1023 + $0x78] sm:$0xff]
        %v1360 = vld [vmem:[%s1023 + $0x80] sm:$0xff]
        %v1361 = vld [vmem:[%s1023 + $0x90] sm:$0xff]
        %v1362 = vld [vmem:[%s1023 + $0x98] sm:$0xff]
        %v1363 = vld [vmem:[%s1023 + $0xa8] sm:$0xff]
        %v1364 = vld [vmem:[%s1023 + $0xb0] sm:$0xff]
        %v1365 = vld [vmem:[%s1023 + $0xc0] sm:$0xff]
        %v1366 = vld [vmem:[%s1023 + $0xc8] sm:$0xff]
        %v1367 = vld [vmem:[%s1023 + $0xd8] sm:$0xff]
        %v1368 = vld [vmem:[%s1023 + $0xe0] sm:$0xff]
        %v1369 = vld [vmem:[%s1023 + $0xf0] sm:$0xff]
        %v1370 = vld [vmem:[%s1023 + $0xf8] sm:$0xff]
        %v1371 = vld [vmem:[%s1023 + $0x108] sm:$0xff]
        %v1372 = vld [vmem:[%s1023 + $0x110] sm:$0xff]
        %v1373 = vld [vmem:[%s1023 + $0x120] sm:$0xff]
        %v1374 = vld [vmem:[%s1023 + $0x128] sm:$0xff]
        %v1375 = vld [vmem:[%s1023 + $0x138] sm:$0xff]
        %v1376 = vld [vmem:[%s1023 + $0x140] sm:$0xff]
        %v1377 = vld [vmem:[%s1023 + $0x150] sm:$0xff]
        %v1378 = vld [vmem:[%s1023 + $0x158] sm:$0xff]
        %v1379 = vld [vmem:[%s1023 + $0x168] sm:$0xff]
        %v1380 = vld [vmem:[%s1023 + $0x170] sm:$0xff]
        %v1381 = vperm.slane %v1056, 3
        %v1382 = vmul.f32 %v1349, %v1381
        %v1383 = vmul.f32 %v1350, %v1381
        %v1384 = vmul.f32 %v1351, %v1381
        %v1385 = vmul.f32 %v1352, %v1381
        %v1386 = vmul.f32 %v1353, %v1381
        %v1387 = vmul.f32 %v1354, %v1381
        %v1388 = vmul.f32 %v1355, %v1381
        %v1389 = vmul.f32 %v1356, %v1381
        %v1390 = vmul.f32 %v1357, %v1381
        %v1391 = vmul.f32 %v1358, %v1381
        %v1392 = vmul.f32 %v1359, %v1381
        %v1393 = vmul.f32 %v1360, %v1381
        %v1394 = vmul.f32 %v1361, %v1381
        %v1395 = vmul.f32 %v1362, %v1381
        %v1396 = vmul.f32 %v1363, %v1381
        %v1397 = vmul.f32 %v1364, %v1381
        %v1398 = vmul.f32 %v1365, %v1381
        %v1399 = vmul.f32 %v1366, %v1381
        %v1400 = vmul.f32 %v1367, %v1381
        %v1401 = vmul.f32 %v1368, %v1381
        %v1402 = vmul.f32 %v1369, %v1381
        %v1403 = vmul.f32 %v1370, %v1381
        %v1404 = vmul.f32 %v1371, %v1381
        %v1405 = vmul.f32 %v1372, %v1381
        %v1406 = vmul.f32 %v1373, %v1381
        %v1407 = vmul.f32 %v1374, %v1381
        %v1408 = vmul.f32 %v1375, %v1381
        %v1409 = vmul.f32 %v1376, %v1381
        %v1410 = vmul.f32 %v1377, %v1381
        %v1411 = vmul.f32 %v1378, %v1381
        %v1412 = vmul.f32 %v1379, %v1381
        %v1413 = vmul.f32 %v1380, %v1381
        %v1414 = vadd.f32 %v1317, %v1382
        %v1415 = vadd.f32 %v1318, %v1383
        %v1416 = vadd.f32 %v1319, %v1384
        %v1417 = vadd.f32 %v1320, %v1385
        %v1418 = vadd.f32 %v1321, %v1386
        %v1419 = vadd.f32 %v1322, %v1387
        %v1420 = vadd.f32 %v1323, %v1388
        %v1421 = vadd.f32 %v1324, %v1389
        %v1422 = vadd.f32 %v1325, %v1390
        %v1423 = vadd.f32 %v1326, %v1391
        %v1424 = vadd.f32 %v1327, %v1392
        %v1425 = vadd.f32 %v1328, %v1393
        %v1426 = vadd.f32 %v1329, %v1394
        %v1427 = vadd.f32 %v1330, %v1395
        %v1428 = vadd.f32 %v1331, %v1396
        %v1429 = vadd.f32 %v1332, %v1397
        %v1430 = vadd.f32 %v1333, %v1398
        %v1431 = vadd.f32 %v1334, %v1399
        %v1432 = vadd.f32 %v1335, %v1400
        %v1433 = vadd.f32 %v1336, %v1401
        %v1434 = vadd.f32 %v1337, %v1402
        %v1435 = vadd.f32 %v1338, %v1403
        %v1436 = vadd.f32 %v1339, %v1404
        %v1437 = vadd.f32 %v1340, %v1405
        %v1438 = vadd.f32 %v1341, %v1406
        %v1439 = vadd.f32 %v1342, %v1407
        %v1440 = vadd.f32 %v1343, %v1408
        %v1441 = vadd.f32 %v1344, %v1409
        %v1442 = vadd.f32 %v1345, %v1410
        %v1443 = vadd.f32 %v1346, %v1411
        %v1444 = vadd.f32 %v1347, %v1412
        %v1445 = vadd.f32 %v1348, %v1413
        %v1446 = vld [vmem:[%s1023 + $0x1] sm:$0xff]
        %v1447 = vld [vmem:[%s1023 + $0x9] sm:$0xff]
        %v1448 = vld [vmem:[%s1023 + $0x19] sm:$0xff]
        %v1449 = vld [vmem:[%s1023 + $0x21] sm:$0xff]
        %v1450 = vld [vmem:[%s1023 + $0x31] sm:$0xff]
        %v1451 = vld [vmem:[%s1023 + $0x39] sm:$0xff]
        %v1452 = vld [vmem:[%s1023 + $0x49] sm:$0xff]
        %v1453 = vld [vmem:[%s1023 + $0x51] sm:$0xff]
        %v1454 = vld [vmem:[%s1023 + $0x61] sm:$0xff]
        %v1455 = vld [vmem:[%s1023 + $0x69] sm:$0xff]
        %v1456 = vld [vmem:[%s1023 + $0x79] sm:$0xff]
        %v1457 = vld [vmem:[%s1023 + $0x81] sm:$0xff]
        %v1458 = vld [vmem:[%s1023 + $0x91] sm:$0xff]
        %v1459 = vld [vmem:[%s1023 + $0x99] sm:$0xff]
        %v1460 = vld [vmem:[%s1023 + $0xa9] sm:$0xff]
        %v1461 = vld [vmem:[%s1023 + $0xb1] sm:$0xff]
        %v1462 = vld [vmem:[%s1023 + $0xc1] sm:$0xff]
        %v1463 = vld [vmem:[%s1023 + $0xc9] sm:$0xff]
        %v1464 = vld [vmem:[%s1023 + $0xd9] sm:$0xff]
        %v1465 = vld [vmem:[%s1023 + $0xe1] sm:$0xff]
        %v1466 = vld [vmem:[%s1023 + $0xf1] sm:$0xff]
        %v1467 = vld [vmem:[%s1023 + $0xf9] sm:$0xff]
        %v1468 = vld [vmem:[%s1023 + $0x109] sm:$0xff]
        %v1469 = vld [vmem:[%s1023 + $0x111] sm:$0xff]
        %v1470 = vld [vmem:[%s1023 + $0x121] sm:$0xff]
        %v1471 = vld [vmem:[%s1023 + $0x129] sm:$0xff]
        %v1472 = vld [vmem:[%s1023 + $0x139] sm:$0xff]
        %v1473 = vld [vmem:[%s1023 + $0x141] sm:$0xff]
        %v1474 = vld [vmem:[%s1023 + $0x151] sm:$0xff]
        %v1475 = vld [vmem:[%s1023 + $0x159] sm:$0xff]
        %v1476 = vld [vmem:[%s1023 + $0x169] sm:$0xff]
        %v1477 = vld [vmem:[%s1023 + $0x171] sm:$0xff]
        %v1478 = vperm.slane %v1056, 4
        %v1479 = vmul.f32 %v1446, %v1478
        %v1480 = vmul.f32 %v1447, %v1478
        %v1481 = vmul.f32 %v1448, %v1478
        %v1482 = vmul.f32 %v1449, %v1478
        %v1483 = vmul.f32 %v1450, %v1478
        %v1484 = vmul.f32 %v1451, %v1478
        %v1485 = vmul.f32 %v1452, %v1478
        %v1486 = vmul.f32 %v1453, %v1478
        %v1487 = vmul.f32 %v1454, %v1478
        %v1488 = vmul.f32 %v1455, %v1478
        %v1489 = vmul.f32 %v1456, %v1478
        %v1490 = vmul.f32 %v1457, %v1478
        %v1491 = vmul.f32 %v1458, %v1478
        %v1492 = vmul.f32 %v1459, %v1478
        %v1493 = vmul.f32 %v1460, %v1478
        %v1494 = vmul.f32 %v1461, %v1478
        %v1495 = vmul.f32 %v1462, %v1478
        %v1496 = vmul.f32 %v1463, %v1478
        %v1497 = vmul.f32 %v1464, %v1478
        %v1498 = vmul.f32 %v1465, %v1478
        %v1499 = vmul.f32 %v1466, %v1478
        %v1500 = vmul.f32 %v1467, %v1478
        %v1501 = vmul.f32 %v1468, %v1478
        %v1502 = vmul.f32 %v1469, %v1478
        %v1503 = vmul.f32 %v1470, %v1478
        %v1504 = vmul.f32 %v1471, %v1478
        %v1505 = vmul.f32 %v1472, %v1478
        %v1506 = vmul.f32 %v1473, %v1478
        %v1507 = vmul.f32 %v1474, %v1478
        %v1508 = vmul.f32 %v1475, %v1478
        %v1509 = vmul.f32 %v1476, %v1478
        %v1510 = vmul.f32 %v1477, %v1478
        %v1511 = vadd.f32 %v1414, %v1479
        %v1512 = vadd.f32 %v1415, %v1480
        %v1513 = vadd.f32 %v1416, %v1481
        %v1514 = vadd.f32 %v1417, %v1482
        %v1515 = vadd.f32 %v1418, %v1483
        %v1516 = vadd.f32 %v1419, %v1484
        %v1517 = vadd.f32 %v1420, %v1485
        %v1518 = vadd.f32 %v1421, %v1486
        %v1519 = vadd.f32 %v1422, %v1487
        %v1520 = vadd.f32 %v1423, %v1488
        %v1521 = vadd.f32 %v1424, %v1489
        %v1522 = vadd.f32 %v1425, %v1490
        %v1523 = vadd.f32 %v1426, %v1491
        %v1524 = vadd.f32 %v1427, %v1492
        %v1525 = vadd.f32 %v1428, %v1493
        %v1526 = vadd.f32 %v1429, %v1494
        %v1527 = vadd.f32 %v1430, %v1495
        %v1528 = vadd.f32 %v1431, %v1496
        %v1529 = vadd.f32 %v1432, %v1497
        %v1530 = vadd.f32 %v1433, %v1498
        %v1531 = vadd.f32 %v1434, %v1499
        %v1532 = vadd.f32 %v1435, %v1500
        %v1533 = vadd.f32 %v1436, %v1501
        %v1534 = vadd.f32 %v1437, %v1502
        %v1535 = vadd.f32 %v1438, %v1503
        %v1536 = vadd.f32 %v1439, %v1504
        %v1537 = vadd.f32 %v1440, %v1505
        %v1538 = vadd.f32 %v1441, %v1506
        %v1539 = vadd.f32 %v1442, %v1507
        %v1540 = vadd.f32 %v1443, %v1508
        %v1541 = vadd.f32 %v1444, %v1509
        %v1542 = vadd.f32 %v1445, %v1510
        %v1543 = vld [vmem:[%s1023 + $0x2] sm:$0xff]
        %v1544 = vld [vmem:[%s1023 + $0xa] sm:$0xff]
        %v1545 = vld [vmem:[%s1023 + $0x1a] sm:$0xff]
        %v1546 = vld [vmem:[%s1023 + $0x22] sm:$0xff]
        %v1547 = vld [vmem:[%s1023 + $0x32] sm:$0xff]
        %v1548 = vld [vmem:[%s1023 + $0x3a] sm:$0xff]
        %v1549 = vld [vmem:[%s1023 + $0x4a] sm:$0xff]
        %v1550 = vld [vmem:[%s1023 + $0x52] sm:$0xff]
        %v1551 = vld [vmem:[%s1023 + $0x62] sm:$0xff]
        %v1552 = vld [vmem:[%s1023 + $0x6a] sm:$0xff]
        %v1553 = vld [vmem:[%s1023 + $0x7a] sm:$0xff]
        %v1554 = vld [vmem:[%s1023 + $0x82] sm:$0xff]
        %v1555 = vld [vmem:[%s1023 + $0x92] sm:$0xff]
        %v1556 = vld [vmem:[%s1023 + $0x9a] sm:$0xff]
        %v1557 = vld [vmem:[%s1023 + $0xaa] sm:$0xff]
        %v1558 = vld [vmem:[%s1023 + $0xb2] sm:$0xff]
        %v1559 = vld [vmem:[%s1023 + $0xc2] sm:$0xff]
        %v1560 = vld [vmem:[%s1023 + $0xca] sm:$0xff]
        %v1561 = vld [vmem:[%s1023 + $0xda] sm:$0xff]
        %v1562 = vld [vmem:[%s1023 + $0xe2] sm:$0xff]
        %v1563 = vld [vmem:[%s1023 + $0xf2] sm:$0xff]
        %v1564 = vld [vmem:[%s1023 + $0xfa] sm:$0xff]
        %v1565 = vld [vmem:[%s1023 + $0x10a] sm:$0xff]
        %v1566 = vld [vmem:[%s1023 + $0x112] sm:$0xff]
        %v1567 = vld [vmem:[%s1023 + $0x122] sm:$0xff]
        %v1568 = vld [vmem:[%s1023 + $0x12a] sm:$0xff]
        %v1569 = vld [vmem:[%s1023 + $0x13a] sm:$0xff]
        %v1570 = vld [vmem:[%s1023 + $0x142] sm:$0xff]
        %v1571 = vld [vmem:[%s1023 + $0x152] sm:$0xff]
        %v1572 = vld [vmem:[%s1023 + $0x15a] sm:$0xff]
        %v1573 = vld [vmem:[%s1023 + $0x16a] sm:$0xff]
        %v1574 = vld [vmem:[%s1023 + $0x172] sm:$0xff]
        %v1575 = vperm.slane %v1056, 5
        %v1576 = vmul.f32 %v1543, %v1575
        %v1577 = vmul.f32 %v1544, %v1575
        %v1578 = vmul.f32 %v1545, %v1575
        %v1579 = vmul.f32 %v1546, %v1575
        %v1580 = vmul.f32 %v1547, %v1575
        %v1581 = vmul.f32 %v1548, %v1575
        %v1582 = vmul.f32 %v1549, %v1575
        %v1583 = vmul.f32 %v1550, %v1575
        %v1584 = vmul.f32 %v1551, %v1575
        %v1585 = vmul.f32 %v1552, %v1575
        %v1586 = vmul.f32 %v1553, %v1575
        %v1587 = vmul.f32 %v1554, %v1575
        %v1588 = vmul.f32 %v1555, %v1575
        %v1589 = vmul.f32 %v1556, %v1575
        %v1590 = vmul.f32 %v1557, %v1575
        %v1591 = vmul.f32 %v1558, %v1575
        %v1592 = vmul.f32 %v1559, %v1575
        %v1593 = vmul.f32 %v1560, %v1575
        %v1594 = vmul.f32 %v1561, %v1575
        %v1595 = vmul.f32 %v1562, %v1575
        %v1596 = vmul.f32 %v1563, %v1575
        %v1597 = vmul.f32 %v1564, %v1575
        %v1598 = vmul.f32 %v1565, %v1575
        %v1599 = vmul.f32 %v1566, %v1575
        %v1600 = vmul.f32 %v1567, %v1575
        %v1601 = vmul.f32 %v1568, %v1575
        %v1602 = vmul.f32 %v1569, %v1575
        %v1603 = vmul.f32 %v1570, %v1575
        %v1604 = vmul.f32 %v1571, %v1575
        %v1605 = vmul.f32 %v1572, %v1575
        %v1606 = vmul.f32 %v1573, %v1575
        %v1607 = vmul.f32 %v1574, %v1575
        %v1608 = vadd.f32 %v1511, %v1576
        %v1609 = vadd.f32 %v1512, %v1577
        %v1610 = vadd.f32 %v1513, %v1578
        %v1611 = vadd.f32 %v1514, %v1579
        %v1612 = vadd.f32 %v1515, %v1580
        %v1613 = vadd.f32 %v1516, %v1581
        %v1614 = vadd.f32 %v1517, %v1582
        %v1615 = vadd.f32 %v1518, %v1583
        %v1616 = vadd.f32 %v1519, %v1584
        %v1617 = vadd.f32 %v1520, %v1585
        %v1618 = vadd.f32 %v1521, %v1586
        %v1619 = vadd.f32 %v1522, %v1587
        %v1620 = vadd.f32 %v1523, %v1588
        %v1621 = vadd.f32 %v1524, %v1589
        %v1622 = vadd.f32 %v1525, %v1590
        %v1623 = vadd.f32 %v1526, %v1591
        %v1624 = vadd.f32 %v1527, %v1592
        %v1625 = vadd.f32 %v1528, %v1593
        %v1626 = vadd.f32 %v1529, %v1594
        %v1627 = vadd.f32 %v1530, %v1595
        %v1628 = vadd.f32 %v1531, %v1596
        %v1629 = vadd.f32 %v1532, %v1597
        %v1630 = vadd.f32 %v1533, %v1598
        %v1631 = vadd.f32 %v1534, %v1599
        %v1632 = vadd.f32 %v1535, %v1600
        %v1633 = vadd.f32 %v1536, %v1601
        %v1634 = vadd.f32 %v1537, %v1602
        %v1635 = vadd.f32 %v1538, %v1603
        %v1636 = vadd.f32 %v1539, %v1604
        %v1637 = vadd.f32 %v1540, %v1605
        %v1638 = vadd.f32 %v1541, %v1606
        %v1639 = vadd.f32 %v1542, %v1607
        %s1640 = scalar_lea.vmem [#allocation2], 48
        %v1641 = vld [vmem:[%s1640] sm:$0xff]
        %v1642 = vld [vmem:[%s1640 + $0x8] sm:$0xff]
        %v1643 = vld [vmem:[%s1640 + $0x18] sm:$0xff]
        %v1644 = vld [vmem:[%s1640 + $0x20] sm:$0xff]
        %v1645 = vld [vmem:[%s1640 + $0x30] sm:$0xff]
        %v1646 = vld [vmem:[%s1640 + $0x38] sm:$0xff]
        %v1647 = vld [vmem:[%s1640 + $0x48] sm:$0xff]
        %v1648 = vld [vmem:[%s1640 + $0x50] sm:$0xff]
        %v1649 = vld [vmem:[%s1640 + $0x60] sm:$0xff]
        %v1650 = vld [vmem:[%s1640 + $0x68] sm:$0xff]
        %v1651 = vld [vmem:[%s1640 + $0x78] sm:$0xff]
        %v1652 = vld [vmem:[%s1640 + $0x80] sm:$0xff]
        %v1653 = vld [vmem:[%s1640 + $0x90] sm:$0xff]
        %v1654 = vld [vmem:[%s1640 + $0x98] sm:$0xff]
        %v1655 = vld [vmem:[%s1640 + $0xa8] sm:$0xff]
        %v1656 = vld [vmem:[%s1640 + $0xb0] sm:$0xff]
        %v1657 = vld [vmem:[%s1640 + $0xc0] sm:$0xff]
        %v1658 = vld [vmem:[%s1640 + $0xc8] sm:$0xff]
        %v1659 = vld [vmem:[%s1640 + $0xd8] sm:$0xff]
        %v1660 = vld [vmem:[%s1640 + $0xe0] sm:$0xff]
        %v1661 = vld [vmem:[%s1640 + $0xf0] sm:$0xff]
        %v1662 = vld [vmem:[%s1640 + $0xf8] sm:$0xff]
        %v1663 = vld [vmem:[%s1640 + $0x108] sm:$0xff]
        %v1664 = vld [vmem:[%s1640 + $0x110] sm:$0xff]
        %v1665 = vld [vmem:[%s1640 + $0x120] sm:$0xff]
        %v1666 = vld [vmem:[%s1640 + $0x128] sm:$0xff]
        %v1667 = vld [vmem:[%s1640 + $0x138] sm:$0xff]
        %v1668 = vld [vmem:[%s1640 + $0x140] sm:$0xff]
        %v1669 = vld [vmem:[%s1640 + $0x150] sm:$0xff]
        %v1670 = vld [vmem:[%s1640 + $0x158] sm:$0xff]
        %v1671 = vld [vmem:[%s1640 + $0x168] sm:$0xff]
        %v1672 = vld [vmem:[%s1640 + $0x170] sm:$0xff]
        %v1673 = vperm.slane %v1056, 6
        %v1674 = vmul.f32 %v1641, %v1673
        %v1675 = vmul.f32 %v1642, %v1673
        %v1676 = vmul.f32 %v1643, %v1673
        %v1677 = vmul.f32 %v1644, %v1673
        %v1678 = vmul.f32 %v1645, %v1673
        %v1679 = vmul.f32 %v1646, %v1673
        %v1680 = vmul.f32 %v1647, %v1673
        %v1681 = vmul.f32 %v1648, %v1673
        %v1682 = vmul.f32 %v1649, %v1673
        %v1683 = vmul.f32 %v1650, %v1673
        %v1684 = vmul.f32 %v1651, %v1673
        %v1685 = vmul.f32 %v1652, %v1673
        %v1686 = vmul.f32 %v1653, %v1673
        %v1687 = vmul.f32 %v1654, %v1673
        %v1688 = vmul.f32 %v1655, %v1673
        %v1689 = vmul.f32 %v1656, %v1673
        %v1690 = vmul.f32 %v1657, %v1673
        %v1691 = vmul.f32 %v1658, %v1673
        %v1692 = vmul.f32 %v1659, %v1673
        %v1693 = vmul.f32 %v1660, %v1673
        %v1694 = vmul.f32 %v1661, %v1673
        %v1695 = vmul.f32 %v1662, %v1673
        %v1696 = vmul.f32 %v1663, %v1673
        %v1697 = vmul.f32 %v1664, %v1673
        %v1698 = vmul.f32 %v1665, %v1673
        %v1699 = vmul.f32 %v1666, %v1673
        %v1700 = vmul.f32 %v1667, %v1673
        %v1701 = vmul.f32 %v1668, %v1673
        %v1702 = vmul.f32 %v1669, %v1673
        %v1703 = vmul.f32 %v1670, %v1673
        %v1704 = vmul.f32 %v1671, %v1673
        %v1705 = vmul.f32 %v1672, %v1673
        %v1706 = vadd.f32 %v1608, %v1674
        %v1707 = vadd.f32 %v1609, %v1675
        %v1708 = vadd.f32 %v1610, %v1676
        %v1709 = vadd.f32 %v1611, %v1677
        %v1710 = vadd.f32 %v1612, %v1678
        %v1711 = vadd.f32 %v1613, %v1679
        %v1712 = vadd.f32 %v1614, %v1680
        %v1713 = vadd.f32 %v1615, %v1681
        %v1714 = vadd.f32 %v1616, %v1682
        %v1715 = vadd.f32 %v1617, %v1683
        %v1716 = vadd.f32 %v1618, %v1684
        %v1717 = vadd.f32 %v1619, %v1685
        %v1718 = vadd.f32 %v1620, %v1686
        %v1719 = vadd.f32 %v1621, %v1687
        %v1720 = vadd.f32 %v1622, %v1688
        %v1721 = vadd.f32 %v1623, %v1689
        %v1722 = vadd.f32 %v1624, %v1690
        %v1723 = vadd.f32 %v1625, %v1691
        %v1724 = vadd.f32 %v1626, %v1692
        %v1725 = vadd.f32 %v1627, %v1693
        %v1726 = vadd.f32 %v1628, %v1694
        %v1727 = vadd.f32 %v1629, %v1695
        %v1728 = vadd.f32 %v1630, %v1696
        %v1729 = vadd.f32 %v1631, %v1697
        %v1730 = vadd.f32 %v1632, %v1698
        %v1731 = vadd.f32 %v1633, %v1699
        %v1732 = vadd.f32 %v1634, %v1700
        %v1733 = vadd.f32 %v1635, %v1701
        %v1734 = vadd.f32 %v1636, %v1702
        %v1735 = vadd.f32 %v1637, %v1703
        %v1736 = vadd.f32 %v1638, %v1704
        %v1737 = vadd.f32 %v1639, %v1705
        %v1738 = vld [vmem:[%s1640 + $0x1] sm:$0xff]
        %v1739 = vld [vmem:[%s1640 + $0x9] sm:$0xff]
        %v1740 = vld [vmem:[%s1640 + $0x19] sm:$0xff]
        %v1741 = vld [vmem:[%s1640 + $0x21] sm:$0xff]
        %v1742 = vld [vmem:[%s1640 + $0x31] sm:$0xff]
        %v1743 = vld [vmem:[%s1640 + $0x39] sm:$0xff]
        %v1744 = vld [vmem:[%s1640 + $0x49] sm:$0xff]
        %v1745 = vld [vmem:[%s1640 + $0x51] sm:$0xff]
        %v1746 = vld [vmem:[%s1640 + $0x61] sm:$0xff]
        %v1747 = vld [vmem:[%s1640 + $0x69] sm:$0xff]
        %v1748 = vld [vmem:[%s1640 + $0x79] sm:$0xff]
        %v1749 = vld [vmem:[%s1640 + $0x81] sm:$0xff]
        %v1750 = vld [vmem:[%s1640 + $0x91] sm:$0xff]
        %v1751 = vld [vmem:[%s1640 + $0x99] sm:$0xff]
        %v1752 = vld [vmem:[%s1640 + $0xa9] sm:$0xff]
        %v1753 = vld [vmem:[%s1640 + $0xb1] sm:$0xff]
        %v1754 = vld [vmem:[%s1640 + $0xc1] sm:$0xff]
        %v1755 = vld [vmem:[%s1640 + $0xc9] sm:$0xff]
        %v1756 = vld [vmem:[%s1640 + $0xd9] sm:$0xff]
        %v1757 = vld [vmem:[%s1640 + $0xe1] sm:$0xff]
        %v1758 = vld [vmem:[%s1640 + $0xf1] sm:$0xff]
        %v1759 = vld [vmem:[%s1640 + $0xf9] sm:$0xff]
        %v1760 = vld [vmem:[%s1640 + $0x109] sm:$0xff]
        %v1761 = vld [vmem:[%s1640 + $0x111] sm:$0xff]
        %v1762 = vld [vmem:[%s1640 + $0x121] sm:$0xff]
        %v1763 = vld [vmem:[%s1640 + $0x129] sm:$0xff]
        %v1764 = vld [vmem:[%s1640 + $0x139] sm:$0xff]
        %v1765 = vld [vmem:[%s1640 + $0x141] sm:$0xff]
        %v1766 = vld [vmem:[%s1640 + $0x151] sm:$0xff]
        %v1767 = vld [vmem:[%s1640 + $0x159] sm:$0xff]
        %v1768 = vld [vmem:[%s1640 + $0x169] sm:$0xff]
        %v1769 = vld [vmem:[%s1640 + $0x171] sm:$0xff]
        %v1770 = vperm.slane %v1056, 7
        %v1771 = vmul.f32 %v1738, %v1770
        %v1772 = vmul.f32 %v1739, %v1770
        %v1773 = vmul.f32 %v1740, %v1770
        %v1774 = vmul.f32 %v1741, %v1770
        %v1775 = vmul.f32 %v1742, %v1770
        %v1776 = vmul.f32 %v1743, %v1770
        %v1777 = vmul.f32 %v1744, %v1770
        %v1778 = vmul.f32 %v1745, %v1770
        %v1779 = vmul.f32 %v1746, %v1770
        %v1780 = vmul.f32 %v1747, %v1770
        %v1781 = vmul.f32 %v1748, %v1770
        %v1782 = vmul.f32 %v1749, %v1770
        %v1783 = vmul.f32 %v1750, %v1770
        %v1784 = vmul.f32 %v1751, %v1770
        %v1785 = vmul.f32 %v1752, %v1770
        %v1786 = vmul.f32 %v1753, %v1770
        %v1787 = vmul.f32 %v1754, %v1770
        %v1788 = vmul.f32 %v1755, %v1770
        %v1789 = vmul.f32 %v1756, %v1770
        %v1790 = vmul.f32 %v1757, %v1770
        %v1791 = vmul.f32 %v1758, %v1770
        %v1792 = vmul.f32 %v1759, %v1770
        %v1793 = vmul.f32 %v1760, %v1770
        %v1794 = vmul.f32 %v1761, %v1770
        %v1795 = vmul.f32 %v1762, %v1770
        %v1796 = vmul.f32 %v1763, %v1770
        %v1797 = vmul.f32 %v1764, %v1770
        %v1798 = vmul.f32 %v1765, %v1770
        %v1799 = vmul.f32 %v1766, %v1770
        %v1800 = vmul.f32 %v1767, %v1770
        %v1801 = vmul.f32 %v1768, %v1770
        %v1802 = vmul.f32 %v1769, %v1770
        %v1803 = vadd.f32 %v1706, %v1771
        %v1804 = vadd.f32 %v1707, %v1772
        %v1805 = vadd.f32 %v1708, %v1773
        %v1806 = vadd.f32 %v1709, %v1774
        %v1807 = vadd.f32 %v1710, %v1775
        %v1808 = vadd.f32 %v1711, %v1776
        %v1809 = vadd.f32 %v1712, %v1777
        %v1810 = vadd.f32 %v1713, %v1778
        %v1811 = vadd.f32 %v1714, %v1779
        %v1812 = vadd.f32 %v1715, %v1780
        %v1813 = vadd.f32 %v1716, %v1781
        %v1814 = vadd.f32 %v1717, %v1782
        %v1815 = vadd.f32 %v1718, %v1783
        %v1816 = vadd.f32 %v1719, %v1784
        %v1817 = vadd.f32 %v1720, %v1785
        %v1818 = vadd.f32 %v1721, %v1786
        %v1819 = vadd.f32 %v1722, %v1787
        %v1820 = vadd.f32 %v1723, %v1788
        %v1821 = vadd.f32 %v1724, %v1789
        %v1822 = vadd.f32 %v1725, %v1790
        %v1823 = vadd.f32 %v1726, %v1791
        %v1824 = vadd.f32 %v1727, %v1792
        %v1825 = vadd.f32 %v1728, %v1793
        %v1826 = vadd.f32 %v1729, %v1794
        %v1827 = vadd.f32 %v1730, %v1795
        %v1828 = vadd.f32 %v1731, %v1796
        %v1829 = vadd.f32 %v1732, %v1797
        %v1830 = vadd.f32 %v1733, %v1798
        %v1831 = vadd.f32 %v1734, %v1799
        %v1832 = vadd.f32 %v1735, %v1800
        %v1833 = vadd.f32 %v1736, %v1801
        %v1834 = vadd.f32 %v1737, %v1802
        %v1835 = vld [vmem:[%s1640 + $0x2] sm:$0xff]
        %v1836 = vld [vmem:[%s1640 + $0xa] sm:$0xff]
        %v1837 = vld [vmem:[%s1640 + $0x1a] sm:$0xff]
        %v1838 = vld [vmem:[%s1640 + $0x22] sm:$0xff]
        %v1839 = vld [vmem:[%s1640 + $0x32] sm:$0xff]
        %v1840 = vld [vmem:[%s1640 + $0x3a] sm:$0xff]
        %v1841 = vld [vmem:[%s1640 + $0x4a] sm:$0xff]
        %v1842 = vld [vmem:[%s1640 + $0x52] sm:$0xff]
        %v1843 = vld [vmem:[%s1640 + $0x62] sm:$0xff]
        %v1844 = vld [vmem:[%s1640 + $0x6a] sm:$0xff]
        %v1845 = vld [vmem:[%s1640 + $0x7a] sm:$0xff]
        %v1846 = vld [vmem:[%s1640 + $0x82] sm:$0xff]
        %v1847 = vld [vmem:[%s1640 + $0x92] sm:$0xff]
        %v1848 = vld [vmem:[%s1640 + $0x9a] sm:$0xff]
        %v1849 = vld [vmem:[%s1640 + $0xaa] sm:$0xff]
        %v1850 = vld [vmem:[%s1640 + $0xb2] sm:$0xff]
        %v1851 = vld [vmem:[%s1640 + $0xc2] sm:$0xff]
        %v1852 = vld [vmem:[%s1640 + $0xca] sm:$0xff]
        %v1853 = vld [vmem:[%s1640 + $0xda] sm:$0xff]
        %v1854 = vld [vmem:[%s1640 + $0xe2] sm:$0xff]
        %v1855 = vld [vmem:[%s1640 + $0xf2] sm:$0xff]
        %v1856 = vld [vmem:[%s1640 + $0xfa] sm:$0xff]
        %v1857 = vld [vmem:[%s1640 + $0x10a] sm:$0xff]
        %v1858 = vld [vmem:[%s1640 + $0x112] sm:$0xff]
        %v1859 = vld [vmem:[%s1640 + $0x122] sm:$0xff]
        %v1860 = vld [vmem:[%s1640 + $0x12a] sm:$0xff]
        %v1861 = vld [vmem:[%s1640 + $0x13a] sm:$0xff]
        %v1862 = vld [vmem:[%s1640 + $0x142] sm:$0xff]
        %v1863 = vld [vmem:[%s1640 + $0x152] sm:$0xff]
        %v1864 = vld [vmem:[%s1640 + $0x15a] sm:$0xff]
        %v1865 = vld [vmem:[%s1640 + $0x16a] sm:$0xff]
        %v1866 = vld [vmem:[%s1640 + $0x172] sm:$0xff]
        %v1867 = vperm.slane %v1057, 0
        %v1868 = vmul.f32 %v1835, %v1867
        %v1869 = vmul.f32 %v1836, %v1867
        %v1870 = vmul.f32 %v1837, %v1867
        %v1871 = vmul.f32 %v1838, %v1867
        %v1872 = vmul.f32 %v1839, %v1867
        %v1873 = vmul.f32 %v1840, %v1867
        %v1874 = vmul.f32 %v1841, %v1867
        %v1875 = vmul.f32 %v1842, %v1867
        %v1876 = vmul.f32 %v1843, %v1867
        %v1877 = vmul.f32 %v1844, %v1867
        %v1878 = vmul.f32 %v1845, %v1867
        %v1879 = vmul.f32 %v1846, %v1867
        %v1880 = vmul.f32 %v1847, %v1867
        %v1881 = vmul.f32 %v1848, %v1867
        %v1882 = vmul.f32 %v1849, %v1867
        %v1883 = vmul.f32 %v1850, %v1867
        %v1884 = vmul.f32 %v1851, %v1867
        %v1885 = vmul.f32 %v1852, %v1867
        %v1886 = vmul.f32 %v1853, %v1867
        %v1887 = vmul.f32 %v1854, %v1867
        %v1888 = vmul.f32 %v1855, %v1867
        %v1889 = vmul.f32 %v1856, %v1867
        %v1890 = vmul.f32 %v1857, %v1867
        %v1891 = vmul.f32 %v1858, %v1867
        %v1892 = vmul.f32 %v1859, %v1867
        %v1893 = vmul.f32 %v1860, %v1867
        %v1894 = vmul.f32 %v1861, %v1867
        %v1895 = vmul.f32 %v1862, %v1867
        %v1896 = vmul.f32 %v1863, %v1867
        %v1897 = vmul.f32 %v1864, %v1867
        %v1898 = vmul.f32 %v1865, %v1867
        %v1899 = vmul.f32 %v1866, %v1867
        %v1900 = vadd.f32 %v1803, %v1868
        %v1901 = vadd.f32 %v1804, %v1869
        %v1902 = vadd.f32 %v1805, %v1870
        %v1903 = vadd.f32 %v1806, %v1871
        %v1904 = vadd.f32 %v1807, %v1872
        %v1905 = vadd.f32 %v1808, %v1873
        %v1906 = vadd.f32 %v1809, %v1874
        %v1907 = vadd.f32 %v1810, %v1875
        %v1908 = vadd.f32 %v1811, %v1876
        %v1909 = vadd.f32 %v1812, %v1877
        %v1910 = vadd.f32 %v1813, %v1878
        %v1911 = vadd.f32 %v1814, %v1879
        %v1912 = vadd.f32 %v1815, %v1880
        %v1913 = vadd.f32 %v1816, %v1881
        %v1914 = vadd.f32 %v1817, %v1882
        %v1915 = vadd.f32 %v1818, %v1883
        %v1916 = vadd.f32 %v1819, %v1884
        %v1917 = vadd.f32 %v1820, %v1885
        %v1918 = vadd.f32 %v1821, %v1886
        %v1919 = vadd.f32 %v1822, %v1887
        %v1920 = vadd.f32 %v1823, %v1888
        %v1921 = vadd.f32 %v1824, %v1889
        %v1922 = vadd.f32 %v1825, %v1890
        %v1923 = vadd.f32 %v1826, %v1891
        %v1924 = vadd.f32 %v1827, %v1892
        %v1925 = vadd.f32 %v1828, %v1893
        %v1926 = vadd.f32 %v1829, %v1894
        %v1927 = vadd.f32 %v1830, %v1895
        %v1928 = vadd.f32 %v1831, %v1896
        %v1929 = vadd.f32 %v1832, %v1897
        %v1930 = vadd.f32 %v1833, %v1898
        %v1931 = vadd.f32 %v1834, %v1899
        %v1932 = vld [vmem:[%s4] sm:$0x1]
        %v1934 = vperm.slane %v1932, 0
        %v1936 = vadd.f32 %v1900, %v1934
        %v1937 = vadd.f32 %v1901, %v1934
        %v1938 = vadd.f32 %v1902, %v1934
        %v1939 = vadd.f32 %v1903, %v1934
        %v1940 = vadd.f32 %v1904, %v1934
        %v1941 = vadd.f32 %v1905, %v1934
        %v1942 = vadd.f32 %v1906, %v1934
        %v1943 = vadd.f32 %v1907, %v1934
        %v1944 = vadd.f32 %v1908, %v1934
        %v1945 = vadd.f32 %v1909, %v1934
        %v1946 = vadd.f32 %v1910, %v1934
        %v1947 = vadd.f32 %v1911, %v1934
        %v1948 = vadd.f32 %v1912, %v1934
        %v1949 = vadd.f32 %v1913, %v1934
        %v1950 = vadd.f32 %v1914, %v1934
        %v1951 = vadd.f32 %v1915, %v1934
        %v1952 = vadd.f32 %v1916, %v1934
        %v1953 = vadd.f32 %v1917, %v1934
        %v1954 = vadd.f32 %v1918, %v1934
        %v1955 = vadd.f32 %v1919, %v1934
        %v1956 = vadd.f32 %v1920, %v1934
        %v1957 = vadd.f32 %v1921, %v1934
        %v1958 = vadd.f32 %v1922, %v1934
        %v1959 = vadd.f32 %v1923, %v1934
        %v1960 = vadd.f32 %v1924, %v1934
        %v1961 = vadd.f32 %v1925, %v1934
        %v1962 = vadd.f32 %v1926, %v1934
        %v1963 = vadd.f32 %v1927, %v1934
        %v1964 = vadd.f32 %v1928, %v1934
        %v1965 = vadd.f32 %v1929, %v1934
        %v1966 = vadd.f32 %v1930, %v1934
        %v1967 = vadd.f32 %v1931, %v1934
        %v1968 = vsub.f32 0.0, %v1936
        %v1969 = vsub.f32 0.0, %v1937
        %v1970 = vsub.f32 0.0, %v1938
        %v1971 = vsub.f32 0.0, %v1939
        %v1972 = vsub.f32 0.0, %v1940
        %v1973 = vsub.f32 0.0, %v1941
        %v1974 = vsub.f32 0.0, %v1942
        %v1975 = vsub.f32 0.0, %v1943
        %v1976 = vsub.f32 0.0, %v1944
        %v1977 = vsub.f32 0.0, %v1945
        %v1978 = vsub.f32 0.0, %v1946
        %v1979 = vsub.f32 0.0, %v1947
        %v1980 = vsub.f32 0.0, %v1948
        %v1981 = vsub.f32 0.0, %v1949
        %v1982 = vsub.f32 0.0, %v1950
        %v1983 = vsub.f32 0.0, %v1951
        %v1984 = vsub.f32 0.0, %v1952
        %v1985 = vsub.f32 0.0, %v1953
        %v1986 = vsub.f32 0.0, %v1954
        %v1987 = vsub.f32 0.0, %v1955
        %v1988 = vsub.f32 0.0, %v1956
        %v1989 = vsub.f32 0.0, %v1957
        %v1990 = vsub.f32 0.0, %v1958
        %v1991 = vsub.f32 0.0, %v1959
        %v1992 = vsub.f32 0.0, %v1960
        %v1993 = vsub.f32 0.0, %v1961
        %v1994 = vsub.f32 0.0, %v1962
        %v1995 = vsub.f32 0.0, %v1963
        %v1996 = vsub.f32 0.0, %v1964
        %v1997 = vsub.f32 0.0, %v1965
        %v1998 = vsub.f32 0.0, %v1966
        %v1999 = vsub.f32 0.0, %v1967
        %v2000 = vmul.f32 %v1968, 1.442695
        %v2001 = vpow.pop %v2000
        %v2002 = vmul.f32 %v1969, 1.442695
        %v2003 = vpow.pop %v2002
        %v2004 = vmul.f32 %v1970, 1.442695
        %v2005 = vpow.pop %v2004
        %v2006 = vmul.f32 %v1971, 1.442695
        %v2007 = vpow.pop %v2006
        %v2008 = vmul.f32 %v1972, 1.442695
        %v2009 = vpow.pop %v2008
        %v2010 = vmul.f32 %v1973, 1.442695
        %v2011 = vpow.pop %v2010
        %v2012 = vmul.f32 %v1974, 1.442695
        %v2013 = vpow.pop %v2012
        %v2014 = vmul.f32 %v1975, 1.442695
        %v2015 = vpow.pop %v2014
        %v2016 = vmul.f32 %v1976, 1.442695
        %v2017 = vpow.pop %v2016
        %v2018 = vmul.f32 %v1977, 1.442695
        %v2019 = vpow.pop %v2018
        %v2020 = vmul.f32 %v1978, 1.442695
        %v2021 = vpow.pop %v2020
        %v2022 = vmul.f32 %v1979, 1.442695
        %v2023 = vpow.pop %v2022
        %v2024 = vmul.f32 %v1980, 1.442695
        %v2025 = vpow.pop %v2024
        %v2026 = vmul.f32 %v1981, 1.442695
        %v2027 = vpow.pop %v2026
        %v2028 = vmul.f32 %v1982, 1.442695
        %v2029 = vpow.pop %v2028
        %v2030 = vmul.f32 %v1983, 1.442695
        %v2031 = vpow.pop %v2030
        %v2032 = vmul.f32 %v1984, 1.442695
        %v2033 = vpow.pop %v2032
        %v2034 = vmul.f32 %v1985, 1.442695
        %v2035 = vpow.pop %v2034
        %v2036 = vmul.f32 %v1986, 1.442695
        %v2037 = vpow.pop %v2036
        %v2038 = vmul.f32 %v1987, 1.442695
        %v2039 = vpow.pop %v2038
        %v2040 = vmul.f32 %v1988, 1.442695
        %v2041 = vpow.pop %v2040
        %v2042 = vmul.f32 %v1989, 1.442695
        %v2043 = vpow.pop %v2042
        %v2044 = vmul.f32 %v1990, 1.442695
        %v2045 = vpow.pop %v2044
        %v2046 = vmul.f32 %v1991, 1.442695
        %v2047 = vpow.pop %v2046
        %v2048 = vmul.f32 %v1992, 1.442695
        %v2049 = vpow.pop %v2048
        %v2050 = vmul.f32 %v1993, 1.442695
        %v2051 = vpow.pop %v2050
        %v2052 = vmul.f32 %v1994, 1.442695
        %v2053 = vpow.pop %v2052
        %v2054 = vmul.f32 %v1995, 1.442695
        %v2055 = vpow.pop %v2054
        %v2056 = vmul.f32 %v1996, 1.442695
        %v2057 = vpow.pop %v2056
        %v2058 = vmul.f32 %v1997, 1.442695
        %v2059 = vpow.pop %v2058
        %v2060 = vmul.f32 %v1998, 1.442695
        %v2061 = vpow.pop %v2060
        %v2062 = vmul.f32 %v1999, 1.442695
        %v2063 = vpow.pop %v2062
        %v2064 = vadd.f32 %v2001, 1.0
        %v2065 = vadd.f32 %v2003, 1.0
        %v2066 = vadd.f32 %v2005, 1.0
        %v2067 = vadd.f32 %v2007, 1.0
        %v2068 = vadd.f32 %v2009, 1.0
        %v2069 = vadd.f32 %v2011, 1.0
        %v2070 = vadd.f32 %v2013, 1.0
        %v2071 = vadd.f32 %v2015, 1.0
        %v2072 = vadd.f32 %v2017, 1.0
        %v2073 = vadd.f32 %v2019, 1.0
        %v2074 = vadd.f32 %v2021, 1.0
        %v2075 = vadd.f32 %v2023, 1.0
        %v2076 = vadd.f32 %v2025, 1.0
        %v2077 = vadd.f32 %v2027, 1.0
        %v2078 = vadd.f32 %v2029, 1.0
        %v2079 = vadd.f32 %v2031, 1.0
        %v2080 = vadd.f32 %v2033, 1.0
        %v2081 = vadd.f32 %v2035, 1.0
        %v2082 = vadd.f32 %v2037, 1.0
        %v2083 = vadd.f32 %v2039, 1.0
        %v2084 = vadd.f32 %v2041, 1.0
        %v2085 = vadd.f32 %v2043, 1.0
        %v2086 = vadd.f32 %v2045, 1.0
        %v2087 = vadd.f32 %v2047, 1.0
        %v2088 = vadd.f32 %v2049, 1.0
        %v2089 = vadd.f32 %v2051, 1.0
        %v2090 = vadd.f32 %v2053, 1.0
        %v2091 = vadd.f32 %v2055, 1.0
        %v2092 = vadd.f32 %v2057, 1.0
        %v2093 = vadd.f32 %v2059, 1.0
        %v2094 = vadd.f32 %v2061, 1.0
        %v2095 = vadd.f32 %v2063, 1.0
        %v2096 = vrcp.pop %v2064
        %v2097 = vrcp.pop %v2065
        %v2098 = vrcp.pop %v2066
        %v2099 = vrcp.pop %v2067
        %v2100 = vrcp.pop %v2068
        %v2101 = vrcp.pop %v2069
        %v2102 = vrcp.pop %v2070
        %v2103 = vrcp.pop %v2071
        %v2104 = vrcp.pop %v2072
        %v2105 = vrcp.pop %v2073
        %v2106 = vrcp.pop %v2074
        %v2107 = vrcp.pop %v2075
        %v2108 = vrcp.pop %v2076
        %v2109 = vrcp.pop %v2077
        %v2110 = vrcp.pop %v2078
        %v2111 = vrcp.pop %v2079
        %v2112 = vrcp.pop %v2080
        %v2113 = vrcp.pop %v2081
        %v2114 = vrcp.pop %v2082
        %v2115 = vrcp.pop %v2083
        %v2116 = vrcp.pop %v2084
        %v2117 = vrcp.pop %v2085
        %v2118 = vrcp.pop %v2086
        %v2119 = vrcp.pop %v2087
        %v2120 = vrcp.pop %v2088
        %v2121 = vrcp.pop %v2089
        %v2122 = vrcp.pop %v2090
        %v2123 = vrcp.pop %v2091
        %v2124 = vrcp.pop %v2092
        %v2125 = vrcp.pop %v2093
        %v2126 = vrcp.pop %v2094
        %v2127 = vrcp.pop %v2095
        %v2128 = vmul.f32 %v1936, %v2096
        %v2129 = vmul.f32 %v1937, %v2097
        %v2130 = vmul.f32 %v1938, %v2098
        %v2131 = vmul.f32 %v1939, %v2099
        %v2132 = vmul.f32 %v1940, %v2100
        %v2133 = vmul.f32 %v1941, %v2101
        %v2134 = vmul.f32 %v1942, %v2102
        %v2135 = vmul.f32 %v1943, %v2103
        %v2136 = vmul.f32 %v1944, %v2104
        %v2137 = vmul.f32 %v1945, %v2105
        %v2138 = vmul.f32 %v1946, %v2106
        %v2139 = vmul.f32 %v1947, %v2107
        %v2140 = vmul.f32 %v1948, %v2108
        %v2141 = vmul.f32 %v1949, %v2109
        %v2142 = vmul.f32 %v1950, %v2110
        %v2143 = vmul.f32 %v1951, %v2111
        %v2144 = vmul.f32 %v1952, %v2112
        %v2145 = vmul.f32 %v1953, %v2113
        %v2146 = vmul.f32 %v1954, %v2114
        %v2147 = vmul.f32 %v1955, %v2115
        %v2148 = vmul.f32 %v1956, %v2116
        %v2149 = vmul.f32 %v1957, %v2117
        %v2150 = vmul.f32 %v1958, %v2118
        %v2151 = vmul.f32 %v1959, %v2119
        %v2152 = vmul.f32 %v1960, %v2120
        %v2153 = vmul.f32 %v1961, %v2121
        %v2154 = vmul.f32 %v1962, %v2122
        %v2155 = vmul.f32 %v1963, %v2123
        %v2156 = vmul.f32 %v1964, %v2124
        %v2157 = vmul.f32 %v1965, %v2125
        %v2158 = vmul.f32 %v1966, %v2126
        %v2159 = vmul.f32 %v1967, %v2127
        %v2160 = vadd.f32 %v2128, %v2129
        %v2161 = vadd.f32 %v2160, %v2130
        %v2162 = vadd.f32 %v2161, %v2131
        %v2163 = vadd.f32 %v2162, %v2132
        %v2164 = vadd.f32 %v2163, %v2133
        %v2165 = vadd.f32 %v2164, %v2134
        %v2166 = vadd.f32 %v2165, %v2135
        %v2167 = vadd.f32 %v2166, %v2136
        %v2168 = vadd.f32 %v2167, %v2137
        %v2169 = vadd.f32 %v2168, %v2138
        %v2170 = vadd.f32 %v2169, %v2139
        %v2171 = vadd.f32 %v2170, %v2140
        %v2172 = vadd.f32 %v2171, %v2141
        %v2173 = vadd.f32 %v2172, %v2142
        %v2174 = vadd.f32 %v2173, %v2143
        %v2175 = vadd.f32 %v2174, %v2144
        %v2176 = vadd.f32 %v2175, %v2145
        %v2177 = vadd.f32 %v2176, %v2146
        %v2178 = vadd.f32 %v2177, %v2147
        %v2179 = vadd.f32 %v2178, %v2148
        %v2180 = vadd.f32 %v2179, %v2149
        %v2181 = vadd.f32 %v2180, %v2150
        %v2182 = vadd.f32 %v2181, %v2151
        %v2183 = vadd.f32 %v2182, %v2152
        %v2184 = vadd.f32 %v2183, %v2153
        %v2185 = vadd.f32 %v2184, %v2154
        %v2186 = vadd.f32 %v2185, %v2155
        %v2187 = vadd.f32 %v2186, %v2156
        %v2188 = vadd.f32 %v2187, %v2157
        %v2189 = vadd.f32 %v2188, %v2158
        %v2190 = vadd.f32 %v2189, %v2159
        %v2191 = vrot.slane %v2190, 4
        %v2192 = vadd.f32 %v2190, %v2191
        %v2193 = vrot.slane %v2192, 2
        %v2194 = vadd.f32 %v2192, %v2193
        %v2195 = vrot.slane %v2194, 1
        %v2196 = vadd.f32 %v2194, %v2195
        %v2197 = vrcp.pop 256.0
        %v2198 = vmul.f32 256.0, %v2197
        %v2199 = vsub.f32 1.0, %v2198
        %v2200 = vmul.f32 %v2197, %v2199
        %v2201 = vadd.f32 %v2197, %v2200
        %vm2202 = vweird.f32 %v2197
        %v2203 = vsel %vm2202, %v2197, %v2201
        %v2204 = vmul.f32 %v2196, %v2203
        %v2205 = vld [vmem:[%s5] sm:$0xff]
        %v2206 = vld [vmem:[%s5 + $0x8] sm:$0xff]
        %v2207 = vld [vmem:[%s5 + $0x10] sm:$0xff]
        %v2208 = vld [vmem:[%s5 + $0x18] sm:$0xff]
        %v2209 = vld [vmem:[%s5 + $0x20] sm:$0xff]
        %v2210 = vld [vmem:[%s5 + $0x28] sm:$0xff]
        %v2211 = vld [vmem:[%s5 + $0x30] sm:$0xff]
        %v2212 = vld [vmem:[%s5 + $0x38] sm:$0xff]
        %v2213 = vld [vmem:[%s5 + $0x40] sm:$0xff]
        %v2214 = vld [vmem:[%s5 + $0x48] sm:$0xff]
        %v2215 = vld [vmem:[%s5 + $0x50] sm:$0xff]
        %v2216 = vld [vmem:[%s5 + $0x58] sm:$0xff]
        %v2217 = vld [vmem:[%s5 + $0x60] sm:$0xff]
        %v2218 = vld [vmem:[%s5 + $0x68] sm:$0xff]
        %v2219 = vld [vmem:[%s5 + $0x70] sm:$0xff]
        %v2220 = vld [vmem:[%s5 + $0x78] sm:$0xff]
        %v2221 = vld [vmem:[%s6] sm:$0x1]
        %2222 = vmatpush.msra.mxu0 %v2220
        %2223 = vmatpush.msra.mxu0 %v2219
        %2224 = vmatpush.msra.mxu0 %v2218
        %2225 = vmatpush.msra.mxu0 %v2217
        %2226 = vmatpush.msra.mxu0 %v2216
        %2227 = vmatpush.msra.mxu0 %v2215
        %2228 = vmatpush.msra.mxu0 %v2214
        %2229 = vmatpush.msra.mxu0 %v2213
        %2230 = vmatpush.msra.mxu0 %v2212
        %2231 = vmatpush.msra.mxu0 %v2211
        %2232 = vmatpush.msra.mxu0 %v2210
        %2233 = vmatpush.msra.mxu0 %v2209
        %2234 = vmatpush.msra.mxu0 %v2208
        %2235 = vmatpush.msra.mxu0 %v2207
        %2236 = vmatpush.msra.mxu0 %v2206
        %2237 = vmatpush.msra.mxu0 %v2205
        %2238 = vmatmul.f32.gmra.mxu0 %v2204
        %v2239 = vpop.f32.mrf.mxu0
        %v2240 = vadd.f32 %v2221, %v2239
        %2241 = vdwg.mxu0
        %v2242 = vsub.f32 0.0, %v2240
        %v2243 = vmul.f32 %v2242, 1.442695
        %v2244 = vpow.pop %v2243
        %v2245 = vadd.f32 %v2244, 1.0
        %v2246 = vrcp.pop %v2245
        %v2247 = vmul.f32 %v2240, %v2246
        %v2248 = vld [vmem:[%s7] sm:$0xff]
        %v2249 = vld [vmem:[%s8] sm:$0x1]
        %vm2250 = vcmask 64512
        %v2252 = vsel %vm2250, %v2247, 0
        %2254 = vmatpush.msra.mxu0 0.0
        %2255 = vmatpush.msra.mxu0 0.0
        %2256 = vmatpush.msra.mxu0 0.0
        %2257 = vmatpush.msra.mxu0 0.0
        %2258 = vmatpush.msra.mxu0 0.0
        %2259 = vmatpush.msra.mxu0 0.0
        %2260 = vmatpush.msra.mxu0 0.0
        %2261 = vmatpush.msra.mxu0 0.0
        %2262 = vmatpush.msra.mxu0 0.0
        %2263 = vmatpush.msra.mxu0 0.0
        %2264 = vmatpush.msra.mxu0 0.0
        %2265 = vmatpush.msra.mxu0 0.0
        %2266 = vmatpush.msra.mxu0 0.0
        %2267 = vmatpush.msra.mxu0 0.0
        %2268 = vmatpush.msra.mxu0 0.0
        %2269 = vmatpush.msra.mxu0 %v2248
        %2270 = vmatmul.f32.gmra.mxu0 %v2252
        %v2271 = vpop.f32.mrf.mxu0
        %v2272 = vadd.f32 %v2249, %v2271
        %2273 = vdwg.mxu0
        %v2274 = vsub.f32 0.0, %v2272
        %v2275 = vmul.f32 %v2274, 1.442695
        %v2276 = vpow.pop %v2275
        %v2277 = vadd.f32 %v2276, 1.0
        %v2278 = vrcp.pop %v2277
        %v2279 = vperm.slane %v2278, 0
        %v2280 = vmul.f32 %v2128, %v2279
        %v2281 = vmul.f32 %v2129, %v2279
        %v2282 = vmul.f32 %v2130, %v2279
        %v2283 = vmul.f32 %v2131, %v2279
        %v2284 = vmul.f32 %v2132, %v2279
        %v2285 = vmul.f32 %v2133, %v2279
        %v2286 = vmul.f32 %v2134, %v2279
        %v2287 = vmul.f32 %v2135, %v2279
        %v2288 = vmul.f32 %v2136, %v2279
        %v2289 = vmul.f32 %v2137, %v2279
        %v2290 = vmul.f32 %v2138, %v2279
        %v2291 = vmul.f32 %v2139, %v2279
        %v2292 = vmul.f32 %v2140, %v2279
        %v2293 = vmul.f32 %v2141, %v2279
        %v2294 = vmul.f32 %v2142, %v2279
        %v2295 = vmul.f32 %v2143, %v2279
        %v2296 = vmul.f32 %v2144, %v2279
        %v2297 = vmul.f32 %v2145, %v2279
        %v2298 = vmul.f32 %v2146, %v2279
        %v2299 = vmul.f32 %v2147, %v2279
        %v2300 = vmul.f32 %v2148, %v2279
        %v2301 = vmul.f32 %v2149, %v2279
        %v2302 = vmul.f32 %v2150, %v2279
        %v2303 = vmul.f32 %v2151, %v2279
        %v2304 = vmul.f32 %v2152, %v2279
        %v2305 = vmul.f32 %v2153, %v2279
        %v2306 = vmul.f32 %v2154, %v2279
        %v2307 = vmul.f32 %v2155, %v2279
        %v2308 = vmul.f32 %v2156, %v2279
        %v2309 = vmul.f32 %v2157, %v2279
        %v2310 = vmul.f32 %v2158, %v2279
        %v2311 = vmul.f32 %v2159, %v2279
        %v2312 = vpack.c.bf16 %v2281, %v2280
        %v2313 = vpack.c.bf16 %v2283, %v2282
        %v2314 = vpack.c.bf16 %v2285, %v2284
        %v2315 = vpack.c.bf16 %v2287, %v2286
        %v2316 = vpack.c.bf16 %v2289, %v2288
        %v2317 = vpack.c.bf16 %v2291, %v2290
        %v2318 = vpack.c.bf16 %v2293, %v2292
        %v2319 = vpack.c.bf16 %v2295, %v2294
        %v2320 = vpack.c.bf16 %v2297, %v2296
        %v2321 = vpack.c.bf16 %v2299, %v2298
        %v2322 = vpack.c.bf16 %v2301, %v2300
        %v2323 = vpack.c.bf16 %v2303, %v2302
        %v2324 = vpack.c.bf16 %v2305, %v2304
        %v2325 = vpack.c.bf16 %v2307, %v2306
        %v2326 = vpack.c.bf16 %v2309, %v2308
        %v2327 = vpack.c.bf16 %v2311, %v2310
        %v2328 = vld [vmem:[%s9] sm:$0xf]
        %v2329 = vld [vmem:[%s9 + $0x4] sm:$0xf]
        %v2330 = vld [vmem:[%s9 + $0x8] sm:$0xf]
        %v2331 = vld [vmem:[%s9 + $0xc] sm:$0xf]
        %v2332 = vld [vmem:[%s9 + $0x10] sm:$0xf]
        %v2333 = vld [vmem:[%s9 + $0x14] sm:$0xf]
        %v2334 = vld [vmem:[%s9 + $0x18] sm:$0xf]
        %v2335 = vld [vmem:[%s9 + $0x1c] sm:$0xf]
        %v2336 = vld [vmem:[%s9 + $0x20] sm:$0xf]
        %v2337 = vld [vmem:[%s9 + $0x24] sm:$0xf]
        %v2338 = vld [vmem:[%s9 + $0x28] sm:$0xf]
        %v2339 = vld [vmem:[%s9 + $0x2c] sm:$0xf]
        %v2340 = vld [vmem:[%s9 + $0x30] sm:$0xf]
        %v2341 = vld [vmem:[%s9 + $0x34] sm:$0xf]
        %v2342 = vld [vmem:[%s9 + $0x38] sm:$0xf]
        %v2343 = vld [vmem:[%s9 + $0x3c] sm:$0xf]
        %v2344 = vld [vmem:[%s10] sm:$0x1]
        %v2346 = vperm.slane %v2344, 0
        %v2364 = vunpack.c.l.b16 %v2328
        %v2365 = vunpack.c.l.b16 %v2329
        %v2366 = vunpack.c.l.b16 %v2330
        %v2367 = vunpack.c.l.b16 %v2331
        %v2368 = vunpack.c.l.b16 %v2332
        %v2369 = vunpack.c.l.b16 %v2333
        %v2370 = vunpack.c.l.b16 %v2334
        %v2371 = vunpack.c.l.b16 %v2335
        %v2372 = vunpack.c.l.b16 %v2336
        %v2373 = vunpack.c.l.b16 %v2337
        %v2374 = vunpack.c.l.b16 %v2338
        %v2375 = vunpack.c.l.b16 %v2339
        %v2376 = vunpack.c.l.b16 %v2340
        %v2377 = vunpack.c.l.b16 %v2341
        %v2378 = vunpack.c.l.b16 %v2342
        %v2379 = vunpack.c.l.b16 %v2343
        %v2380 = vpack.c.b16 %v2365, %v2364
        %v2381 = vpack.c.b16 %v2367, %v2366
        %v2382 = vpack.c.b16 %v2369, %v2368
        %v2383 = vpack.c.b16 %v2371, %v2370
        %v2384 = vpack.c.b16 %v2373, %v2372
        %v2385 = vpack.c.b16 %v2375, %v2374
        %v2386 = vpack.c.b16 %v2377, %v2376
        %v2387 = vpack.c.b16 %v2379, %v2378
        %2396 = vmatpush.bf16.msra.mxu0 %v2387
        %2397 = vmatpush.bf16.msra.mxu0 %v2386
        %2398 = vmatpush.bf16.msra.mxu0 %v2385
        %2399 = vmatpush.bf16.msra.mxu0 %v2384
        %2400 = vmatpush.bf16.msra.mxu0 %v2383
        %2401 = vmatpush.bf16.msra.mxu0 %v2382
        %2402 = vmatpush.bf16.msra.mxu0 %v2381
        %2403 = vmatpush.bf16.msra.mxu0 %v2380
        %2404 = vmatmul.bf16.gmra.mxu0 %v2312
        %v2405 = vpop.f32.mrf.mxu0
        %v2406 = vadd.f32 %v2346, %v2405
        %v2407 = vpop.f32.mrf.mxu0
        %v2408 = vadd.f32 %v2346, %v2407
        %2409 = vmatmul.bf16.gmra.mxu0 %v2313
        %v2410 = vpop.f32.mrf.mxu0
        %v2411 = vadd.f32 %v2346, %v2410
        %v2412 = vpop.f32.mrf.mxu0
        %v2413 = vadd.f32 %v2346, %v2412
        %2414 = vmatmul.bf16.gmra.mxu0 %v2314
        %v2415 = vpop.f32.mrf.mxu0
        %v2416 = vadd.f32 %v2346, %v2415
        %v2417 = vpop.f32.mrf.mxu0
        %v2418 = vadd.f32 %v2346, %v2417
        %2419 = vmatmul.bf16.gmra.mxu0 %v2315
        %v2420 = vpop.f32.mrf.mxu0
        %v2421 = vadd.f32 %v2346, %v2420
        %v2422 = vpop.f32.mrf.mxu0
        %v2423 = vadd.f32 %v2346, %v2422
        %2424 = vmatmul.bf16.gmra.mxu0 %v2316
        %v2425 = vpop.f32.mrf.mxu0
        %v2426 = vadd.f32 %v2346, %v2425
        %v2427 = vpop.f32.mrf.mxu0
        %v2428 = vadd.f32 %v2346, %v2427
        %2429 = vmatmul.bf16.gmra.mxu0 %v2317
        %v2430 = vpop.f32.mrf.mxu0
        %v2431 = vadd.f32 %v2346, %v2430
        %v2432 = vpop.f32.mrf.mxu0
        %v2433 = vadd.f32 %v2346, %v2432
        %2434 = vmatmul.bf16.gmra.mxu0 %v2318
        %v2435 = vpop.f32.mrf.mxu0
        %v2436 = vadd.f32 %v2346, %v2435
        %v2437 = vpop.f32.mrf.mxu0
        %v2438 = vadd.f32 %v2346, %v2437
        %2439 = vmatmul.bf16.gmra.mxu0 %v2319
        %v2440 = vpop.f32.mrf.mxu0
        %v2441 = vadd.f32 %v2346, %v2440
        %v2442 = vpop.f32.mrf.mxu0
        %v2443 = vadd.f32 %v2346, %v2442
        %2444 = vmatmul.bf16.gmra.mxu0 %v2320
        %v2445 = vpop.f32.mrf.mxu0
        %v2446 = vadd.f32 %v2346, %v2445
        %v2447 = vpop.f32.mrf.mxu0
        %v2448 = vadd.f32 %v2346, %v2447
        %2449 = vmatmul.bf16.gmra.mxu0 %v2321
        %v2450 = vpop.f32.mrf.mxu0
        %v2451 = vadd.f32 %v2346, %v2450
        %v2452 = vpop.f32.mrf.mxu0
        %v2453 = vadd.f32 %v2346, %v2452
        %2454 = vmatmul.bf16.gmra.mxu0 %v2322
        %v2455 = vpop.f32.mrf.mxu0
        %v2456 = vadd.f32 %v2346, %v2455
        %v2457 = vpop.f32.mrf.mxu0
        %v2458 = vadd.f32 %v2346, %v2457
        %2459 = vmatmul.bf16.gmra.mxu0 %v2323
        %v2460 = vpop.f32.mrf.mxu0
        %v2461 = vadd.f32 %v2346, %v2460
        %v2462 = vpop.f32.mrf.mxu0
        %v2463 = vadd.f32 %v2346, %v2462
        %2464 = vmatmul.bf16.gmra.mxu0 %v2324
        %v2465 = vpop.f32.mrf.mxu0
        %v2466 = vadd.f32 %v2346, %v2465
        %v2467 = vpop.f32.mrf.mxu0
        %v2468 = vadd.f32 %v2346, %v2467
        %2469 = vmatmul.bf16.gmra.mxu0 %v2325
        %v2470 = vpop.f32.mrf.mxu0
        %v2471 = vadd.f32 %v2346, %v2470
        %v2472 = vpop.f32.mrf.mxu0
        %v2473 = vadd.f32 %v2346, %v2472
        %2474 = vmatmul.bf16.gmra.mxu0 %v2326
        %v2475 = vpop.f32.mrf.mxu0
        %v2476 = vadd.f32 %v2346, %v2475
        %v2477 = vpop.f32.mrf.mxu0
        %v2478 = vadd.f32 %v2346, %v2477
        %2479 = vmatmul.bf16.gmra.mxu0 %v2327
        %v2480 = vpop.f32.mrf.mxu0
        %v2481 = vadd.f32 %v2346, %v2480
        %v2482 = vpop.f32.mrf.mxu0
        %v2483 = vadd.f32 %v2346, %v2482
        %2484 = vdwg.mxu0
        %v2485 = vunpack.c.l.bf16 %v492
        %v2486 = vunpack.c.l.bf16 %v493
        %v2487 = vunpack.c.l.bf16 %v494
        %v2488 = vunpack.c.l.bf16 %v495
        %v2489 = vunpack.c.l.bf16 %v496
        %v2490 = vunpack.c.l.bf16 %v497
        %v2491 = vunpack.c.l.bf16 %v498
        %v2492 = vunpack.c.l.bf16 %v499
        %v2493 = vunpack.c.l.bf16 %v500
        %v2494 = vunpack.c.l.bf16 %v501
        %v2495 = vunpack.c.l.bf16 %v502
        %v2496 = vunpack.c.l.bf16 %v503
        %v2497 = vunpack.c.l.bf16 %v504
        %v2498 = vunpack.c.l.bf16 %v505
        %v2499 = vunpack.c.l.bf16 %v506
        %v2500 = vunpack.c.l.bf16 %v507
        %v2501 = vunpack.c.l.bf16 %v508
        %v2502 = vunpack.c.l.bf16 %v509
        %v2503 = vunpack.c.l.bf16 %v510
        %v2504 = vunpack.c.l.bf16 %v511
        %v2505 = vunpack.c.l.bf16 %v512
        %v2506 = vunpack.c.l.bf16 %v513
        %v2507 = vunpack.c.l.bf16 %v514
        %v2508 = vunpack.c.l.bf16 %v515
        %v2509 = vunpack.c.l.bf16 %v516
        %v2510 = vunpack.c.l.bf16 %v517
        %v2511 = vunpack.c.l.bf16 %v518
        %v2512 = vunpack.c.l.bf16 %v519
        %v2513 = vunpack.c.l.bf16 %v520
        %v2514 = vunpack.c.l.bf16 %v521
        %v2515 = vunpack.c.l.bf16 %v522
        %v2516 = vunpack.c.l.bf16 %v523
        %v2517 = vadd.f32 %v2406, %v2485
        %v2518 = vadd.f32 %v2408, %v2486
        %v2519 = vadd.f32 %v2411, %v2487
        %v2520 = vadd.f32 %v2413, %v2488
        %v2521 = vadd.f32 %v2416, %v2489
        %v2522 = vadd.f32 %v2418, %v2490
        %v2523 = vadd.f32 %v2421, %v2491
        %v2524 = vadd.f32 %v2423, %v2492
        %v2525 = vadd.f32 %v2426, %v2493
        %v2526 = vadd.f32 %v2428, %v2494
        %v2527 = vadd.f32 %v2431, %v2495
        %v2528 = vadd.f32 %v2433, %v2496
        %v2529 = vadd.f32 %v2436, %v2497
        %v2530 = vadd.f32 %v2438, %v2498
        %v2531 = vadd.f32 %v2441, %v2499
        %v2532 = vadd.f32 %v2443, %v2500
        %v2533 = vadd.f32 %v2446, %v2501
        %v2534 = vadd.f32 %v2448, %v2502
        %v2535 = vadd.f32 %v2451, %v2503
        %v2536 = vadd.f32 %v2453, %v2504
        %v2537 = vadd.f32 %v2456, %v2505
        %v2538 = vadd.f32 %v2458, %v2506
        %v2539 = vadd.f32 %v2461, %v2507
        %v2540 = vadd.f32 %v2463, %v2508
        %v2541 = vadd.f32 %v2466, %v2509
        %v2542 = vadd.f32 %v2468, %v2510
        %v2543 = vadd.f32 %v2471, %v2511
        %v2544 = vadd.f32 %v2473, %v2512
        %v2545 = vadd.f32 %v2476, %v2513
        %v2546 = vadd.f32 %v2478, %v2514
        %v2547 = vadd.f32 %v2481, %v2515
        %v2548 = vadd.f32 %v2483, %v2516
        %v2549 = vpack.c.bf16 %v2518, %v2517
        %v2550 = vpack.c.bf16 %v2520, %v2519
        %v2551 = vpack.c.bf16 %v2522, %v2521
        %v2552 = vpack.c.bf16 %v2524, %v2523
        %v2553 = vpack.c.bf16 %v2526, %v2525
        %v2554 = vpack.c.bf16 %v2528, %v2527
        %v2555 = vpack.c.bf16 %v2530, %v2529
        %v2556 = vpack.c.bf16 %v2532, %v2531
        %v2557 = vpack.c.bf16 %v2534, %v2533
        %v2558 = vpack.c.bf16 %v2536, %v2535
        %v2559 = vpack.c.bf16 %v2538, %v2537
        %v2560 = vpack.c.bf16 %v2540, %v2539
        %v2561 = vpack.c.bf16 %v2542, %v2541
        %v2562 = vpack.c.bf16 %v2544, %v2543
        %v2563 = vpack.c.bf16 %v2546, %v2545
        %v2564 = vpack.c.bf16 %v2548, %v2547
        %v2565 = vld [vmem:[%s11] sm:$0xf]
        %v2566 = vld [vmem:[%s11 + $0x4] sm:$0xf]
        %v2567 = vld [vmem:[%s11 + $0x8] sm:$0xf]
        %v2568 = vld [vmem:[%s11 + $0xc] sm:$0xf]
        %v2569 = vld [vmem:[%s11 + $0x10] sm:$0xf]
        %v2570 = vld [vmem:[%s11 + $0x14] sm:$0xf]
        %v2571 = vld [vmem:[%s11 + $0x18] sm:$0xf]
        %v2572 = vld [vmem:[%s11 + $0x1c] sm:$0xf]
        %v2573 = vld [vmem:[%s11 + $0x20] sm:$0xf]
        %v2574 = vld [vmem:[%s11 + $0x24] sm:$0xf]
        %v2575 = vld [vmem:[%s11 + $0x28] sm:$0xf]
        %v2576 = vld [vmem:[%s11 + $0x2c] sm:$0xf]
        %v2577 = vld [vmem:[%s11 + $0x30] sm:$0xf]
        %v2578 = vld [vmem:[%s11 + $0x34] sm:$0xf]
        %v2579 = vld [vmem:[%s11 + $0x38] sm:$0xf]
        %v2580 = vld [vmem:[%s11 + $0x3c] sm:$0xf]
        %v2581 = vld [vmem:[%s12] sm:$0x1]
        %v2583 = vperm.slane %v2581, 0
        %v2601 = vunpack.c.l.b16 %v2565
        %v2602 = vunpack.c.l.b16 %v2566
        %v2603 = vunpack.c.l.b16 %v2567
        %v2604 = vunpack.c.l.b16 %v2568
        %v2605 = vunpack.c.l.b16 %v2569
        %v2606 = vunpack.c.l.b16 %v2570
        %v2607 = vunpack.c.l.b16 %v2571
        %v2608 = vunpack.c.l.b16 %v2572
        %v2609 = vunpack.c.l.b16 %v2573
        %v2610 = vunpack.c.l.b16 %v2574
        %v2611 = vunpack.c.l.b16 %v2575
        %v2612 = vunpack.c.l.b16 %v2576
        %v2613 = vunpack.c.l.b16 %v2577
        %v2614 = vunpack.c.l.b16 %v2578
        %v2615 = vunpack.c.l.b16 %v2579
        %v2616 = vunpack.c.l.b16 %v2580
        %v2617 = vpack.c.b16 %v2602, %v2601
        %v2618 = vpack.c.b16 %v2604, %v2603
        %v2619 = vpack.c.b16 %v2606, %v2605
        %v2620 = vpack.c.b16 %v2608, %v2607
        %v2621 = vpack.c.b16 %v2610, %v2609
        %v2622 = vpack.c.b16 %v2612, %v2611
        %v2623 = vpack.c.b16 %v2614, %v2613
        %v2624 = vpack.c.b16 %v2616, %v2615
        %2633 = vmatpush.bf16.msra.mxu0 %v2624
        %2634 = vmatpush.bf16.msra.mxu0 %v2623
        %2635 = vmatpush.bf16.msra.mxu0 %v2622
        %2636 = vmatpush.bf16.msra.mxu0 %v2621
        %2637 = vmatpush.bf16.msra.mxu0 %v2620
        %2638 = vmatpush.bf16.msra.mxu0 %v2619
        %2639 = vmatpush.bf16.msra.mxu0 %v2618
        %2640 = vmatpush.bf16.msra.mxu0 %v2617
        %2641 = vmatmul.bf16.gmra.mxu0 %v2549
        %v2642 = vpop.f32.mrf.mxu0
        %v2643 = vadd.f32 %v2583, %v2642
        %v2644 = vpop.f32.mrf.mxu0
        %v2645 = vadd.f32 %v2583, %v2644
        %2646 = vmatmul.bf16.gmra.mxu0 %v2550
        %v2647 = vpop.f32.mrf.mxu0
        %v2648 = vadd.f32 %v2583, %v2647
        %v2649 = vpop.f32.mrf.mxu0
        %v2650 = vadd.f32 %v2583, %v2649
        %2651 = vmatmul.bf16.gmra.mxu0 %v2551
        %v2652 = vpop.f32.mrf.mxu0
        %v2653 = vadd.f32 %v2583, %v2652
        %v2654 = vpop.f32.mrf.mxu0
        %v2655 = vadd.f32 %v2583, %v2654
        %2656 = vmatmul.bf16.gmra.mxu0 %v2552
        %v2657 = vpop.f32.mrf.mxu0
        %v2658 = vadd.f32 %v2583, %v2657
        %v2659 = vpop.f32.mrf.mxu0
        %v2660 = vadd.f32 %v2583, %v2659
        %2661 = vmatmul.bf16.gmra.mxu0 %v2553
        %v2662 = vpop.f32.mrf.mxu0
        %v2663 = vadd.f32 %v2583, %v2662
        %v2664 = vpop.f32.mrf.mxu0
        %v2665 = vadd.f32 %v2583, %v2664
        %2666 = vmatmul.bf16.gmra.mxu0 %v2554
        %v2667 = vpop.f32.mrf.mxu0
        %v2668 = vadd.f32 %v2583, %v2667
        %v2669 = vpop.f32.mrf.mxu0
        %v2670 = vadd.f32 %v2583, %v2669
        %2671 = vmatmul.bf16.gmra.mxu0 %v2555
        %v2672 = vpop.f32.mrf.mxu0
        %v2673 = vadd.f32 %v2583, %v2672
        %v2674 = vpop.f32.mrf.mxu0
        %v2675 = vadd.f32 %v2583, %v2674
        %2676 = vmatmul.bf16.gmra.mxu0 %v2556
        %v2677 = vpop.f32.mrf.mxu0
        %v2678 = vadd.f32 %v2583, %v2677
        %v2679 = vpop.f32.mrf.mxu0
        %v2680 = vadd.f32 %v2583, %v2679
        %2681 = vmatmul.bf16.gmra.mxu0 %v2557
        %v2682 = vpop.f32.mrf.mxu0
        %v2683 = vadd.f32 %v2583, %v2682
        %v2684 = vpop.f32.mrf.mxu0
        %v2685 = vadd.f32 %v2583, %v2684
        %2686 = vmatmul.bf16.gmra.mxu0 %v2558
        %v2687 = vpop.f32.mrf.mxu0
        %v2688 = vadd.f32 %v2583, %v2687
        %v2689 = vpop.f32.mrf.mxu0
        %v2690 = vadd.f32 %v2583, %v2689
        %2691 = vmatmul.bf16.gmra.mxu0 %v2559
        %v2692 = vpop.f32.mrf.mxu0
        %v2693 = vadd.f32 %v2583, %v2692
        %v2694 = vpop.f32.mrf.mxu0
        %v2695 = vadd.f32 %v2583, %v2694
        %2696 = vmatmul.bf16.gmra.mxu0 %v2560
        %v2697 = vpop.f32.mrf.mxu0
        %v2698 = vadd.f32 %v2583, %v2697
        %v2699 = vpop.f32.mrf.mxu0
        %v2700 = vadd.f32 %v2583, %v2699
        %2701 = vmatmul.bf16.gmra.mxu0 %v2561
        %v2702 = vpop.f32.mrf.mxu0
        %v2703 = vadd.f32 %v2583, %v2702
        %v2704 = vpop.f32.mrf.mxu0
        %v2705 = vadd.f32 %v2583, %v2704
        %2706 = vmatmul.bf16.gmra.mxu0 %v2562
        %v2707 = vpop.f32.mrf.mxu0
        %v2708 = vadd.f32 %v2583, %v2707
        %v2709 = vpop.f32.mrf.mxu0
        %v2710 = vadd.f32 %v2583, %v2709
        %2711 = vmatmul.bf16.gmra.mxu0 %v2563
        %v2712 = vpop.f32.mrf.mxu0
        %v2713 = vadd.f32 %v2583, %v2712
        %v2714 = vpop.f32.mrf.mxu0
        %v2715 = vadd.f32 %v2583, %v2714
        %2716 = vmatmul.bf16.gmra.mxu0 %v2564
        %v2717 = vpop.f32.mrf.mxu0
        %v2718 = vadd.f32 %v2583, %v2717
        %v2719 = vpop.f32.mrf.mxu0
        %v2720 = vadd.f32 %v2583, %v2719
        %2721 = vdwg.mxu0
        %v2722 = vsub.f32 0.0, %v2643
        %v2723 = vsub.f32 0.0, %v2645
        %v2724 = vsub.f32 0.0, %v2648
        %v2725 = vsub.f32 0.0, %v2650
        %v2726 = vsub.f32 0.0, %v2653
        %v2727 = vsub.f32 0.0, %v2655
        %v2728 = vsub.f32 0.0, %v2658
        %v2729 = vsub.f32 0.0, %v2660
        %v2730 = vsub.f32 0.0, %v2663
        %v2731 = vsub.f32 0.0, %v2665
        %v2732 = vsub.f32 0.0, %v2668
        %v2733 = vsub.f32 0.0, %v2670
        %v2734 = vsub.f32 0.0, %v2673
        %v2735 = vsub.f32 0.0, %v2675
        %v2736 = vsub.f32 0.0, %v2678
        %v2737 = vsub.f32 0.0, %v2680
        %v2738 = vsub.f32 0.0, %v2683
        %v2739 = vsub.f32 0.0, %v2685
        %v2740 = vsub.f32 0.0, %v2688
        %v2741 = vsub.f32 0.0, %v2690
        %v2742 = vsub.f32 0.0, %v2693
        %v2743 = vsub.f32 0.0, %v2695
        %v2744 = vsub.f32 0.0, %v2698
        %v2745 = vsub.f32 0.0, %v2700
        %v2746 = vsub.f32 0.0, %v2703
        %v2747 = vsub.f32 0.0, %v2705
        %v2748 = vsub.f32 0.0, %v2708
        %v2749 = vsub.f32 0.0, %v2710
        %v2750 = vsub.f32 0.0, %v2713
        %v2751 = vsub.f32 0.0, %v2715
        %v2752 = vsub.f32 0.0, %v2718
        %v2753 = vsub.f32 0.0, %v2720
        %v2754 = vmul.f32 %v2722, 1.442695
        %v2755 = vpow.pop %v2754
        %v2756 = vmul.f32 %v2723, 1.442695
        %v2757 = vpow.pop %v2756
        %v2758 = vmul.f32 %v2724, 1.442695
        %v2759 = vpow.pop %v2758
        %v2760 = vmul.f32 %v2725, 1.442695
        %v2761 = vpow.pop %v2760
        %v2762 = vmul.f32 %v2726, 1.442695
        %v2763 = vpow.pop %v2762
        %v2764 = vmul.f32 %v2727, 1.442695
        %v2765 = vpow.pop %v2764
        %v2766 = vmul.f32 %v2728, 1.442695
        %v2767 = vpow.pop %v2766
        %v2768 = vmul.f32 %v2729, 1.442695
        %v2769 = vpow.pop %v2768
        %v2770 = vmul.f32 %v2730, 1.442695
        %v2771 = vpow.pop %v2770
        %v2772 = vmul.f32 %v2731, 1.442695
        %v2773 = vpow.pop %v2772
        %v2774 = vmul.f32 %v2732, 1.442695
        %v2775 = vpow.pop %v2774
        %v2776 = vmul.f32 %v2733, 1.442695
        %v2777 = vpow.pop %v2776
        %v2778 = vmul.f32 %v2734, 1.442695
        %v2779 = vpow.pop %v2778
        %v2780 = vmul.f32 %v2735, 1.442695
        %v2781 = vpow.pop %v2780
        %v2782 = vmul.f32 %v2736, 1.442695
        %v2783 = vpow.pop %v2782
        %v2784 = vmul.f32 %v2737, 1.442695
        %v2785 = vpow.pop %v2784
        %v2786 = vmul.f32 %v2738, 1.442695
        %v2787 = vpow.pop %v2786
        %v2788 = vmul.f32 %v2739, 1.442695
        %v2789 = vpow.pop %v2788
        %v2790 = vmul.f32 %v2740, 1.442695
        %v2791 = vpow.pop %v2790
        %v2792 = vmul.f32 %v2741, 1.442695
        %v2793 = vpow.pop %v2792
        %v2794 = vmul.f32 %v2742, 1.442695
        %v2795 = vpow.pop %v2794
        %v2796 = vmul.f32 %v2743, 1.442695
        %v2797 = vpow.pop %v2796
        %v2798 = vmul.f32 %v2744, 1.442695
        %v2799 = vpow.pop %v2798
        %v2800 = vmul.f32 %v2745, 1.442695
        %v2801 = vpow.pop %v2800
        %v2802 = vmul.f32 %v2746, 1.442695
        %v2803 = vpow.pop %v2802
        %v2804 = vmul.f32 %v2747, 1.442695
        %v2805 = vpow.pop %v2804
        %v2806 = vmul.f32 %v2748, 1.442695
        %v2807 = vpow.pop %v2806
        %v2808 = vmul.f32 %v2749, 1.442695
        %v2809 = vpow.pop %v2808
        %v2810 = vmul.f32 %v2750, 1.442695
        %v2811 = vpow.pop %v2810
        %v2812 = vmul.f32 %v2751, 1.442695
        %v2813 = vpow.pop %v2812
        %v2814 = vmul.f32 %v2752, 1.442695
        %v2815 = vpow.pop %v2814
        %v2816 = vmul.f32 %v2753, 1.442695
        %v2817 = vpow.pop %v2816
        %v2818 = vadd.f32 %v2755, 1.0
        %v2819 = vadd.f32 %v2757, 1.0
        %v2820 = vadd.f32 %v2759, 1.0
        %v2821 = vadd.f32 %v2761, 1.0
        %v2822 = vadd.f32 %v2763, 1.0
        %v2823 = vadd.f32 %v2765, 1.0
        %v2824 = vadd.f32 %v2767, 1.0
        %v2825 = vadd.f32 %v2769, 1.0
        %v2826 = vadd.f32 %v2771, 1.0
        %v2827 = vadd.f32 %v2773, 1.0
        %v2828 = vadd.f32 %v2775, 1.0
        %v2829 = vadd.f32 %v2777, 1.0
        %v2830 = vadd.f32 %v2779, 1.0
        %v2831 = vadd.f32 %v2781, 1.0
        %v2832 = vadd.f32 %v2783, 1.0
        %v2833 = vadd.f32 %v2785, 1.0
        %v2834 = vadd.f32 %v2787, 1.0
        %v2835 = vadd.f32 %v2789, 1.0
        %v2836 = vadd.f32 %v2791, 1.0
        %v2837 = vadd.f32 %v2793, 1.0
        %v2838 = vadd.f32 %v2795, 1.0
        %v2839 = vadd.f32 %v2797, 1.0
        %v2840 = vadd.f32 %v2799, 1.0
        %v2841 = vadd.f32 %v2801, 1.0
        %v2842 = vadd.f32 %v2803, 1.0
        %v2843 = vadd.f32 %v2805, 1.0
        %v2844 = vadd.f32 %v2807, 1.0
        %v2845 = vadd.f32 %v2809, 1.0
        %v2846 = vadd.f32 %v2811, 1.0
        %v2847 = vadd.f32 %v2813, 1.0
        %v2848 = vadd.f32 %v2815, 1.0
        %v2849 = vadd.f32 %v2817, 1.0
        %v2850 = vrcp.pop %v2818
        %v2851 = vrcp.pop %v2819
        %v2852 = vrcp.pop %v2820
        %v2853 = vrcp.pop %v2821
        %v2854 = vrcp.pop %v2822
        %v2855 = vrcp.pop %v2823
        %v2856 = vrcp.pop %v2824
        %v2857 = vrcp.pop %v2825
        %v2858 = vrcp.pop %v2826
        %v2859 = vrcp.pop %v2827
        %v2860 = vrcp.pop %v2828
        %v2861 = vrcp.pop %v2829
        %v2862 = vrcp.pop %v2830
        %v2863 = vrcp.pop %v2831
        %v2864 = vrcp.pop %v2832
        %v2865 = vrcp.pop %v2833
        %v2866 = vrcp.pop %v2834
        %v2867 = vrcp.pop %v2835
        %v2868 = vrcp.pop %v2836
        %v2869 = vrcp.pop %v2837
        %v2870 = vrcp.pop %v2838
        %v2871 = vrcp.pop %v2839
        %v2872 = vrcp.pop %v2840
        %v2873 = vrcp.pop %v2841
        %v2874 = vrcp.pop %v2842
        %v2875 = vrcp.pop %v2843
        %v2876 = vrcp.pop %v2844
        %v2877 = vrcp.pop %v2845
        %v2878 = vrcp.pop %v2846
        %v2879 = vrcp.pop %v2847
        %v2880 = vrcp.pop %v2848
        %v2881 = vrcp.pop %v2849
        %v2882 = vmul.f32 %v2643, %v2850
        %v2883 = vmul.f32 %v2645, %v2851
        %v2884 = vmul.f32 %v2648, %v2852
        %v2885 = vmul.f32 %v2650, %v2853
        %v2886 = vmul.f32 %v2653, %v2854
        %v2887 = vmul.f32 %v2655, %v2855
        %v2888 = vmul.f32 %v2658, %v2856
        %v2889 = vmul.f32 %v2660, %v2857
        %v2890 = vmul.f32 %v2663, %v2858
        %v2891 = vmul.f32 %v2665, %v2859
        %v2892 = vmul.f32 %v2668, %v2860
        %v2893 = vmul.f32 %v2670, %v2861
        %v2894 = vmul.f32 %v2673, %v2862
        %v2895 = vmul.f32 %v2675, %v2863
        %v2896 = vmul.f32 %v2678, %v2864
        %v2897 = vmul.f32 %v2680, %v2865
        %v2898 = vmul.f32 %v2683, %v2866
        %v2899 = vmul.f32 %v2685, %v2867
        %v2900 = vmul.f32 %v2688, %v2868
        %v2901 = vmul.f32 %v2690, %v2869
        %v2902 = vmul.f32 %v2693, %v2870
        %v2903 = vmul.f32 %v2695, %v2871
        %v2904 = vmul.f32 %v2698, %v2872
        %v2905 = vmul.f32 %v2700, %v2873
        %v2906 = vmul.f32 %v2703, %v2874
        %v2907 = vmul.f32 %v2705, %v2875
        %v2908 = vmul.f32 %v2708, %v2876
        %v2909 = vmul.f32 %v2710, %v2877
        %v2910 = vmul.f32 %v2713, %v2878
        %v2911 = vmul.f32 %v2715, %v2879
        %v2912 = vmul.f32 %v2718, %v2880
        %v2913 = vmul.f32 %v2720, %v2881
        %v2914 = vadd.f32 %v2882, %v2883
        %v2915 = vadd.f32 %v2914, %v2884
        %v2916 = vadd.f32 %v2915, %v2885
        %v2917 = vadd.f32 %v2916, %v2886
        %v2918 = vadd.f32 %v2917, %v2887
        %v2919 = vadd.f32 %v2918, %v2888
        %v2920 = vadd.f32 %v2919, %v2889
        %v2921 = vadd.f32 %v2920, %v2890
        %v2922 = vadd.f32 %v2921, %v2891
        %v2923 = vadd.f32 %v2922, %v2892
        %v2924 = vadd.f32 %v2923, %v2893
        %v2925 = vadd.f32 %v2924, %v2894
        %v2926 = vadd.f32 %v2925, %v2895
        %v2927 = vadd.f32 %v2926, %v2896
        %v2928 = vadd.f32 %v2927, %v2897
        %v2929 = vadd.f32 %v2928, %v2898
        %v2930 = vadd.f32 %v2929, %v2899
        %v2931 = vadd.f32 %v2930, %v2900
        %v2932 = vadd.f32 %v2931, %v2901
        %v2933 = vadd.f32 %v2932, %v2902
        %v2934 = vadd.f32 %v2933, %v2903
        %v2935 = vadd.f32 %v2934, %v2904
        %v2936 = vadd.f32 %v2935, %v2905
        %v2937 = vadd.f32 %v2936, %v2906
        %v2938 = vadd.f32 %v2937, %v2907
        %v2939 = vadd.f32 %v2938, %v2908
        %v2940 = vadd.f32 %v2939, %v2909
        %v2941 = vadd.f32 %v2940, %v2910
        %v2942 = vadd.f32 %v2941, %v2911
        %v2943 = vadd.f32 %v2942, %v2912
        %v2944 = vadd.f32 %v2943, %v2913
        %v2945 = vrot.slane %v2944, 4
        %v2946 = vadd.f32 %v2944, %v2945
        %v2947 = vrot.slane %v2946, 2
        %v2948 = vadd.f32 %v2946, %v2947
        %v2949 = vrot.slane %v2948, 1
        %v2950 = vadd.f32 %v2948, %v2949
        %v2951 = vmul.f32 %v2950, %v2203
        %v2952 = vld [vmem:[%s13] sm:$0xff]
        %v2953 = vld [vmem:[%s13 + $0x8] sm:$0xff]
        %v2954 = vld [vmem:[%s13 + $0x10] sm:$0xff]
        %v2955 = vld [vmem:[%s13 + $0x18] sm:$0xff]
        %v2956 = vld [vmem:[%s13 + $0x20] sm:$0xff]
        %v2957 = vld [vmem:[%s13 + $0x28] sm:$0xff]
        %v2958 = vld [vmem:[%s13 + $0x30] sm:$0xff]
        %v2959 = vld [vmem:[%s13 + $0x38] sm:$0xff]
        %v2960 = vld [vmem:[%s13 + $0x40] sm:$0xff]
        %v2961 = vld [vmem:[%s13 + $0x48] sm:$0xff]
        %v2962 = vld [vmem:[%s13 + $0x50] sm:$0xff]
        %v2963 = vld [vmem:[%s13 + $0x58] sm:$0xff]
        %v2964 = vld [vmem:[%s13 + $0x60] sm:$0xff]
        %v2965 = vld [vmem:[%s13 + $0x68] sm:$0xff]
        %v2966 = vld [vmem:[%s13 + $0x70] sm:$0xff]
        %v2967 = vld [vmem:[%s13 + $0x78] sm:$0xff]
        %v2968 = vld [vmem:[%s14] sm:$0x1]
        %2969 = vmatpush.msra.mxu0 %v2967
        %2970 = vmatpush.msra.mxu0 %v2966
        %2971 = vmatpush.msra.mxu0 %v2965
        %2972 = vmatpush.msra.mxu0 %v2964
        %2973 = vmatpush.msra.mxu0 %v2963
        %2974 = vmatpush.msra.mxu0 %v2962
        %2975 = vmatpush.msra.mxu0 %v2961
        %2976 = vmatpush.msra.mxu0 %v2960
        %2977 = vmatpush.msra.mxu0 %v2959
        %2978 = vmatpush.msra.mxu0 %v2958
        %2979 = vmatpush.msra.mxu0 %v2957
        %2980 = vmatpush.msra.mxu0 %v2956
        %2981 = vmatpush.msra.mxu0 %v2955
        %2982 = vmatpush.msra.mxu0 %v2954
        %2983 = vmatpush.msra.mxu0 %v2953
        %2984 = vmatpush.msra.mxu0 %v2952
        %2985 = vmatmul.f32.gmra.mxu0 %v2951
        %v2986 = vpop.f32.mrf.mxu0
        %v2987 = vadd.f32 %v2968, %v2986
        %2988 = vdwg.mxu0
        %vm2989 = vcmask 40960
        %2990 = vst.msk [vmem:[%s486] sm:$0x1] %vm2989, %v2987
        %s2991 = sand.u32 %s357, 1
        %s2992 = scalar_lea.sflag [#allocation4], %s2991
        %s2993 = sand.u32 %s357, 1
        %s2994 = scalar_lea.vmem [#allocation3], %s2993
        // Predicated region
        $region81: #{custom_efficientnet_forward.3} parent=79 // pred_check
          %p2995 = pneg %p367
        $region82: #{custom_efficientnet_forward.3} parent=79 // pred_check_branch
          %2997 = sbr.rel (%p2995) target = $region84
        $region83: #{custom_efficientnet_forward.3} parent=79 // pred_region
          %2999 = vsyncadd %s2992, 0
          %s3000 = scalar_lea.hbm %s15, %s29
          %s3002 = sshll.u32 %s2994, 4
          %s3003 = int_to_ptr.vmem [resolvable:$true] %s3002
          %s3004 = sshll.u32 %s3000, 4
          %s3005 = int_to_ptr.hbm [resolvable:$true] %s3004
          %3007 = dma.vmem_to_hbm [thread:$0]  %s3003, 16, %s3005, %s2992
        $region84: #{custom_efficientnet_forward.3} parent=79 // pred_fallthru
          _
      $region80: #{custom_efficientnet_forward.3} parent=5 // pred_fallthru
        _
      %p3008 = scmp.le.s32.totalorder 2, %s24
      // Predicated region
      $region85: #{custom_efficientnet_forward.3} parent=5 // pred_check
        %p3009 = pneg %p3008
      $region86: #{custom_efficientnet_forward.3} parent=5 // pred_check_branch
        %3011 = sbr.rel (%p3009) target = $region88
      $region87: #{custom_efficientnet_forward.3} parent=5 // pred_region
        %s3012 = ssub.s32 %s24, 2
        // Predicated region
        $region89: #{custom_efficientnet_forward.3} parent=87 // pred_check
          %p3013 = pneg %p373
        $region90: #{custom_efficientnet_forward.3} parent=87 // pred_check_branch
          %3015 = sbr.rel (%p3013) target = $region92
        $region91: #{custom_efficientnet_forward.3} parent=87 // pred_region
          %s3016 = sand.u32 %s358, 1
          %s3017 = scalar_lea.sflag [#allocation4], %s3016
          %s3018 = sand.u32 %s358, 1
          %s3019 = scalar_lea.vmem [#allocation3], %s3018
          %3021 = dma.done %s3017, 16
        $region92: #{custom_efficientnet_forward.3} parent=87 // pred_fallthru
          _
      $region88: #{custom_efficientnet_forward.3} parent=5 // pred_fallthru
        _
    $region6: #{custom_efficientnet_forward.3} parent=1 // loop_footer
      %s28 = sadd.s32 1, %s24
    $region7: #{custom_efficientnet_forward.3} parent=1 // loop_footer_branch
      %23 = sbr.rel target = $region3
    $region8: #{custom_efficientnet_forward.3} parent=1 // loop_exit
      _
    %3022 = vsyncpa [#allocation4], 1
    %s3023 = scalar_lea.sflag [#allocation4], 1
    %3024 = vsyncpa %s3023, 1

</llo_original>
